<compile_context>
chip_gen: v6e
topology: v6e:2x2x1
jax: 0.10.0
libtpu: 0.0.40
codegen_flags: <defaults>
</compile_context>

<pallas_src>
import functools
import math

import jax
import jax.numpy as jnp
from jax import lax
from jax.experimental import pallas as pl
from jax.experimental.pallas import tpu as pltpu


def _resblock_kernel(x_ref, wk1_ref, b1_ref, wk2_ref, b2_ref, o_ref, col_ref,
                     *, H, W, C, res_scale, negative_slope):
    # x_ref:   (1, H*W, C)  f32  one batch element, channels on lanes
    # wk*_ref: (3, 3*C, C)  bf16 per-ky packed weights: row kx*C+cin -> tap (ky, kx)
    # b*_ref:  (1, C)       f32  conv biases
    # o_ref:   (1, H*W, C)  f32  output
    # col_ref: (H*W + 2*W, 3*C) bf16 scratch: rows [0,W) and [W+H*W, 2W+H*W) are the
    #          zero padding (rows h = -1 / h = H); interior rows hold [left|center|right]
    #          kx-neighbours of every pixel.
    HW = H * W

    # Column-edge masks (true zero padding at w = 0 and w = W-1).
    pix = lax.broadcasted_iota(jnp.int32, (HW, 1), 0)
    w_idx = pix % W
    at_w0 = w_idx == 0
    at_wL = w_idx == (W - 1)

    # Zero ONLY the 2*W border rows of the scratch (interior is overwritten below).
    zero_rows = jnp.zeros((W, 3 * C), jnp.bfloat16)
    col_ref[pl.ds(0, W), :] = zero_rows
    col_ref[pl.ds(W + HW, W), :] = zero_rows

    zero_row = jnp.zeros((1, C), jnp.float32)

    def conv3x3(act, wk_ref, b_ref):
        # act: (H*W, C) f32 activation (flat row-major over pixels).
        # Flat-index shifts give the kx = 0 / 2 neighbours; mask the image edges.
        left = jnp.where(at_w0, 0.0,
                         jnp.concatenate([zero_row, act[:-1, :]], axis=0))
        right = jnp.where(at_wL, 0.0,
                          jnp.concatenate([act[1:, :], zero_row], axis=0))
        # Pack [kx=0 | kx=1 | kx=2] along lanes -> K = 3*C, cast once to bf16.
        col_ref[pl.ds(W, HW), :] = jnp.concatenate(
            [left, act, right], axis=-1).astype(jnp.bfloat16)

        acc = jnp.zeros((HW, C), jnp.float32)
        for ky in range(3):   # unrolled: 3 MXU matmuls per conv, tile-aligned LHS slices
            acc = acc + jnp.dot(col_ref[pl.ds(ky * W, HW), :], wk_ref[ky],
                                preferred_element_type=jnp.float32)
        return acc + b_ref[...]                      # (H*W, C) + (1, C)

    # conv1 + LeakyReLU(0.1)
    h = conv3x3(x_ref[0], wk1_ref, b1_ref)
    h = jnp.maximum(h, negative_slope * h)           # slope < 1

    # conv2
    out = conv3x3(h, wk2_ref, b2_ref)

    # scaled residual add (re-read x here: keeps its live range short, stays f32)
    o_ref[0] = (x_ref[0] + res_scale * out).astype(o_ref.dtype)


def residual_block_nobn(x_nchw, w1, b1, w2, b2, *, res_scale=1.0):
    """x_nchw: (B, C, H, W); w*: (C, C, 3, 3) OIHW; b*: (C,).  Returns (B, C, H, W) f32."""
    B, C, H, W = x_nchw.shape
    HW = H * W

    # Layout glue (plain XLA, outside the kernel).
    # NCHW -> (B, H*W, C): channels on lanes = MXU contraction dim.
    x = jnp.transpose(x_nchw, (0, 2, 3, 1)).reshape(B, HW, C).astype(jnp.float32)

    def pack(w):
        # OIHW -> (ky, kx, cin, cout) -> (3, 3*C, C), bf16 for single-pass MXU.
        return (jnp.transpose(w, (2, 3, 1, 0))
                .reshape(3, 3 * C, C)
                .astype(jnp.bfloat16))

    wk1, wk2 = pack(w1), pack(w2)
    b1r = b1.reshape(1, C).astype(jnp.float32)
    b2r = b2.reshape(1, C).astype(jnp.float32)

    kernel = functools.partial(
        _resblock_kernel, H=H, W=W, C=C,
        res_scale=float(res_scale), negative_slope=0.1)

    out = pl.pallas_call(
        kernel,
        out_shape=jax.ShapeDtypeStruct((B, HW, C), jnp.float32),
        grid=(B,),
        in_specs=[
            pl.BlockSpec((1, HW, C), lambda b: (b, 0, 0)),        # x: one batch element
            pl.BlockSpec((3, 3 * C, C), lambda b: (0, 0, 0)),     # w1 packed (resident)
            pl.BlockSpec((1, C), lambda b: (0, 0)),               # b1
            pl.BlockSpec((3, 3 * C, C), lambda b: (0, 0, 0)),     # w2 packed (resident)
            pl.BlockSpec((1, C), lambda b: (0, 0)),               # b2
        ],
        out_specs=pl.BlockSpec((1, HW, C), lambda b: (b, 0, 0)),
        scratch_shapes=[pltpu.VMEM((HW + 2 * W, 3 * C), jnp.bfloat16)],
        compiler_params=pltpu.CompilerParams(
            dimension_semantics=("parallel",)),
    )(x, wk1, b1r, wk2, b2r)

    return jnp.transpose(out.reshape(B, H, W, C), (0, 3, 1, 2))   # back to NCHW


def _reference(x_nchw, w1, b1, w2, b2, res_scale):
    dn = ("NCHW", "OIHW", "NCHW")

    def conv(x, w, b):
        y = lax.conv_general_dilated(
            x, w, window_strides=(1, 1), padding="SAME",
            dimension_numbers=dn, precision=lax.Precision.HIGHEST)
        return y + b.reshape(1, -1, 1, 1)

    h = conv(x_nchw, w1, b1)
    h = jnp.where(h > 0, h, 0.1 * h)                 # LeakyReLU(0.1)
    out = conv(h, w2, b2)
    return x_nchw + res_scale * out


if __name__ == "__main__":
    key = jax.random.PRNGKey(0)
    B, C, H, W = 2, 64, 16, 16                       # nf=64 is the module default
    res_scale = 1.0

    k1, k2, k3, k4, k5 = jax.random.split(key, 5)
    x = jax.random.normal(k1, (B, C, H, W), jnp.float32)
    # kaiming-style fan-in scale * 0.1, mirroring initialize_weights([...], 0.1)
    wscale = 0.1 * math.sqrt(2.0 / (C * 9))
    w1 = jax.random.normal(k2, (C, C, 3, 3), jnp.float32) * wscale
    w2 = jax.random.normal(k3, (C, C, 3, 3), jnp.float32) * wscale
    b1 = jax.random.normal(k4, (C,), jnp.float32) * 0.01
    b2 = jax.random.normal(k5, (C,), jnp.float32) * 0.01

    out = residual_block_nobn(x, w1, b1, w2, b2, res_scale=res_scale)
    out = jax.block_until_ready(out)

    ref = _reference(x, w1, b1, w2, b2, res_scale)
    assert out.shape == (B, C, H, W)
    assert out.dtype == jnp.float32
    max_err = float(jnp.max(jnp.abs(out - ref)))
    assert max_err < 2e-3, f"mismatch vs reference, max |err| = {max_err}"
    print("KERNEL_OK")
</pallas_src>

<mosaic_0001>
module attributes {stable_mosaic.version = 11 : i64} {
  func.func @_resblock_kernel(%arg0: i32, %arg1: memref<1x256x64xf32, #tpu.memory_space<vmem>>, %arg2: memref<3x192x64xbf16, #tpu.memory_space<vmem>>, %arg3: memref<1x64xf32, #tpu.memory_space<vmem>>, %arg4: memref<3x192x64xbf16, #tpu.memory_space<vmem>>, %arg5: memref<1x64xf32, #tpu.memory_space<vmem>>, %arg6: memref<1x256x64xf32, #tpu.memory_space<vmem>>, %arg7: memref<288x192xbf16, #tpu.memory_space<vmem>>) attributes {dimension_semantics = [#tpu.dimension_semantics<parallel>], iteration_bounds = array<i64: 2>, scalar_prefetch = 0 : i64, scratch_operands = 1 : i64, tpu.core_type = #tpu.core_type<tc>, window_params = [{transform_indices = @transform_0, window_bounds = array<i64: 1, 256, 64>}, {pipeline_mode = #tpu.pipeline_mode<synchronous>, transform_indices = @transform_1, window_bounds = array<i64: 3, 192, 64>}, {pipeline_mode = #tpu.pipeline_mode<synchronous>, transform_indices = @transform_2, window_bounds = array<i64: 1, 64>}, {pipeline_mode = #tpu.pipeline_mode<synchronous>, transform_indices = @transform_3, window_bounds = array<i64: 3, 192, 64>}, {pipeline_mode = #tpu.pipeline_mode<synchronous>, transform_indices = @transform_4, window_bounds = array<i64: 1, 64>}, {transform_indices = @transform_5, window_bounds = array<i64: 1, 256, 64>}]} {
    %0 = tpu.iota {dimensions = array<i32: 0>} : vector<256x1xi32>
    %c16_i32 = arith.constant 16 : i32
    %c0_i32 = arith.constant 0 : i32
    %1 = arith.cmpi eq, %c16_i32, %c0_i32 : i32
    %c1_i32 = arith.constant 1 : i32
    %2 = arith.select %1, %c1_i32, %c16_i32 : i32
    %3 = vector.broadcast %2 : i32 to vector<256x1xi32>
    %4 = arith.remsi %0, %3 : vector<256x1xi32>
    %c0_i32_0 = arith.constant 0 : i32
    %5 = vector.broadcast %c0_i32_0 : i32 to vector<256x1xi32>
    %6 = arith.cmpi ne, %4, %5 : vector<256x1xi32>
    %c0_i32_1 = arith.constant 0 : i32
    %7 = vector.broadcast %c0_i32_1 : i32 to vector<256x1xi32>
    %8 = arith.cmpi slt, %4, %7 : vector<256x1xi32>
    %c0_i32_2 = arith.constant 0 : i32
    %9 = arith.cmpi slt, %2, %c0_i32_2 : i32
    %10 = vector.broadcast %9 : i1 to vector<256x1xi1>
    %11 = vector.broadcast %10 : vector<256x1xi1> to vector<256x1xi1>
    %12 = arith.xori %8, %11 : vector<256x1xi1>
    %13 = arith.andi %12, %6 : vector<256x1xi1>
    %14 = vector.broadcast %2 : i32 to vector<256x1xi32>
    %15 = arith.addi %4, %14 : vector<256x1xi32>
    %16 = arith.select %13, %15, %4 : vector<256x1xi1>, vector<256x1xi32>
    %c0_i32_3 = arith.constant 0 : i32
    %17 = vector.broadcast %c0_i32_3 : i32 to vector<256x1xi32>
    %18 = arith.cmpi eq, %16, %17 : vector<256x1xi32>
    %c15_i32 = arith.constant 15 : i32
    %19 = vector.broadcast %c15_i32 : i32 to vector<256x1xi32>
    %20 = arith.cmpi eq, %16, %19 : vector<256x1xi32>
    %cst = arith.constant 0.000000e+00 : bf16
    %21 = vector.broadcast %cst : bf16 to vector<16x192xbf16>
    %c0 = arith.constant 0 : index
    %c0_4 = arith.constant 0 : index
    %22 = vector.load %arg7[%c0, %c0_4] : memref<288x192xbf16, #tpu.memory_space<vmem>>, vector<16x192xbf16>
    tpu.vector_store %arg7[%c0, %c0_4], %21 {strides = array<i32>} : memref<288x192xbf16, #tpu.memory_space<vmem>>, vector<16x192xbf16>,
    %c272 = arith.constant 272 : index
    %c0_5 = arith.constant 0 : index
    %23 = vector.load %arg7[%c272, %c0_5] : memref<288x192xbf16, #tpu.memory_space<vmem>>, vector<16x192xbf16>
    tpu.vector_store %arg7[%c272, %c0_5], %21 {strides = array<i32>} : memref<288x192xbf16, #tpu.memory_space<vmem>>, vector<16x192xbf16>,
    %cst_6 = arith.constant 0.000000e+00 : f32
    %24 = vector.broadcast %cst_6 : f32 to vector<1x64xf32>
    %c0_7 = arith.constant 0 : index
    %c0_8 = arith.constant 0 : index
    %c0_9 = arith.constant 0 : index
    %25 = vector.load %arg1[%c0_7, %c0_8, %c0_9] : memref<1x256x64xf32, #tpu.memory_space<vmem>>, vector<1x256x64xf32>
    %26 = vector.shape_cast %25 : vector<1x256x64xf32> to vector<256x64xf32>
    %27 = vector.extract_strided_slice %26 {offsets = [0, 0], sizes = [255, 64], strides = [1, 1]} : vector<256x64xf32> to vector<255x64xf32>
    %28 = tpu.concatenate %24, %27 in 0 : vector<1x64xf32>, vector<255x64xf32> -> vector<256x64xf32>
    %cst_10 = arith.constant 0.000000e+00 : f32
    %29 = vector.shape_cast %18 : vector<256x1xi1> to vector<256x1xi1>
    %30 = vector.broadcast %29 : vector<256x1xi1> to vector<256x64xi1>
    %31 = vector.broadcast %cst_10 : f32 to vector<256x64xf32>
    %32 = arith.select %30, %31, %28 : vector<256x64xi1>, vector<256x64xf32>
    %33 = vector.extract_strided_slice %26 {offsets = [1, 0], sizes = [255, 64], strides = [1, 1]} : vector<256x64xf32> to vector<255x64xf32>
    %34 = tpu.concatenate %33, %24 in 0 : vector<255x64xf32>, vector<1x64xf32> -> vector<256x64xf32>
    %cst_11 = arith.constant 0.000000e+00 : f32
    %35 = vector.shape_cast %20 : vector<256x1xi1> to vector<256x1xi1>
    %36 = vector.broadcast %35 : vector<256x1xi1> to vector<256x64xi1>
    %37 = vector.broadcast %cst_11 : f32 to vector<256x64xf32>
    %38 = arith.select %36, %37, %34 : vector<256x64xi1>, vector<256x64xf32>
    %39 = tpu.concatenate %32, %26, %38 in 1 : vector<256x64xf32>, vector<256x64xf32>, vector<256x64xf32> -> vector<256x192xf32>
    %40 = arith.truncf %39 : vector<256x192xf32> to vector<256x192xbf16>
    %c16 = arith.constant 16 : index
    %c0_12 = arith.constant 0 : index
    %41 = vector.load %arg7[%c16, %c0_12] : memref<288x192xbf16, #tpu.memory_space<vmem>>, vector<256x192xbf16>
    tpu.vector_store %arg7[%c16, %c0_12], %40 {strides = array<i32>} : memref<288x192xbf16, #tpu.memory_space<vmem>>, vector<256x192xbf16>,
    %cst_13 = arith.constant 0.000000e+00 : f32
    %42 = vector.broadcast %cst_13 : f32 to vector<256x64xf32>
    %c0_14 = arith.constant 0 : index
    %c0_15 = arith.constant 0 : index
    %43 = vector.load %arg7[%c0_14, %c0_15] : memref<288x192xbf16, #tpu.memory_space<vmem>>, vector<256x192xbf16>
    %c0_16 = arith.constant 0 : index
    %c0_17 = arith.constant 0 : index
    %c0_18 = arith.constant 0 : index
    %44 = vector.load %arg2[%c0_16, %c0_17, %c0_18] : memref<3x192x64xbf16, #tpu.memory_space<vmem>>, vector<1x192x64xbf16>
    %45 = vector.shape_cast %44 : vector<1x192x64xbf16> to vector<192x64xbf16>
    %cst_19 = arith.constant dense<0.000000e+00> : vector<256x64xf32>
    %46 = tpu.matmul %43, %45, %cst_19 {dimension_numbers = #tpu.dot_dimension_numbers<[1], [0], [0], [1], [0, 0, 1, 1], [], []>} : vector<256x192xbf16>, vector<192x64xbf16>, vector<256x64xf32> -> vector<256x64xf32>
    %47 = arith.addf %42, %46 : vector<256x64xf32>
    %c16_20 = arith.constant 16 : index
    %c0_21 = arith.constant 0 : index
    %48 = vector.load %arg7[%c16_20, %c0_21] : memref<288x192xbf16, #tpu.memory_space<vmem>>, vector<256x192xbf16>
    %c1 = arith.constant 1 : index
    %c0_22 = arith.constant 0 : index
    %c0_23 = arith.constant 0 : index
    %49 = vector.load %arg2[%c1, %c0_22, %c0_23] : memref<3x192x64xbf16, #tpu.memory_space<vmem>>, vector<1x192x64xbf16>
    %50 = vector.shape_cast %49 : vector<1x192x64xbf16> to vector<192x64xbf16>
    %cst_24 = arith.constant dense<0.000000e+00> : vector<256x64xf32>
    %51 = tpu.matmul %48, %50, %cst_24 {dimension_numbers = #tpu.dot_dimension_numbers<[1], [0], [0], [1], [0, 0, 1, 1], [], []>} : vector<256x192xbf16>, vector<192x64xbf16>, vector<256x64xf32> -> vector<256x64xf32>
    %52 = arith.addf %47, %51 : vector<256x64xf32>
    %c32 = arith.constant 32 : index
    %c0_25 = arith.constant 0 : index
    %53 = vector.load %arg7[%c32, %c0_25] : memref<288x192xbf16, #tpu.memory_space<vmem>>, vector<256x192xbf16>
    %c2 = arith.constant 2 : index
    %c0_26 = arith.constant 0 : index
    %c0_27 = arith.constant 0 : index
    %54 = vector.load %arg2[%c2, %c0_26, %c0_27] : memref<3x192x64xbf16, #tpu.memory_space<vmem>>, vector<1x192x64xbf16>
    %55 = vector.shape_cast %54 : vector<1x192x64xbf16> to vector<192x64xbf16>
    %cst_28 = arith.constant dense<0.000000e+00> : vector<256x64xf32>
    %56 = tpu.matmul %53, %55, %cst_28 {dimension_numbers = #tpu.dot_dimension_numbers<[1], [0], [0], [1], [0, 0, 1, 1], [], []>} : vector<256x192xbf16>, vector<192x64xbf16>, vector<256x64xf32> -> vector<256x64xf32>
    %57 = arith.addf %52, %56 : vector<256x64xf32>
    %c0_29 = arith.constant 0 : index
    %c0_30 = arith.constant 0 : index
    %58 = vector.load %arg3[%c0_29, %c0_30] : memref<1x64xf32, #tpu.memory_space<vmem>>, vector<1x64xf32>
    %59 = vector.broadcast %58 : vector<1x64xf32> to vector<256x64xf32>
    %60 = arith.addf %57, %59 : vector<256x64xf32>
    %cst_31 = arith.constant 1.000000e-01 : f32
    %61 = vector.broadcast %cst_31 : f32 to vector<256x64xf32>
    %62 = arith.mulf %61, %60 : vector<256x64xf32>
    %63 = arith.maximumf %60, %62 : vector<256x64xf32>
    %64 = vector.extract_strided_slice %63 {offsets = [0, 0], sizes = [255, 64], strides = [1, 1]} : vector<256x64xf32> to vector<255x64xf32>
    %65 = tpu.concatenate %24, %64 in 0 : vector<1x64xf32>, vector<255x64xf32> -> vector<256x64xf32>
    %cst_32 = arith.constant 0.000000e+00 : f32
    %66 = vector.shape_cast %18 : vector<256x1xi1> to vector<256x1xi1>
    %67 = vector.broadcast %66 : vector<256x1xi1> to vector<256x64xi1>
    %68 = vector.broadcast %cst_32 : f32 to vector<256x64xf32>
    %69 = arith.select %67, %68, %65 : vector<256x64xi1>, vector<256x64xf32>
    %70 = vector.extract_strided_slice %63 {offsets = [1, 0], sizes = [255, 64], strides = [1, 1]} : vector<256x64xf32> to vector<255x64xf32>
    %71 = tpu.concatenate %70, %24 in 0 : vector<255x64xf32>, vector<1x64xf32> -> vector<256x64xf32>
    %cst_33 = arith.constant 0.000000e+00 : f32
    %72 = vector.shape_cast %20 : vector<256x1xi1> to vector<256x1xi1>
    %73 = vector.broadcast %72 : vector<256x1xi1> to vector<256x64xi1>
    %74 = vector.broadcast %cst_33 : f32 to vector<256x64xf32>
    %75 = arith.select %73, %74, %71 : vector<256x64xi1>, vector<256x64xf32>
    %76 = tpu.concatenate %69, %63, %75 in 1 : vector<256x64xf32>, vector<256x64xf32>, vector<256x64xf32> -> vector<256x192xf32>
    %77 = arith.truncf %76 : vector<256x192xf32> to vector<256x192xbf16>
    %c16_34 = arith.constant 16 : index
    %c0_35 = arith.constant 0 : index
    %78 = vector.load %arg7[%c16_34, %c0_35] : memref<288x192xbf16, #tpu.memory_space<vmem>>, vector<256x192xbf16>
    tpu.vector_store %arg7[%c16_34, %c0_35], %77 {strides = array<i32>} : memref<288x192xbf16, #tpu.memory_space<vmem>>, vector<256x192xbf16>,
    %cst_36 = arith.constant 0.000000e+00 : f32
    %79 = vector.broadcast %cst_36 : f32 to vector<256x64xf32>
    %c0_37 = arith.constant 0 : index
    %c0_38 = arith.constant 0 : index
    %80 = vector.load %arg7[%c0_37, %c0_38] : memref<288x192xbf16, #tpu.memory_space<vmem>>, vector<256x192xbf16>
    %c0_39 = arith.constant 0 : index
    %c0_40 = arith.constant 0 : index
    %c0_41 = arith.constant 0 : index
    %81 = vector.load %arg4[%c0_39, %c0_40, %c0_41] : memref<3x192x64xbf16, #tpu.memory_space<vmem>>, vector<1x192x64xbf16>
    %82 = vector.shape_cast %81 : vector<1x192x64xbf16> to vector<192x64xbf16>
    %cst_42 = arith.constant dense<0.000000e+00> : vector<256x64xf32>
    %83 = tpu.matmul %80, %82, %cst_42 {dimension_numbers = #tpu.dot_dimension_numbers<[1], [0], [0], [1], [0, 0, 1, 1], [], []>} : vector<256x192xbf16>, vector<192x64xbf16>, vector<256x64xf32> -> vector<256x64xf32>
    %84 = arith.addf %79, %83 : vector<256x64xf32>
    %c16_43 = arith.constant 16 : index
    %c0_44 = arith.constant 0 : index
    %85 = vector.load %arg7[%c16_43, %c0_44] : memref<288x192xbf16, #tpu.memory_space<vmem>>, vector<256x192xbf16>
    %c1_45 = arith.constant 1 : index
    %c0_46 = arith.constant 0 : index
    %c0_47 = arith.constant 0 : index
    %86 = vector.load %arg4[%c1_45, %c0_46, %c0_47] : memref<3x192x64xbf16, #tpu.memory_space<vmem>>, vector<1x192x64xbf16>
    %87 = vector.shape_cast %86 : vector<1x192x64xbf16> to vector<192x64xbf16>
    %cst_48 = arith.constant dense<0.000000e+00> : vector<256x64xf32>
    %88 = tpu.matmul %85, %87, %cst_48 {dimension_numbers = #tpu.dot_dimension_numbers<[1], [0], [0], [1], [0, 0, 1, 1], [], []>} : vector<256x192xbf16>, vector<192x64xbf16>, vector<256x64xf32> -> vector<256x64xf32>
    %89 = arith.addf %84, %88 : vector<256x64xf32>
    %c32_49 = arith.constant 32 : index
    %c0_50 = arith.constant 0 : index
    %90 = vector.load %arg7[%c32_49, %c0_50] : memref<288x192xbf16, #tpu.memory_space<vmem>>, vector<256x192xbf16>
    %c2_51 = arith.constant 2 : index
    %c0_52 = arith.constant 0 : index
    %c0_53 = arith.constant 0 : index
    %91 = vector.load %arg4[%c2_51, %c0_52, %c0_53] : memref<3x192x64xbf16, #tpu.memory_space<vmem>>, vector<1x192x64xbf16>
    %92 = vector.shape_cast %91 : vector<1x192x64xbf16> to vector<192x64xbf16>
    %cst_54 = arith.constant dense<0.000000e+00> : vector<256x64xf32>
    %93 = tpu.matmul %90, %92, %cst_54 {dimension_numbers = #tpu.dot_dimension_numbers<[1], [0], [0], [1], [0, 0, 1, 1], [], []>} : vector<256x192xbf16>, vector<192x64xbf16>, vector<256x64xf32> -> vector<256x64xf32>
    %94 = arith.addf %89, %93 : vector<256x64xf32>
    %c0_55 = arith.constant 0 : index
    %c0_56 = arith.constant 0 : index
    %95 = vector.load %arg5[%c0_55, %c0_56] : memref<1x64xf32, #tpu.memory_space<vmem>>, vector<1x64xf32>
    %96 = vector.broadcast %95 : vector<1x64xf32> to vector<256x64xf32>
    %97 = arith.addf %94, %96 : vector<256x64xf32>
    %c0_57 = arith.constant 0 : index
    %c0_58 = arith.constant 0 : index
    %c0_59 = arith.constant 0 : index
    %98 = vector.load %arg1[%c0_57, %c0_58, %c0_59] : memref<1x256x64xf32, #tpu.memory_space<vmem>>, vector<1x256x64xf32>
    %99 = vector.shape_cast %98 : vector<1x256x64xf32> to vector<256x64xf32>
    %cst_60 = arith.constant 1.000000e+00 : f32
    %100 = vector.broadcast %cst_60 : f32 to vector<256x64xf32>
    %101 = arith.mulf %100, %97 : vector<256x64xf32>
    %102 = arith.addf %99, %101 : vector<256x64xf32>
    %c0_61 = arith.constant 0 : index
    %c0_62 = arith.constant 0 : index
    %c0_63 = arith.constant 0 : index
    %103 = vector.load %arg6[%c0_61, %c0_62, %c0_63] : memref<1x256x64xf32, #tpu.memory_space<vmem>>, vector<1x256x64xf32>
    %104 = vector.shape_cast %103 : vector<1x256x64xf32> to vector<256x64xf32>
    %105 = vector.shape_cast %102 : vector<256x64xf32> to vector<1x256x64xf32>
    tpu.vector_store %arg6[%c0_61, %c0_62, %c0_63], %105 {strides = array<i32>} : memref<1x256x64xf32, #tpu.memory_space<vmem>>, vector<1x256x64xf32>,
    return
  }
  func.func @transform_0(%arg0: i32) -> (i32, i32, i32) {
    %c0_i32 = arith.constant 0 : i32
    %c0_i32_0 = arith.constant 0 : i32
    %c0_i32_1 = arith.constant 0 : i32
    return %arg0, %c0_i32, %c0_i32_0 : i32, i32, i32
  }
  func.func @transform_1(%arg0: i32) -> (i32, i32, i32) {
    %c0_i32 = arith.constant 0 : i32
    %c0_i32_0 = arith.constant 0 : i32
    %c0_i32_1 = arith.constant 0 : i32
    %c0_i32_2 = arith.constant 0 : i32
    return %c0_i32, %c0_i32_0, %c0_i32_1 : i32, i32, i32
  }
  func.func @transform_2(%arg0: i32) -> (i32, i32) {
    %c0_i32 = arith.constant 0 : i32
    %c0_i32_0 = arith.constant 0 : i32
    %c0_i32_1 = arith.constant 0 : i32
    return %c0_i32, %c0_i32_0 : i32, i32
  }
  func.func @transform_3(%arg0: i32) -> (i32, i32, i32) {
    %c0_i32 = arith.constant 0 : i32
    %c0_i32_0 = arith.constant 0 : i32
    %c0_i32_1 = arith.constant 0 : i32
    %c0_i32_2 = arith.constant 0 : i32
    return %c0_i32, %c0_i32_0, %c0_i32_1 : i32, i32, i32
  }
  func.func @transform_4(%arg0: i32) -> (i32, i32) {
    %c0_i32 = arith.constant 0 : i32
    %c0_i32_0 = arith.constant 0 : i32
    %c0_i32_1 = arith.constant 0 : i32
    return %c0_i32, %c0_i32_0 : i32, i32
  }
  func.func @transform_5(%arg0: i32) -> (i32, i32, i32) {
    %c0_i32 = arith.constant 0 : i32
    %c0_i32_0 = arith.constant 0 : i32
    %c0_i32_1 = arith.constant 0 : i32
    return %arg0, %c0_i32, %c0_i32_0 : i32, i32, i32
  }
}

</mosaic_0001>

<llo_original>
// kernel: tpu_custom_call.1
$region0: #{tpu_custom_call.1}
  #allocation0 [shape = 'u32[]', space=smem, size = 0x4, offset = 0x4, fixed_abs, tag = 'smem constant byte address 0x4 - core index']
  #allocation1 [shape = 'u32[144,128]{1,0:T(1,128)}', space=vmem, size = 0x12000, scoped, tag = 'internal scratch']
  #allocation2 [shape = 'bf16[288,192]{1,0:T(8,128)(2,1)}', space=vmem, size = 0x24000, scoped, tag = 'scratch operand']
  %s0 = inlined_call_operand.vmem [shape: f32[2,256,64], index: 0, kind: input, shape index: {}]
  %s1 = inlined_call_operand.vmem [shape: bf16[3,192,64], index: 1, kind: input, shape index: {}]
  %s2 = inlined_call_operand.vmem [shape: f32[1,64], index: 2, kind: input, shape index: {}]
  %s3 = inlined_call_operand.vmem [shape: bf16[3,192,64], index: 3, kind: input, shape index: {}]
  %s4 = inlined_call_operand.vmem [shape: f32[1,64], index: 4, kind: input, shape index: {}]
  %s5 = inlined_call_operand.vmem [shape: f32[2,256,64], index: 5, kind: output, shape index: {}]
  %s6 = sld [smem:[#allocation0]]
  $region53: #{tpu_custom_call.1} parent=0
    _
  %s8 = ssub.s32 1, %s6
  %s9 = scalar_select 0, %s8, %s6
  loop: start=0, step=1, limit=4
  $region2: #{tpu_custom_call.1} parent=0 // loop_pre_header
    _
  $region3: #{tpu_custom_call.1} parent=0 // loop_header
    %s11 = sphi 0, %s15
    %p12 = scmp.ge.s32.totalorder %s11, 4
    %s21 = sphi 0, %s23
    %s24 = sphi 0, %s21
    %s25 = sphi 0, %s24
    %s41 = sphi 0, %s25
    %s45 = sphi 0, %s45
    %s47 = sphi 0, %s45
    %s48 = sphi 0, %s47
    %s62 = sphi 0, %s48
    %s66 = sphi 0, %s66
    %s68 = sphi 0, %s66
    %s69 = sphi 0, %s68
    %s83 = sphi 0, %s69
    %s87 = sphi 0, %s87
    %s89 = sphi 0, %s87
    %s90 = sphi 0, %s89
    %s104 = sphi 0, %s90
    %s108 = sphi 0, %s108
    %s110 = sphi 0, %s108
    %s111 = sphi 0, %s110
    %s125 = sphi 0, %s111
    %s131 = sphi 0, %s133
    %s134 = sphi 0, %s131
    %s135 = sphi 0, %s134
    %s151 = sphi 0, %s135
  $region4: #{tpu_custom_call.1} parent=0 // loop_header_branch
    %14 = sbr.rel (%p12) target = $region8
  $region5: #{tpu_custom_call.1} parent=0 // loop_body
    %s16 = ssub.s32 %s11, 1
    %s17 = ssub.s32 %s11, 2
    %s18 = sadd.s32 %s11, 1
    %s19 = ssub.s32 %s11, %s18
    %p20 = scmp.eq.s32.totalorder %s19, 0
    %s22 = sadd.s32 %s21, 1
    %s23 = scalar_select %p20, %s21, %s22
    %p26 = pneg %p20
    %p27 = scmp.eq.s32.totalorder %s11, 1
    %p28 = por %p26, %p27
    %p29 = scmp.ne.s32.totalorder %s21, %s24
    %p30 = scmp.eq.s32.totalorder %s11, 0
    %p31 = por %p29, %p30
    %p32 = scmp.ne.s32.totalorder %s21, %s24
    %p33 = scmp.eq.s32.totalorder %s16, 1
    %p34 = por %p32, %p33
    %p35 = scmp.ne.s32.totalorder %s24, %s25
    %p36 = scmp.eq.s32.totalorder %s16, 0
    %p37 = por %p35, %p36
    %p38 = scmp.ne.s32.totalorder %s24, %s25
    %p39 = scmp.eq.s32.totalorder %s17, 1
    %p40 = por %p38, %p39
    %p42 = scmp.ne.s32.totalorder %s25, %s41
    %p43 = scmp.eq.s32.totalorder %s17, 0
    %p44 = por %p42, %p43
    %s46 = sadd.s32 %s45, 1
    %p49 = scmp.eq.s32.totalorder %s11, 1
    %p50 = scmp.ne.s32.totalorder %s45, %s47
    %p51 = scmp.eq.s32.totalorder %s11, 0
    %p52 = por %p50, %p51
    %p53 = scmp.ne.s32.totalorder %s45, %s47
    %p54 = scmp.eq.s32.totalorder %s16, 1
    %p55 = por %p53, %p54
    %p56 = scmp.ne.s32.totalorder %s47, %s48
    %p57 = scmp.eq.s32.totalorder %s16, 0
    %p58 = por %p56, %p57
    %p59 = scmp.ne.s32.totalorder %s47, %s48
    %p60 = scmp.eq.s32.totalorder %s17, 1
    %p61 = por %p59, %p60
    %p63 = scmp.ne.s32.totalorder %s48, %s62
    %p64 = scmp.eq.s32.totalorder %s17, 0
    %p65 = por %p63, %p64
    %s67 = sadd.s32 %s66, 1
    %p70 = scmp.eq.s32.totalorder %s11, 1
    %p71 = scmp.ne.s32.totalorder %s66, %s68
    %p72 = scmp.eq.s32.totalorder %s11, 0
    %p73 = por %p71, %p72
    %p74 = scmp.ne.s32.totalorder %s66, %s68
    %p75 = scmp.eq.s32.totalorder %s16, 1
    %p76 = por %p74, %p75
    %p77 = scmp.ne.s32.totalorder %s68, %s69
    %p78 = scmp.eq.s32.totalorder %s16, 0
    %p79 = por %p77, %p78
    %p80 = scmp.ne.s32.totalorder %s68, %s69
    %p81 = scmp.eq.s32.totalorder %s17, 1
    %p82 = por %p80, %p81
    %p84 = scmp.ne.s32.totalorder %s69, %s83
    %p85 = scmp.eq.s32.totalorder %s17, 0
    %p86 = por %p84, %p85
    %s88 = sadd.s32 %s87, 1
    %p91 = scmp.eq.s32.totalorder %s11, 1
    %p92 = scmp.ne.s32.totalorder %s87, %s89
    %p93 = scmp.eq.s32.totalorder %s11, 0
    %p94 = por %p92, %p93
    %p95 = scmp.ne.s32.totalorder %s87, %s89
    %p96 = scmp.eq.s32.totalorder %s16, 1
    %p97 = por %p95, %p96
    %p98 = scmp.ne.s32.totalorder %s89, %s90
    %p99 = scmp.eq.s32.totalorder %s16, 0
    %p100 = por %p98, %p99
    %p101 = scmp.ne.s32.totalorder %s89, %s90
    %p102 = scmp.eq.s32.totalorder %s17, 1
    %p103 = por %p101, %p102
    %p105 = scmp.ne.s32.totalorder %s90, %s104
    %p106 = scmp.eq.s32.totalorder %s17, 0
    %p107 = por %p105, %p106
    %s109 = sadd.s32 %s108, 1
    %p112 = scmp.eq.s32.totalorder %s11, 1
    %p113 = scmp.ne.s32.totalorder %s108, %s110
    %p114 = scmp.eq.s32.totalorder %s11, 0
    %p115 = por %p113, %p114
    %p116 = scmp.ne.s32.totalorder %s108, %s110
    %p117 = scmp.eq.s32.totalorder %s16, 1
    %p118 = por %p116, %p117
    %p119 = scmp.ne.s32.totalorder %s110, %s111
    %p120 = scmp.eq.s32.totalorder %s16, 0
    %p121 = por %p119, %p120
    %p122 = scmp.ne.s32.totalorder %s110, %s111
    %p123 = scmp.eq.s32.totalorder %s17, 1
    %p124 = por %p122, %p123
    %p126 = scmp.ne.s32.totalorder %s111, %s125
    %p127 = scmp.eq.s32.totalorder %s17, 0
    %p128 = por %p126, %p127
    %s129 = ssub.s32 %s11, %s18
    %p130 = scmp.eq.s32.totalorder %s129, 0
    %s132 = sadd.s32 %s131, 1
    %s133 = scalar_select %p130, %s131, %s132
    %p136 = pneg %p130
    %p137 = scmp.eq.s32.totalorder %s11, 1
    %p138 = por %p136, %p137
    %p139 = scmp.ne.s32.totalorder %s131, %s134
    %p140 = scmp.eq.s32.totalorder %s11, 0
    %p141 = por %p139, %p140
    %p142 = scmp.ne.s32.totalorder %s131, %s134
    %p143 = scmp.eq.s32.totalorder %s16, 1
    %p144 = por %p142, %p143
    %p145 = scmp.ne.s32.totalorder %s134, %s135
    %p146 = scmp.eq.s32.totalorder %s16, 0
    %p147 = por %p145, %p146
    %p148 = scmp.ne.s32.totalorder %s134, %s135
    %p149 = scmp.eq.s32.totalorder %s17, 1
    %p150 = por %p148, %p149
    %p152 = scmp.ne.s32.totalorder %s135, %s151
    %p153 = scmp.eq.s32.totalorder %s17, 0
    %p154 = por %p152, %p153
    %p155 = scmp.le.s32.totalorder 1, %s11
    %p156 = scmp.lt.s32.totalorder %s11, 3
    %p157 = pnand %p155, %p156
    %p158 = pneg %p157
    // Predicated region
    $region9: #{tpu_custom_call.1} parent=5 // pred_check
      _
    $region10: #{tpu_custom_call.1} parent=5 // pred_check_branch
      %160 = sbr.rel (%p157) target = $region12
    $region11: #{tpu_custom_call.1} parent=5 // pred_region
      %s161 = ssub.s32 %s11, 1
      // Predicated region
      $region13: #{tpu_custom_call.1} parent=11 // pred_check
        %p162 = pneg %p58
      $region14: #{tpu_custom_call.1} parent=11 // pred_check_branch
        %164 = sbr.rel (%p162) target = $region16
      $region15: #{tpu_custom_call.1} parent=11 // pred_region
        _
      $region16: #{tpu_custom_call.1} parent=11 // pred_fallthru
        _
      // Predicated region
      $region17: #{tpu_custom_call.1} parent=11 // pred_check
        %p165 = pneg %p79
      $region18: #{tpu_custom_call.1} parent=11 // pred_check_branch
        %167 = sbr.rel (%p165) target = $region20
      $region19: #{tpu_custom_call.1} parent=11 // pred_region
        _
      $region20: #{tpu_custom_call.1} parent=11 // pred_fallthru
        _
      // Predicated region
      $region21: #{tpu_custom_call.1} parent=11 // pred_check
        %p168 = pneg %p100
      $region22: #{tpu_custom_call.1} parent=11 // pred_check_branch
        %170 = sbr.rel (%p168) target = $region24
      $region23: #{tpu_custom_call.1} parent=11 // pred_region
        _
      $region24: #{tpu_custom_call.1} parent=11 // pred_fallthru
        _
      // Predicated region
      $region25: #{tpu_custom_call.1} parent=11 // pred_check
        %p171 = pneg %p121
      $region26: #{tpu_custom_call.1} parent=11 // pred_check_branch
        %173 = sbr.rel (%p171) target = $region28
      $region27: #{tpu_custom_call.1} parent=11 // pred_region
        _
      $region28: #{tpu_custom_call.1} parent=11 // pred_fallthru
        _
    $region12: #{tpu_custom_call.1} parent=5 // pred_fallthru
      _
    %p174 = scmp.lt.s32.totalorder %s11, 2
    // Predicated region
    $region29: #{tpu_custom_call.1} parent=5 // pred_check
      %p175 = pneg %p174
    $region30: #{tpu_custom_call.1} parent=5 // pred_check_branch
      %177 = sbr.rel (%p175) target = $region32
    $region31: #{tpu_custom_call.1} parent=5 // pred_region
      // Predicated region
      $region33: #{tpu_custom_call.1} parent=31 // pred_check
        %p178 = pneg %p31
      $region34: #{tpu_custom_call.1} parent=31 // pred_check_branch
        %180 = sbr.rel (%p178) target = $region36
      $region35: #{tpu_custom_call.1} parent=31 // pred_region
        %p181 = scmp.lt.s32.totalorder %s11, 1
        %s182 = scalar_select %p181, %s11, 1
        %s183 = smul.addr %s182, 32
        %s184 = smul.addr %s183, 8
        %s185 = scalar_lea.vmem %s0, %s184
      $region36: #{tpu_custom_call.1} parent=31 // pred_fallthru
        _
    $region32: #{tpu_custom_call.1} parent=5 // pred_fallthru
      _
    %p186 = scmp.le.s32.totalorder 1, %s11
    %p187 = scmp.lt.s32.totalorder %s11, 3
    %p188 = pnand %p186, %p187
    %p189 = pneg %p188
    // Predicated region
    $region37: #{tpu_custom_call.1} parent=5 // pred_check
      _
    $region38: #{tpu_custom_call.1} parent=5 // pred_check_branch
      %191 = sbr.rel (%p188) target = $region40
    $region39: #{tpu_custom_call.1} parent=5 // pred_region
      %s192 = ssub.s32 %s11, 1
      %p193 = scmp.lt.s32.totalorder %s16, 1
      %s194 = scalar_select %p193, %s16, 1
      %s195 = smul.addr %s194, 32
      %s196 = smul.addr %s195, 8
      %s197 = scalar_lea.vmem %s0, %s196
      %p198 = pneg %p37
      %p199 = pneg %p34
      %p200 = pneg %p58
      %p201 = pneg %p55
      %p202 = pneg %p79
      %p203 = pneg %p76
      %p204 = pneg %p100
      %p205 = pneg %p97
      %p206 = pneg %p121
      %p207 = pneg %p118
      %p208 = pneg %p147
      %p209 = pneg %p144
      %p210 = scmp.lt.s32.totalorder %s16, 1
      %s211 = scalar_select %p210, %s16, 1
      %s212 = smul.addr %s211, 32
      %s213 = smul.addr %s212, 8
      %s214 = scalar_lea.vmem %s5, %s213
      %p215 = scmp.lt.s32.totalorder %s16, 1
      %s216 = scalar_select %p215, %s16, 1
      %s217 = smul.addr %s216, 32
      %s218 = smul.addr %s217, 8
      %s219 = scalar_lea.vmem %s0, %s218
      %p220 = scmp.lt.s32.totalorder %s16, 1
      %s221 = scalar_select %p220, %s16, 1
      %s222 = smul.addr %s221, 32
      %s223 = smul.addr %s222, 8
      %s224 = scalar_lea.vmem %s5, %s223
      %v226 = vlaneseq
      %v227 = vshrl.u32 %v226, 7
      %v228 = vadd.s32 %v227, 8
      %v229 = vadd.s32 %v227, 16
      %v230 = vadd.s32 %v227, 24
      %v231 = vadd.s32 %v227, 32
      %v232 = vadd.s32 %v227, 40
      %v233 = vadd.s32 %v227, 48
      %v234 = vadd.s32 %v227, 56
      %v235 = vadd.s32 %v227, 64
      %v236 = vadd.s32 %v227, 72
      %v237 = vadd.s32 %v227, 80
      %v238 = vadd.s32 %v227, 88
      %v239 = vadd.s32 %v227, 96
      %v240 = vadd.s32 %v227, 104
      %v241 = vadd.s32 %v227, 112
      %v242 = vadd.s32 %v227, 120
      %v243 = vadd.s32 %v227, 128
      %v244 = vadd.s32 %v227, 136
      %v245 = vadd.s32 %v227, 144
      %v246 = vadd.s32 %v227, 152
      %v247 = vadd.s32 %v227, 160
      %v248 = vadd.s32 %v227, 168
      %v249 = vadd.s32 %v227, 176
      %v250 = vadd.s32 %v227, 184
      %v251 = vadd.s32 %v227, 192
      %v252 = vadd.s32 %v227, 200
      %v253 = vadd.s32 %v227, 208
      %v254 = vadd.s32 %v227, 216
      %v255 = vadd.s32 %v227, 224
      %v256 = vadd.s32 %v227, 232
      %v257 = vadd.s32 %v227, 240
      %v258 = vadd.s32 %v227, 248
      %vm259 = vcmp.lt.s32.totalorder %v227, 0
      %v260 = vsub.s32 0, %v227
      %v261 = vsel %vm259, %v260, %v227
      %v262 = vshrl.u32 %v261, 4
      %v263 = vand.u32 %v261, 15
      %v264 = vsub.s32 0, %v263
      %v265 = vsel %vm259, %v264, %v263
      %vm266 = vcmp.lt.s32.totalorder %v228, 0
      %v267 = vsub.s32 0, %v228
      %v268 = vsel %vm266, %v267, %v228
      %v269 = vshrl.u32 %v268, 4
      %v270 = vand.u32 %v268, 15
      %v271 = vsub.s32 0, %v270
      %v272 = vsel %vm266, %v271, %v270
      %vm273 = vcmp.lt.s32.totalorder %v229, 0
      %v274 = vsub.s32 0, %v229
      %v275 = vsel %vm273, %v274, %v229
      %v276 = vshrl.u32 %v275, 4
      %v277 = vand.u32 %v275, 15
      %v278 = vsub.s32 0, %v277
      %v279 = vsel %vm273, %v278, %v277
      %vm280 = vcmp.lt.s32.totalorder %v230, 0
      %v281 = vsub.s32 0, %v230
      %v282 = vsel %vm280, %v281, %v230
      %v283 = vshrl.u32 %v282, 4
      %v284 = vand.u32 %v282, 15
      %v285 = vsub.s32 0, %v284
      %v286 = vsel %vm280, %v285, %v284
      %vm287 = vcmp.lt.s32.totalorder %v231, 0
      %v288 = vsub.s32 0, %v231
      %v289 = vsel %vm287, %v288, %v231
      %v290 = vshrl.u32 %v289, 4
      %v291 = vand.u32 %v289, 15
      %v292 = vsub.s32 0, %v291
      %v293 = vsel %vm287, %v292, %v291
      %vm294 = vcmp.lt.s32.totalorder %v232, 0
      %v295 = vsub.s32 0, %v232
      %v296 = vsel %vm294, %v295, %v232
      %v297 = vshrl.u32 %v296, 4
      %v298 = vand.u32 %v296, 15
      %v299 = vsub.s32 0, %v298
      %v300 = vsel %vm294, %v299, %v298
      %vm301 = vcmp.lt.s32.totalorder %v233, 0
      %v302 = vsub.s32 0, %v233
      %v303 = vsel %vm301, %v302, %v233
      %v304 = vshrl.u32 %v303, 4
      %v305 = vand.u32 %v303, 15
      %v306 = vsub.s32 0, %v305
      %v307 = vsel %vm301, %v306, %v305
      %vm308 = vcmp.lt.s32.totalorder %v234, 0
      %v309 = vsub.s32 0, %v234
      %v310 = vsel %vm308, %v309, %v234
      %v311 = vshrl.u32 %v310, 4
      %v312 = vand.u32 %v310, 15
      %v313 = vsub.s32 0, %v312
      %v314 = vsel %vm308, %v313, %v312
      %vm315 = vcmp.lt.s32.totalorder %v235, 0
      %v316 = vsub.s32 0, %v235
      %v317 = vsel %vm315, %v316, %v235
      %v318 = vshrl.u32 %v317, 4
      %v319 = vand.u32 %v317, 15
      %v320 = vsub.s32 0, %v319
      %v321 = vsel %vm315, %v320, %v319
      %vm322 = vcmp.lt.s32.totalorder %v236, 0
      %v323 = vsub.s32 0, %v236
      %v324 = vsel %vm322, %v323, %v236
      %v325 = vshrl.u32 %v324, 4
      %v326 = vand.u32 %v324, 15
      %v327 = vsub.s32 0, %v326
      %v328 = vsel %vm322, %v327, %v326
      %vm329 = vcmp.lt.s32.totalorder %v237, 0
      %v330 = vsub.s32 0, %v237
      %v331 = vsel %vm329, %v330, %v237
      %v332 = vshrl.u32 %v331, 4
      %v333 = vand.u32 %v331, 15
      %v334 = vsub.s32 0, %v333
      %v335 = vsel %vm329, %v334, %v333
      %vm336 = vcmp.lt.s32.totalorder %v238, 0
      %v337 = vsub.s32 0, %v238
      %v338 = vsel %vm336, %v337, %v238
      %v339 = vshrl.u32 %v338, 4
      %v340 = vand.u32 %v338, 15
      %v341 = vsub.s32 0, %v340
      %v342 = vsel %vm336, %v341, %v340
      %vm343 = vcmp.lt.s32.totalorder %v239, 0
      %v344 = vsub.s32 0, %v239
      %v345 = vsel %vm343, %v344, %v239
      %v346 = vshrl.u32 %v345, 4
      %v347 = vand.u32 %v345, 15
      %v348 = vsub.s32 0, %v347
      %v349 = vsel %vm343, %v348, %v347
      %vm350 = vcmp.lt.s32.totalorder %v240, 0
      %v351 = vsub.s32 0, %v240
      %v352 = vsel %vm350, %v351, %v240
      %v353 = vshrl.u32 %v352, 4
      %v354 = vand.u32 %v352, 15
      %v355 = vsub.s32 0, %v354
      %v356 = vsel %vm350, %v355, %v354
      %vm357 = vcmp.lt.s32.totalorder %v241, 0
      %v358 = vsub.s32 0, %v241
      %v359 = vsel %vm357, %v358, %v241
      %v360 = vshrl.u32 %v359, 4
      %v361 = vand.u32 %v359, 15
      %v362 = vsub.s32 0, %v361
      %v363 = vsel %vm357, %v362, %v361
      %vm364 = vcmp.lt.s32.totalorder %v242, 0
      %v365 = vsub.s32 0, %v242
      %v366 = vsel %vm364, %v365, %v242
      %v367 = vshrl.u32 %v366, 4
      %v368 = vand.u32 %v366, 15
      %v369 = vsub.s32 0, %v368
      %v370 = vsel %vm364, %v369, %v368
      %vm371 = vcmp.lt.s32.totalorder %v243, 0
      %v372 = vsub.s32 0, %v243
      %v373 = vsel %vm371, %v372, %v243
      %v374 = vshrl.u32 %v373, 4
      %v375 = vand.u32 %v373, 15
      %v376 = vsub.s32 0, %v375
      %v377 = vsel %vm371, %v376, %v375
      %vm378 = vcmp.lt.s32.totalorder %v244, 0
      %v379 = vsub.s32 0, %v244
      %v380 = vsel %vm378, %v379, %v244
      %v381 = vshrl.u32 %v380, 4
      %v382 = vand.u32 %v380, 15
      %v383 = vsub.s32 0, %v382
      %v384 = vsel %vm378, %v383, %v382
      %vm385 = vcmp.lt.s32.totalorder %v245, 0
      %v386 = vsub.s32 0, %v245
      %v387 = vsel %vm385, %v386, %v245
      %v388 = vshrl.u32 %v387, 4
      %v389 = vand.u32 %v387, 15
      %v390 = vsub.s32 0, %v389
      %v391 = vsel %vm385, %v390, %v389
      %vm392 = vcmp.lt.s32.totalorder %v246, 0
      %v393 = vsub.s32 0, %v246
      %v394 = vsel %vm392, %v393, %v246
      %v395 = vshrl.u32 %v394, 4
      %v396 = vand.u32 %v394, 15
      %v397 = vsub.s32 0, %v396
      %v398 = vsel %vm392, %v397, %v396
      %vm399 = vcmp.lt.s32.totalorder %v247, 0
      %v400 = vsub.s32 0, %v247
      %v401 = vsel %vm399, %v400, %v247
      %v402 = vshrl.u32 %v401, 4
      %v403 = vand.u32 %v401, 15
      %v404 = vsub.s32 0, %v403
      %v405 = vsel %vm399, %v404, %v403
      %vm406 = vcmp.lt.s32.totalorder %v248, 0
      %v407 = vsub.s32 0, %v248
      %v408 = vsel %vm406, %v407, %v248
      %v409 = vshrl.u32 %v408, 4
      %v410 = vand.u32 %v408, 15
      %v411 = vsub.s32 0, %v410
      %v412 = vsel %vm406, %v411, %v410
      %vm413 = vcmp.lt.s32.totalorder %v249, 0
      %v414 = vsub.s32 0, %v249
      %v415 = vsel %vm413, %v414, %v249
      %v416 = vshrl.u32 %v415, 4
      %v417 = vand.u32 %v415, 15
      %v418 = vsub.s32 0, %v417
      %v419 = vsel %vm413, %v418, %v417
      %vm420 = vcmp.lt.s32.totalorder %v250, 0
      %v421 = vsub.s32 0, %v250
      %v422 = vsel %vm420, %v421, %v250
      %v423 = vshrl.u32 %v422, 4
      %v424 = vand.u32 %v422, 15
      %v425 = vsub.s32 0, %v424
      %v426 = vsel %vm420, %v425, %v424
      %vm427 = vcmp.lt.s32.totalorder %v251, 0
      %v428 = vsub.s32 0, %v251
      %v429 = vsel %vm427, %v428, %v251
      %v430 = vshrl.u32 %v429, 4
      %v431 = vand.u32 %v429, 15
      %v432 = vsub.s32 0, %v431
      %v433 = vsel %vm427, %v432, %v431
      %vm434 = vcmp.lt.s32.totalorder %v252, 0
      %v435 = vsub.s32 0, %v252
      %v436 = vsel %vm434, %v435, %v252
      %v437 = vshrl.u32 %v436, 4
      %v438 = vand.u32 %v436, 15
      %v439 = vsub.s32 0, %v438
      %v440 = vsel %vm434, %v439, %v438
      %vm441 = vcmp.lt.s32.totalorder %v253, 0
      %v442 = vsub.s32 0, %v253
      %v443 = vsel %vm441, %v442, %v253
      %v444 = vshrl.u32 %v443, 4
      %v445 = vand.u32 %v443, 15
      %v446 = vsub.s32 0, %v445
      %v447 = vsel %vm441, %v446, %v445
      %vm448 = vcmp.lt.s32.totalorder %v254, 0
      %v449 = vsub.s32 0, %v254
      %v450 = vsel %vm448, %v449, %v254
      %v451 = vshrl.u32 %v450, 4
      %v452 = vand.u32 %v450, 15
      %v453 = vsub.s32 0, %v452
      %v454 = vsel %vm448, %v453, %v452
      %vm455 = vcmp.lt.s32.totalorder %v255, 0
      %v456 = vsub.s32 0, %v255
      %v457 = vsel %vm455, %v456, %v255
      %v458 = vshrl.u32 %v457, 4
      %v459 = vand.u32 %v457, 15
      %v460 = vsub.s32 0, %v459
      %v461 = vsel %vm455, %v460, %v459
      %vm462 = vcmp.lt.s32.totalorder %v256, 0
      %v463 = vsub.s32 0, %v256
      %v464 = vsel %vm462, %v463, %v256
      %v465 = vshrl.u32 %v464, 4
      %v466 = vand.u32 %v464, 15
      %v467 = vsub.s32 0, %v466
      %v468 = vsel %vm462, %v467, %v466
      %vm469 = vcmp.lt.s32.totalorder %v257, 0
      %v470 = vsub.s32 0, %v257
      %v471 = vsel %vm469, %v470, %v257
      %v472 = vshrl.u32 %v471, 4
      %v473 = vand.u32 %v471, 15
      %v474 = vsub.s32 0, %v473
      %v475 = vsel %vm469, %v474, %v473
      %vm476 = vcmp.lt.s32.totalorder %v258, 0
      %v477 = vsub.s32 0, %v258
      %v478 = vsel %vm476, %v477, %v258
      %v479 = vshrl.u32 %v478, 4
      %v480 = vand.u32 %v478, 15
      %v481 = vsub.s32 0, %v480
      %v482 = vsel %vm476, %v481, %v480
      %vm483 = vcmp.ne.s32.totalorder %v265, 0
      %vm484 = vcmp.ne.s32.totalorder %v272, 0
      %vm485 = vcmp.ne.s32.totalorder %v279, 0
      %vm486 = vcmp.ne.s32.totalorder %v286, 0
      %vm487 = vcmp.ne.s32.totalorder %v293, 0
      %vm488 = vcmp.ne.s32.totalorder %v300, 0
      %vm489 = vcmp.ne.s32.totalorder %v307, 0
      %vm490 = vcmp.ne.s32.totalorder %v314, 0
      %vm491 = vcmp.ne.s32.totalorder %v321, 0
      %vm492 = vcmp.ne.s32.totalorder %v328, 0
      %vm493 = vcmp.ne.s32.totalorder %v335, 0
      %vm494 = vcmp.ne.s32.totalorder %v342, 0
      %vm495 = vcmp.ne.s32.totalorder %v349, 0
      %vm496 = vcmp.ne.s32.totalorder %v356, 0
      %vm497 = vcmp.ne.s32.totalorder %v363, 0
      %vm498 = vcmp.ne.s32.totalorder %v370, 0
      %vm499 = vcmp.ne.s32.totalorder %v377, 0
      %vm500 = vcmp.ne.s32.totalorder %v384, 0
      %vm501 = vcmp.ne.s32.totalorder %v391, 0
      %vm502 = vcmp.ne.s32.totalorder %v398, 0
      %vm503 = vcmp.ne.s32.totalorder %v405, 0
      %vm504 = vcmp.ne.s32.totalorder %v412, 0
      %vm505 = vcmp.ne.s32.totalorder %v419, 0
      %vm506 = vcmp.ne.s32.totalorder %v426, 0
      %vm507 = vcmp.ne.s32.totalorder %v433, 0
      %vm508 = vcmp.ne.s32.totalorder %v440, 0
      %vm509 = vcmp.ne.s32.totalorder %v447, 0
      %vm510 = vcmp.ne.s32.totalorder %v454, 0
      %vm511 = vcmp.ne.s32.totalorder %v461, 0
      %vm512 = vcmp.ne.s32.totalorder %v468, 0
      %vm513 = vcmp.ne.s32.totalorder %v475, 0
      %vm514 = vcmp.ne.s32.totalorder %v482, 0
      %vm515 = vcmp.lt.s32.totalorder %v265, 0
      %vm516 = vcmp.lt.s32.totalorder %v272, 0
      %vm517 = vcmp.lt.s32.totalorder %v279, 0
      %vm518 = vcmp.lt.s32.totalorder %v286, 0
      %vm519 = vcmp.lt.s32.totalorder %v293, 0
      %vm520 = vcmp.lt.s32.totalorder %v300, 0
      %vm521 = vcmp.lt.s32.totalorder %v307, 0
      %vm522 = vcmp.lt.s32.totalorder %v314, 0
      %vm523 = vcmp.lt.s32.totalorder %v321, 0
      %vm524 = vcmp.lt.s32.totalorder %v328, 0
      %vm525 = vcmp.lt.s32.totalorder %v335, 0
      %vm526 = vcmp.lt.s32.totalorder %v342, 0
      %vm527 = vcmp.lt.s32.totalorder %v349, 0
      %vm528 = vcmp.lt.s32.totalorder %v356, 0
      %vm529 = vcmp.lt.s32.totalorder %v363, 0
      %vm530 = vcmp.lt.s32.totalorder %v370, 0
      %vm531 = vcmp.lt.s32.totalorder %v377, 0
      %vm532 = vcmp.lt.s32.totalorder %v384, 0
      %vm533 = vcmp.lt.s32.totalorder %v391, 0
      %vm534 = vcmp.lt.s32.totalorder %v398, 0
      %vm535 = vcmp.lt.s32.totalorder %v405, 0
      %vm536 = vcmp.lt.s32.totalorder %v412, 0
      %vm537 = vcmp.lt.s32.totalorder %v419, 0
      %vm538 = vcmp.lt.s32.totalorder %v426, 0
      %vm539 = vcmp.lt.s32.totalorder %v433, 0
      %vm540 = vcmp.lt.s32.totalorder %v440, 0
      %vm541 = vcmp.lt.s32.totalorder %v447, 0
      %vm542 = vcmp.lt.s32.totalorder %v454, 0
      %vm543 = vcmp.lt.s32.totalorder %v461, 0
      %vm544 = vcmp.lt.s32.totalorder %v468, 0
      %vm545 = vcmp.lt.s32.totalorder %v475, 0
      %vm546 = vcmp.lt.s32.totalorder %v482, 0
      %vm547 = vmand %vm515, %vm483
      %vm548 = vmand %vm516, %vm484
      %vm549 = vmand %vm517, %vm485
      %vm550 = vmand %vm518, %vm486
      %vm551 = vmand %vm519, %vm487
      %vm552 = vmand %vm520, %vm488
      %vm553 = vmand %vm521, %vm489
      %vm554 = vmand %vm522, %vm490
      %vm555 = vmand %vm523, %vm491
      %vm556 = vmand %vm524, %vm492
      %vm557 = vmand %vm525, %vm493
      %vm558 = vmand %vm526, %vm494
      %vm559 = vmand %vm527, %vm495
      %vm560 = vmand %vm528, %vm496
      %vm561 = vmand %vm529, %vm497
      %vm562 = vmand %vm530, %vm498
      %vm563 = vmand %vm531, %vm499
      %vm564 = vmand %vm532, %vm500
      %vm565 = vmand %vm533, %vm501
      %vm566 = vmand %vm534, %vm502
      %vm567 = vmand %vm535, %vm503
      %vm568 = vmand %vm536, %vm504
      %vm569 = vmand %vm537, %vm505
      %vm570 = vmand %vm538, %vm506
      %vm571 = vmand %vm539, %vm507
      %vm572 = vmand %vm540, %vm508
      %vm573 = vmand %vm541, %vm509
      %vm574 = vmand %vm542, %vm510
      %vm575 = vmand %vm543, %vm511
      %vm576 = vmand %vm544, %vm512
      %vm577 = vmand %vm545, %vm513
      %vm578 = vmand %vm546, %vm514
      %v579 = vadd.s32 %v265, 16
      %v580 = vadd.s32 %v272, 16
      %v581 = vadd.s32 %v279, 16
      %v582 = vadd.s32 %v286, 16
      %v583 = vadd.s32 %v293, 16
      %v584 = vadd.s32 %v300, 16
      %v585 = vadd.s32 %v307, 16
      %v586 = vadd.s32 %v314, 16
      %v587 = vadd.s32 %v321, 16
      %v588 = vadd.s32 %v328, 16
      %v589 = vadd.s32 %v335, 16
      %v590 = vadd.s32 %v342, 16
      %v591 = vadd.s32 %v349, 16
      %v592 = vadd.s32 %v356, 16
      %v593 = vadd.s32 %v363, 16
      %v594 = vadd.s32 %v370, 16
      %v595 = vadd.s32 %v377, 16
      %v596 = vadd.s32 %v384, 16
      %v597 = vadd.s32 %v391, 16
      %v598 = vadd.s32 %v398, 16
      %v599 = vadd.s32 %v405, 16
      %v600 = vadd.s32 %v412, 16
      %v601 = vadd.s32 %v419, 16
      %v602 = vadd.s32 %v426, 16
      %v603 = vadd.s32 %v433, 16
      %v604 = vadd.s32 %v440, 16
      %v605 = vadd.s32 %v447, 16
      %v606 = vadd.s32 %v454, 16
      %v607 = vadd.s32 %v461, 16
      %v608 = vadd.s32 %v468, 16
      %v609 = vadd.s32 %v475, 16
      %v610 = vadd.s32 %v482, 16
      %v611 = vsel %vm547, %v579, %v265
      %v612 = vsel %vm548, %v580, %v272
      %v613 = vsel %vm549, %v581, %v279
      %v614 = vsel %vm550, %v582, %v286
      %v615 = vsel %vm551, %v583, %v293
      %v616 = vsel %vm552, %v584, %v300
      %v617 = vsel %vm553, %v585, %v307
      %v618 = vsel %vm554, %v586, %v314
      %v619 = vsel %vm555, %v587, %v321
      %v620 = vsel %vm556, %v588, %v328
      %v621 = vsel %vm557, %v589, %v335
      %v622 = vsel %vm558, %v590, %v342
      %v623 = vsel %vm559, %v591, %v349
      %v624 = vsel %vm560, %v592, %v356
      %v625 = vsel %vm561, %v593, %v363
      %v626 = vsel %vm562, %v594, %v370
      %v627 = vsel %vm563, %v595, %v377
      %v628 = vsel %vm564, %v596, %v384
      %v629 = vsel %vm565, %v597, %v391
      %v630 = vsel %vm566, %v598, %v398
      %v631 = vsel %vm567, %v599, %v405
      %v632 = vsel %vm568, %v600, %v412
      %v633 = vsel %vm569, %v601, %v419
      %v634 = vsel %vm570, %v602, %v426
      %v635 = vsel %vm571, %v603, %v433
      %v636 = vsel %vm572, %v604, %v440
      %v637 = vsel %vm573, %v605, %v447
      %v638 = vsel %vm574, %v606, %v454
      %v639 = vsel %vm575, %v607, %v461
      %v640 = vsel %vm576, %v608, %v468
      %v641 = vsel %vm577, %v609, %v475
      %v642 = vsel %vm578, %v610, %v482
      %vm643 = vcmp.eq.s32.totalorder %v611, 0
      %vm644 = vcmp.eq.s32.totalorder %v612, 0
      %vm645 = vcmp.eq.s32.totalorder %v613, 0
      %vm646 = vcmp.eq.s32.totalorder %v614, 0
      %vm647 = vcmp.eq.s32.totalorder %v615, 0
      %vm648 = vcmp.eq.s32.totalorder %v616, 0
      %vm649 = vcmp.eq.s32.totalorder %v617, 0
      %vm650 = vcmp.eq.s32.totalorder %v618, 0
      %vm651 = vcmp.eq.s32.totalorder %v619, 0
      %vm652 = vcmp.eq.s32.totalorder %v620, 0
      %vm653 = vcmp.eq.s32.totalorder %v621, 0
      %vm654 = vcmp.eq.s32.totalorder %v622, 0
      %vm655 = vcmp.eq.s32.totalorder %v623, 0
      %vm656 = vcmp.eq.s32.totalorder %v624, 0
      %vm657 = vcmp.eq.s32.totalorder %v625, 0
      %vm658 = vcmp.eq.s32.totalorder %v626, 0
      %vm659 = vcmp.eq.s32.totalorder %v627, 0
      %vm660 = vcmp.eq.s32.totalorder %v628, 0
      %vm661 = vcmp.eq.s32.totalorder %v629, 0
      %vm662 = vcmp.eq.s32.totalorder %v630, 0
      %vm663 = vcmp.eq.s32.totalorder %v631, 0
      %vm664 = vcmp.eq.s32.totalorder %v632, 0
      %vm665 = vcmp.eq.s32.totalorder %v633, 0
      %vm666 = vcmp.eq.s32.totalorder %v634, 0
      %vm667 = vcmp.eq.s32.totalorder %v635, 0
      %vm668 = vcmp.eq.s32.totalorder %v636, 0
      %vm669 = vcmp.eq.s32.totalorder %v637, 0
      %vm670 = vcmp.eq.s32.totalorder %v638, 0
      %vm671 = vcmp.eq.s32.totalorder %v639, 0
      %vm672 = vcmp.eq.s32.totalorder %v640, 0
      %vm673 = vcmp.eq.s32.totalorder %v641, 0
      %vm674 = vcmp.eq.s32.totalorder %v642, 0
      %vm675 = vcmp.eq.s32.totalorder %v611, 15
      %vm676 = vcmp.eq.s32.totalorder %v612, 15
      %vm677 = vcmp.eq.s32.totalorder %v613, 15
      %vm678 = vcmp.eq.s32.totalorder %v614, 15
      %vm679 = vcmp.eq.s32.totalorder %v615, 15
      %vm680 = vcmp.eq.s32.totalorder %v616, 15
      %vm681 = vcmp.eq.s32.totalorder %v617, 15
      %vm682 = vcmp.eq.s32.totalorder %v618, 15
      %vm683 = vcmp.eq.s32.totalorder %v619, 15
      %vm684 = vcmp.eq.s32.totalorder %v620, 15
      %vm685 = vcmp.eq.s32.totalorder %v621, 15
      %vm686 = vcmp.eq.s32.totalorder %v622, 15
      %vm687 = vcmp.eq.s32.totalorder %v623, 15
      %vm688 = vcmp.eq.s32.totalorder %v624, 15
      %vm689 = vcmp.eq.s32.totalorder %v625, 15
      %vm690 = vcmp.eq.s32.totalorder %v626, 15
      %vm691 = vcmp.eq.s32.totalorder %v627, 15
      %vm692 = vcmp.eq.s32.totalorder %v628, 15
      %vm693 = vcmp.eq.s32.totalorder %v629, 15
      %vm694 = vcmp.eq.s32.totalorder %v630, 15
      %vm695 = vcmp.eq.s32.totalorder %v631, 15
      %vm696 = vcmp.eq.s32.totalorder %v632, 15
      %vm697 = vcmp.eq.s32.totalorder %v633, 15
      %vm698 = vcmp.eq.s32.totalorder %v634, 15
      %vm699 = vcmp.eq.s32.totalorder %v635, 15
      %vm700 = vcmp.eq.s32.totalorder %v636, 15
      %vm701 = vcmp.eq.s32.totalorder %v637, 15
      %vm702 = vcmp.eq.s32.totalorder %v638, 15
      %vm703 = vcmp.eq.s32.totalorder %v639, 15
      %vm704 = vcmp.eq.s32.totalorder %v640, 15
      %vm705 = vcmp.eq.s32.totalorder %v641, 15
      %vm706 = vcmp.eq.s32.totalorder %v642, 15
      %vm707 = vcmask 1043456
      %vm708 = vcmask 523268
      %vm709 = vmor %vm708, %vm707
      %710 = vst.msk [vmem:[#allocation2] sm:$0xff] %vm709, 0
      %711 = vst.msk [vmem:[#allocation2 + $0x8] sm:$0xff] %vm709, 0
      %712 = vst.msk [vmem:[#allocation2 + $0x110] sm:$0xff] %vm709, 0
      %713 = vst.msk [vmem:[#allocation2 + $0x118] sm:$0xff] %vm709, 0
      %v714 = vld [vmem:[%s219] sm:$0xff]
      %v715 = vld [vmem:[%s219 + $0x8] sm:$0xff]
      %v716 = vld [vmem:[%s219 + $0x10] sm:$0xff]
      %v717 = vld [vmem:[%s219 + $0x18] sm:$0xff]
      %v718 = vld [vmem:[%s219 + $0x20] sm:$0xff]
      %v719 = vld [vmem:[%s219 + $0x28] sm:$0xff]
      %v720 = vld [vmem:[%s219 + $0x30] sm:$0xff]
      %v721 = vld [vmem:[%s219 + $0x38] sm:$0xff]
      %v722 = vld [vmem:[%s219 + $0x40] sm:$0xff]
      %v723 = vld [vmem:[%s219 + $0x48] sm:$0xff]
      %v724 = vld [vmem:[%s219 + $0x50] sm:$0xff]
      %v725 = vld [vmem:[%s219 + $0x58] sm:$0xff]
      %v726 = vld [vmem:[%s219 + $0x60] sm:$0xff]
      %v727 = vld [vmem:[%s219 + $0x68] sm:$0xff]
      %v728 = vld [vmem:[%s219 + $0x70] sm:$0xff]
      %v729 = vld [vmem:[%s219 + $0x78] sm:$0xff]
      %v730 = vld [vmem:[%s219 + $0x80] sm:$0xff]
      %v731 = vld [vmem:[%s219 + $0x88] sm:$0xff]
      %v732 = vld [vmem:[%s219 + $0x90] sm:$0xff]
      %v733 = vld [vmem:[%s219 + $0x98] sm:$0xff]
      %v734 = vld [vmem:[%s219 + $0xa0] sm:$0xff]
      %v735 = vld [vmem:[%s219 + $0xa8] sm:$0xff]
      %v736 = vld [vmem:[%s219 + $0xb0] sm:$0xff]
      %v737 = vld [vmem:[%s219 + $0xb8] sm:$0xff]
      %v738 = vld [vmem:[%s219 + $0xc0] sm:$0xff]
      %v739 = vld [vmem:[%s219 + $0xc8] sm:$0xff]
      %v740 = vld [vmem:[%s219 + $0xd0] sm:$0xff]
      %v741 = vld [vmem:[%s219 + $0xd8] sm:$0xff]
      %v742 = vld [vmem:[%s219 + $0xe0] sm:$0xff]
      %v743 = vld [vmem:[%s219 + $0xe8] sm:$0xff]
      %v744 = vld [vmem:[%s219 + $0xf0] sm:$0xff]
      %v745 = vld [vmem:[%s219 + $0xf8] sm:$0xff]
      %vm778 = vcmask 1040384
      %v779 = vrot.slane %v714, 7
      %v780 = vrot.slane %v715, 7
      %v781 = vsel %vm778, %v779, %v780
      %v782 = vrot.slane %v716, 7
      %v783 = vsel %vm778, %v780, %v782
      %v784 = vrot.slane %v717, 7
      %v785 = vsel %vm778, %v782, %v784
      %v786 = vrot.slane %v718, 7
      %v787 = vsel %vm778, %v784, %v786
      %v788 = vrot.slane %v719, 7
      %v789 = vsel %vm778, %v786, %v788
      %v790 = vrot.slane %v720, 7
      %v791 = vsel %vm778, %v788, %v790
      %v792 = vrot.slane %v721, 7
      %v793 = vsel %vm778, %v790, %v792
      %v794 = vrot.slane %v722, 7
      %v795 = vsel %vm778, %v792, %v794
      %v796 = vrot.slane %v723, 7
      %v797 = vsel %vm778, %v794, %v796
      %v798 = vrot.slane %v724, 7
      %v799 = vsel %vm778, %v796, %v798
      %v800 = vrot.slane %v725, 7
      %v801 = vsel %vm778, %v798, %v800
      %v802 = vrot.slane %v726, 7
      %v803 = vsel %vm778, %v800, %v802
      %v804 = vrot.slane %v727, 7
      %v805 = vsel %vm778, %v802, %v804
      %v806 = vrot.slane %v728, 7
      %v807 = vsel %vm778, %v804, %v806
      %v808 = vrot.slane %v729, 7
      %v809 = vsel %vm778, %v806, %v808
      %v810 = vrot.slane %v730, 7
      %v811 = vsel %vm778, %v808, %v810
      %v812 = vrot.slane %v731, 7
      %v813 = vsel %vm778, %v810, %v812
      %v814 = vrot.slane %v732, 7
      %v815 = vsel %vm778, %v812, %v814
      %v816 = vrot.slane %v733, 7
      %v817 = vsel %vm778, %v814, %v816
      %v818 = vrot.slane %v734, 7
      %v819 = vsel %vm778, %v816, %v818
      %v820 = vrot.slane %v735, 7
      %v821 = vsel %vm778, %v818, %v820
      %v822 = vrot.slane %v736, 7
      %v823 = vsel %vm778, %v820, %v822
      %v824 = vrot.slane %v737, 7
      %v825 = vsel %vm778, %v822, %v824
      %v826 = vrot.slane %v738, 7
      %v827 = vsel %vm778, %v824, %v826
      %v828 = vrot.slane %v739, 7
      %v829 = vsel %vm778, %v826, %v828
      %v830 = vrot.slane %v740, 7
      %v831 = vsel %vm778, %v828, %v830
      %v832 = vrot.slane %v741, 7
      %v833 = vsel %vm778, %v830, %v832
      %v834 = vrot.slane %v742, 7
      %v835 = vsel %vm778, %v832, %v834
      %v836 = vrot.slane %v743, 7
      %v837 = vsel %vm778, %v834, %v836
      %v838 = vrot.slane %v744, 7
      %v839 = vsel %vm778, %v836, %v838
      %v840 = vrot.slane %v745, 7
      %v841 = vsel %vm778, %v838, %v840
      %v874 = vsel %vm778, 0.0, %v779
      %v875 = vsel %vm643, 1, 0
      %v876 = vsel %vm644, 1, 0
      %v877 = vsel %vm645, 1, 0
      %v878 = vsel %vm646, 1, 0
      %v879 = vsel %vm647, 1, 0
      %v880 = vsel %vm648, 1, 0
      %v881 = vsel %vm649, 1, 0
      %v882 = vsel %vm650, 1, 0
      %v883 = vsel %vm651, 1, 0
      %v884 = vsel %vm652, 1, 0
      %v885 = vsel %vm653, 1, 0
      %v886 = vsel %vm654, 1, 0
      %v887 = vsel %vm655, 1, 0
      %v888 = vsel %vm656, 1, 0
      %v889 = vsel %vm657, 1, 0
      %v890 = vsel %vm658, 1, 0
      %v891 = vsel %vm659, 1, 0
      %v892 = vsel %vm660, 1, 0
      %v893 = vsel %vm661, 1, 0
      %v894 = vsel %vm662, 1, 0
      %v895 = vsel %vm663, 1, 0
      %v896 = vsel %vm664, 1, 0
      %v897 = vsel %vm665, 1, 0
      %v898 = vsel %vm666, 1, 0
      %v899 = vsel %vm667, 1, 0
      %v900 = vsel %vm668, 1, 0
      %v901 = vsel %vm669, 1, 0
      %v902 = vsel %vm670, 1, 0
      %v903 = vsel %vm671, 1, 0
      %v904 = vsel %vm672, 1, 0
      %v905 = vsel %vm673, 1, 0
      %v906 = vsel %vm674, 1, 0
      %vm907 = vcmp.eq.s32.totalorder %v875, 1
      %vm908 = vcmp.eq.s32.totalorder %v876, 1
      %vm909 = vcmp.eq.s32.totalorder %v877, 1
      %vm910 = vcmp.eq.s32.totalorder %v878, 1
      %vm911 = vcmp.eq.s32.totalorder %v879, 1
      %vm912 = vcmp.eq.s32.totalorder %v880, 1
      %vm913 = vcmp.eq.s32.totalorder %v881, 1
      %vm914 = vcmp.eq.s32.totalorder %v882, 1
      %vm915 = vcmp.eq.s32.totalorder %v883, 1
      %vm916 = vcmp.eq.s32.totalorder %v884, 1
      %vm917 = vcmp.eq.s32.totalorder %v885, 1
      %vm918 = vcmp.eq.s32.totalorder %v886, 1
      %vm919 = vcmp.eq.s32.totalorder %v887, 1
      %vm920 = vcmp.eq.s32.totalorder %v888, 1
      %vm921 = vcmp.eq.s32.totalorder %v889, 1
      %vm922 = vcmp.eq.s32.totalorder %v890, 1
      %vm923 = vcmp.eq.s32.totalorder %v891, 1
      %vm924 = vcmp.eq.s32.totalorder %v892, 1
      %vm925 = vcmp.eq.s32.totalorder %v893, 1
      %vm926 = vcmp.eq.s32.totalorder %v894, 1
      %vm927 = vcmp.eq.s32.totalorder %v895, 1
      %vm928 = vcmp.eq.s32.totalorder %v896, 1
      %vm929 = vcmp.eq.s32.totalorder %v897, 1
      %vm930 = vcmp.eq.s32.totalorder %v898, 1
      %vm931 = vcmp.eq.s32.totalorder %v899, 1
      %vm932 = vcmp.eq.s32.totalorder %v900, 1
      %vm933 = vcmp.eq.s32.totalorder %v901, 1
      %vm934 = vcmp.eq.s32.totalorder %v902, 1
      %vm935 = vcmp.eq.s32.totalorder %v903, 1
      %vm936 = vcmp.eq.s32.totalorder %v904, 1
      %vm937 = vcmp.eq.s32.totalorder %v905, 1
      %vm938 = vcmp.eq.s32.totalorder %v906, 1
      %v939 = vsel %vm907, 0.0, %v874
      %v940 = vsel %vm908, 0.0, %v781
      %v941 = vsel %vm909, 0.0, %v783
      %v942 = vsel %vm910, 0.0, %v785
      %v943 = vsel %vm911, 0.0, %v787
      %v944 = vsel %vm912, 0.0, %v789
      %v945 = vsel %vm913, 0.0, %v791
      %v946 = vsel %vm914, 0.0, %v793
      %v947 = vsel %vm915, 0.0, %v795
      %v948 = vsel %vm916, 0.0, %v797
      %v949 = vsel %vm917, 0.0, %v799
      %v950 = vsel %vm918, 0.0, %v801
      %v951 = vsel %vm919, 0.0, %v803
      %v952 = vsel %vm920, 0.0, %v805
      %v953 = vsel %vm921, 0.0, %v807
      %v954 = vsel %vm922, 0.0, %v809
      %v955 = vsel %vm923, 0.0, %v811
      %v956 = vsel %vm924, 0.0, %v813
      %v957 = vsel %vm925, 0.0, %v815
      %v958 = vsel %vm926, 0.0, %v817
      %v959 = vsel %vm927, 0.0, %v819
      %v960 = vsel %vm928, 0.0, %v821
      %v961 = vsel %vm929, 0.0, %v823
      %v962 = vsel %vm930, 0.0, %v825
      %v963 = vsel %vm931, 0.0, %v827
      %v964 = vsel %vm932, 0.0, %v829
      %v965 = vsel %vm933, 0.0, %v831
      %v966 = vsel %vm934, 0.0, %v833
      %v967 = vsel %vm935, 0.0, %v835
      %v968 = vsel %vm936, 0.0, %v837
      %v969 = vsel %vm937, 0.0, %v839
      %v970 = vsel %vm938, 0.0, %v841
      %vm971 = vcmask 1046528
      %v972 = vrot.slane %v714, 1
      %v973 = vrot.slane %v715, 1
      %v974 = vsel %vm971, %v972, %v973
      %v975 = vrot.slane %v716, 1
      %v976 = vsel %vm971, %v973, %v975
      %v977 = vrot.slane %v717, 1
      %v978 = vsel %vm971, %v975, %v977
      %v979 = vrot.slane %v718, 1
      %v980 = vsel %vm971, %v977, %v979
      %v981 = vrot.slane %v719, 1
      %v982 = vsel %vm971, %v979, %v981
      %v983 = vrot.slane %v720, 1
      %v984 = vsel %vm971, %v981, %v983
      %v985 = vrot.slane %v721, 1
      %v986 = vsel %vm971, %v983, %v985
      %v987 = vrot.slane %v722, 1
      %v988 = vsel %vm971, %v985, %v987
      %v989 = vrot.slane %v723, 1
      %v990 = vsel %vm971, %v987, %v989
      %v991 = vrot.slane %v724, 1
      %v992 = vsel %vm971, %v989, %v991
      %v993 = vrot.slane %v725, 1
      %v994 = vsel %vm971, %v991, %v993
      %v995 = vrot.slane %v726, 1
      %v996 = vsel %vm971, %v993, %v995
      %v997 = vrot.slane %v727, 1
      %v998 = vsel %vm971, %v995, %v997
      %v999 = vrot.slane %v728, 1
      %v1000 = vsel %vm971, %v997, %v999
      %v1001 = vrot.slane %v729, 1
      %v1002 = vsel %vm971, %v999, %v1001
      %v1003 = vrot.slane %v730, 1
      %v1004 = vsel %vm971, %v1001, %v1003
      %v1005 = vrot.slane %v731, 1
      %v1006 = vsel %vm971, %v1003, %v1005
      %v1007 = vrot.slane %v732, 1
      %v1008 = vsel %vm971, %v1005, %v1007
      %v1009 = vrot.slane %v733, 1
      %v1010 = vsel %vm971, %v1007, %v1009
      %v1011 = vrot.slane %v734, 1
      %v1012 = vsel %vm971, %v1009, %v1011
      %v1013 = vrot.slane %v735, 1
      %v1014 = vsel %vm971, %v1011, %v1013
      %v1015 = vrot.slane %v736, 1
      %v1016 = vsel %vm971, %v1013, %v1015
      %v1017 = vrot.slane %v737, 1
      %v1018 = vsel %vm971, %v1015, %v1017
      %v1019 = vrot.slane %v738, 1
      %v1020 = vsel %vm971, %v1017, %v1019
      %v1021 = vrot.slane %v739, 1
      %v1022 = vsel %vm971, %v1019, %v1021
      %v1023 = vrot.slane %v740, 1
      %v1024 = vsel %vm971, %v1021, %v1023
      %v1025 = vrot.slane %v741, 1
      %v1026 = vsel %vm971, %v1023, %v1025
      %v1027 = vrot.slane %v742, 1
      %v1028 = vsel %vm971, %v1025, %v1027
      %v1029 = vrot.slane %v743, 1
      %v1030 = vsel %vm971, %v1027, %v1029
      %v1031 = vrot.slane %v744, 1
      %v1032 = vsel %vm971, %v1029, %v1031
      %v1033 = vrot.slane %v745, 1
      %v1034 = vsel %vm971, %v1031, %v1033
      %v1067 = vsel %vm971, %v1033, 0.0
      %v1068 = vsel %vm675, 1, 0
      %v1069 = vsel %vm676, 1, 0
      %v1070 = vsel %vm677, 1, 0
      %v1071 = vsel %vm678, 1, 0
      %v1072 = vsel %vm679, 1, 0
      %v1073 = vsel %vm680, 1, 0
      %v1074 = vsel %vm681, 1, 0
      %v1075 = vsel %vm682, 1, 0
      %v1076 = vsel %vm683, 1, 0
      %v1077 = vsel %vm684, 1, 0
      %v1078 = vsel %vm685, 1, 0
      %v1079 = vsel %vm686, 1, 0
      %v1080 = vsel %vm687, 1, 0
      %v1081 = vsel %vm688, 1, 0
      %v1082 = vsel %vm689, 1, 0
      %v1083 = vsel %vm690, 1, 0
      %v1084 = vsel %vm691, 1, 0
      %v1085 = vsel %vm692, 1, 0
      %v1086 = vsel %vm693, 1, 0
      %v1087 = vsel %vm694, 1, 0
      %v1088 = vsel %vm695, 1, 0
      %v1089 = vsel %vm696, 1, 0
      %v1090 = vsel %vm697, 1, 0
      %v1091 = vsel %vm698, 1, 0
      %v1092 = vsel %vm699, 1, 0
      %v1093 = vsel %vm700, 1, 0
      %v1094 = vsel %vm701, 1, 0
      %v1095 = vsel %vm702, 1, 0
      %v1096 = vsel %vm703, 1, 0
      %v1097 = vsel %vm704, 1, 0
      %v1098 = vsel %vm705, 1, 0
      %v1099 = vsel %vm706, 1, 0
      %vm1100 = vcmp.eq.s32.totalorder %v1068, 1
      %vm1101 = vcmp.eq.s32.totalorder %v1069, 1
      %vm1102 = vcmp.eq.s32.totalorder %v1070, 1
      %vm1103 = vcmp.eq.s32.totalorder %v1071, 1
      %vm1104 = vcmp.eq.s32.totalorder %v1072, 1
      %vm1105 = vcmp.eq.s32.totalorder %v1073, 1
      %vm1106 = vcmp.eq.s32.totalorder %v1074, 1
      %vm1107 = vcmp.eq.s32.totalorder %v1075, 1
      %vm1108 = vcmp.eq.s32.totalorder %v1076, 1
      %vm1109 = vcmp.eq.s32.totalorder %v1077, 1
      %vm1110 = vcmp.eq.s32.totalorder %v1078, 1
      %vm1111 = vcmp.eq.s32.totalorder %v1079, 1
      %vm1112 = vcmp.eq.s32.totalorder %v1080, 1
      %vm1113 = vcmp.eq.s32.totalorder %v1081, 1
      %vm1114 = vcmp.eq.s32.totalorder %v1082, 1
      %vm1115 = vcmp.eq.s32.totalorder %v1083, 1
      %vm1116 = vcmp.eq.s32.totalorder %v1084, 1
      %vm1117 = vcmp.eq.s32.totalorder %v1085, 1
      %vm1118 = vcmp.eq.s32.totalorder %v1086, 1
      %vm1119 = vcmp.eq.s32.totalorder %v1087, 1
      %vm1120 = vcmp.eq.s32.totalorder %v1088, 1
      %vm1121 = vcmp.eq.s32.totalorder %v1089, 1
      %vm1122 = vcmp.eq.s32.totalorder %v1090, 1
      %vm1123 = vcmp.eq.s32.totalorder %v1091, 1
      %vm1124 = vcmp.eq.s32.totalorder %v1092, 1
      %vm1125 = vcmp.eq.s32.totalorder %v1093, 1
      %vm1126 = vcmp.eq.s32.totalorder %v1094, 1
      %vm1127 = vcmp.eq.s32.totalorder %v1095, 1
      %vm1128 = vcmp.eq.s32.totalorder %v1096, 1
      %vm1129 = vcmp.eq.s32.totalorder %v1097, 1
      %vm1130 = vcmp.eq.s32.totalorder %v1098, 1
      %vm1131 = vcmp.eq.s32.totalorder %v1099, 1
      %v1132 = vsel %vm1100, 0.0, %v974
      %v1133 = vsel %vm1101, 0.0, %v976
      %v1134 = vsel %vm1102, 0.0, %v978
      %v1135 = vsel %vm1103, 0.0, %v980
      %v1136 = vsel %vm1104, 0.0, %v982
      %v1137 = vsel %vm1105, 0.0, %v984
      %v1138 = vsel %vm1106, 0.0, %v986
      %v1139 = vsel %vm1107, 0.0, %v988
      %v1140 = vsel %vm1108, 0.0, %v990
      %v1141 = vsel %vm1109, 0.0, %v992
      %v1142 = vsel %vm1110, 0.0, %v994
      %v1143 = vsel %vm1111, 0.0, %v996
      %v1144 = vsel %vm1112, 0.0, %v998
      %v1145 = vsel %vm1113, 0.0, %v1000
      %v1146 = vsel %vm1114, 0.0, %v1002
      %v1147 = vsel %vm1115, 0.0, %v1004
      %v1148 = vsel %vm1116, 0.0, %v1006
      %v1149 = vsel %vm1117, 0.0, %v1008
      %v1150 = vsel %vm1118, 0.0, %v1010
      %v1151 = vsel %vm1119, 0.0, %v1012
      %v1152 = vsel %vm1120, 0.0, %v1014
      %v1153 = vsel %vm1121, 0.0, %v1016
      %v1154 = vsel %vm1122, 0.0, %v1018
      %v1155 = vsel %vm1123, 0.0, %v1020
      %v1156 = vsel %vm1124, 0.0, %v1022
      %v1157 = vsel %vm1125, 0.0, %v1024
      %v1158 = vsel %vm1126, 0.0, %v1026
      %v1159 = vsel %vm1127, 0.0, %v1028
      %v1160 = vsel %vm1128, 0.0, %v1030
      %v1161 = vsel %vm1129, 0.0, %v1032
      %v1162 = vsel %vm1130, 0.0, %v1034
      %v1163 = vsel %vm1131, 0.0, %v1067
      %1164 = vrot.lane.b32.xlu0 %v714, 64
      %v1165 = vpop.permute.xlu0 %1164
      %1166 = vrot.lane.b32.xlu0 %v715, 64
      %v1167 = vpop.permute.xlu0 %1166
      %1168 = vrot.lane.b32.xlu0 %v716, 64
      %v1169 = vpop.permute.xlu0 %1168
      %1170 = vrot.lane.b32.xlu0 %v717, 64
      %v1171 = vpop.permute.xlu0 %1170
      %1172 = vrot.lane.b32.xlu0 %v718, 64
      %v1173 = vpop.permute.xlu0 %1172
      %1174 = vrot.lane.b32.xlu0 %v719, 64
      %v1175 = vpop.permute.xlu0 %1174
      %1176 = vrot.lane.b32.xlu0 %v720, 64
      %v1177 = vpop.permute.xlu0 %1176
      %1178 = vrot.lane.b32.xlu0 %v721, 64
      %v1179 = vpop.permute.xlu0 %1178
      %1180 = vrot.lane.b32.xlu0 %v722, 64
      %v1181 = vpop.permute.xlu0 %1180
      %1182 = vrot.lane.b32.xlu0 %v723, 64
      %v1183 = vpop.permute.xlu0 %1182
      %1184 = vrot.lane.b32.xlu0 %v724, 64
      %v1185 = vpop.permute.xlu0 %1184
      %1186 = vrot.lane.b32.xlu0 %v725, 64
      %v1187 = vpop.permute.xlu0 %1186
      %1188 = vrot.lane.b32.xlu0 %v726, 64
      %v1189 = vpop.permute.xlu0 %1188
      %1190 = vrot.lane.b32.xlu0 %v727, 64
      %v1191 = vpop.permute.xlu0 %1190
      %1192 = vrot.lane.b32.xlu0 %v728, 64
      %v1193 = vpop.permute.xlu0 %1192
      %1194 = vrot.lane.b32.xlu0 %v729, 64
      %v1195 = vpop.permute.xlu0 %1194
      %1196 = vrot.lane.b32.xlu0 %v730, 64
      %v1197 = vpop.permute.xlu0 %1196
      %1198 = vrot.lane.b32.xlu0 %v731, 64
      %v1199 = vpop.permute.xlu0 %1198
      %1200 = vrot.lane.b32.xlu0 %v732, 64
      %v1201 = vpop.permute.xlu0 %1200
      %1202 = vrot.lane.b32.xlu0 %v733, 64
      %v1203 = vpop.permute.xlu0 %1202
      %1204 = vrot.lane.b32.xlu0 %v734, 64
      %v1205 = vpop.permute.xlu0 %1204
      %1206 = vrot.lane.b32.xlu0 %v735, 64
      %v1207 = vpop.permute.xlu0 %1206
      %1208 = vrot.lane.b32.xlu0 %v736, 64
      %v1209 = vpop.permute.xlu0 %1208
      %1210 = vrot.lane.b32.xlu0 %v737, 64
      %v1211 = vpop.permute.xlu0 %1210
      %1212 = vrot.lane.b32.xlu0 %v738, 64
      %v1213 = vpop.permute.xlu0 %1212
      %1214 = vrot.lane.b32.xlu0 %v739, 64
      %v1215 = vpop.permute.xlu0 %1214
      %1216 = vrot.lane.b32.xlu0 %v740, 64
      %v1217 = vpop.permute.xlu0 %1216
      %1218 = vrot.lane.b32.xlu0 %v741, 64
      %v1219 = vpop.permute.xlu0 %1218
      %1220 = vrot.lane.b32.xlu0 %v742, 64
      %v1221 = vpop.permute.xlu0 %1220
      %1222 = vrot.lane.b32.xlu0 %v743, 64
      %v1223 = vpop.permute.xlu0 %1222
      %1224 = vrot.lane.b32.xlu0 %v744, 64
      %v1225 = vpop.permute.xlu0 %1224
      %1226 = vrot.lane.b32.xlu0 %v745, 64
      %v1227 = vpop.permute.xlu0 %1226
      %vm1260 = vcmask 523264
      %v1261 = vsel %vm1260, %v939, %v1165
      %v1262 = vsel %vm1260, %v940, %v1167
      %v1263 = vsel %vm1260, %v941, %v1169
      %v1264 = vsel %vm1260, %v942, %v1171
      %v1265 = vsel %vm1260, %v943, %v1173
      %v1266 = vsel %vm1260, %v944, %v1175
      %v1267 = vsel %vm1260, %v945, %v1177
      %v1268 = vsel %vm1260, %v946, %v1179
      %v1269 = vsel %vm1260, %v947, %v1181
      %v1270 = vsel %vm1260, %v948, %v1183
      %v1271 = vsel %vm1260, %v949, %v1185
      %v1272 = vsel %vm1260, %v950, %v1187
      %v1273 = vsel %vm1260, %v951, %v1189
      %v1274 = vsel %vm1260, %v952, %v1191
      %v1275 = vsel %vm1260, %v953, %v1193
      %v1276 = vsel %vm1260, %v954, %v1195
      %v1277 = vsel %vm1260, %v955, %v1197
      %v1278 = vsel %vm1260, %v956, %v1199
      %v1279 = vsel %vm1260, %v957, %v1201
      %v1280 = vsel %vm1260, %v958, %v1203
      %v1281 = vsel %vm1260, %v959, %v1205
      %v1282 = vsel %vm1260, %v960, %v1207
      %v1283 = vsel %vm1260, %v961, %v1209
      %v1284 = vsel %vm1260, %v962, %v1211
      %v1285 = vsel %vm1260, %v963, %v1213
      %v1286 = vsel %vm1260, %v964, %v1215
      %v1287 = vsel %vm1260, %v965, %v1217
      %v1288 = vsel %vm1260, %v966, %v1219
      %v1289 = vsel %vm1260, %v967, %v1221
      %v1290 = vsel %vm1260, %v968, %v1223
      %v1291 = vsel %vm1260, %v969, %v1225
      %v1292 = vsel %vm1260, %v970, %v1227
      %v1293 = vpack.c.bf16 %v1262, %v1261
      %v1294 = vpack.c.bf16 %v1133, %v1132
      %v1295 = vpack.c.bf16 %v1264, %v1263
      %v1296 = vpack.c.bf16 %v1135, %v1134
      %v1297 = vpack.c.bf16 %v1266, %v1265
      %v1298 = vpack.c.bf16 %v1137, %v1136
      %v1299 = vpack.c.bf16 %v1268, %v1267
      %v1300 = vpack.c.bf16 %v1139, %v1138
      %v1301 = vpack.c.bf16 %v1270, %v1269
      %v1302 = vpack.c.bf16 %v1141, %v1140
      %v1303 = vpack.c.bf16 %v1272, %v1271
      %v1304 = vpack.c.bf16 %v1143, %v1142
      %v1305 = vpack.c.bf16 %v1274, %v1273
      %v1306 = vpack.c.bf16 %v1145, %v1144
      %v1307 = vpack.c.bf16 %v1276, %v1275
      %v1308 = vpack.c.bf16 %v1147, %v1146
      %v1309 = vpack.c.bf16 %v1278, %v1277
      %v1310 = vpack.c.bf16 %v1149, %v1148
      %v1311 = vpack.c.bf16 %v1280, %v1279
      %v1312 = vpack.c.bf16 %v1151, %v1150
      %v1313 = vpack.c.bf16 %v1282, %v1281
      %v1314 = vpack.c.bf16 %v1153, %v1152
      %v1315 = vpack.c.bf16 %v1284, %v1283
      %v1316 = vpack.c.bf16 %v1155, %v1154
      %v1317 = vpack.c.bf16 %v1286, %v1285
      %v1318 = vpack.c.bf16 %v1157, %v1156
      %v1319 = vpack.c.bf16 %v1288, %v1287
      %v1320 = vpack.c.bf16 %v1159, %v1158
      %v1321 = vpack.c.bf16 %v1290, %v1289
      %v1322 = vpack.c.bf16 %v1161, %v1160
      %v1323 = vpack.c.bf16 %v1292, %v1291
      %v1324 = vpack.c.bf16 %v1163, %v1162
      %v1357 = vunpack.c.l.b16 %v1293
      %v1358 = vunpack.c.l.b16 %v1294
      %v1359 = vunpack.c.h.b16 %v1293
      %v1360 = vunpack.c.h.b16 %v1294
      %v1361 = vunpack.c.l.b16 %v1295
      %v1362 = vunpack.c.l.b16 %v1296
      %v1363 = vunpack.c.h.b16 %v1295
      %v1364 = vunpack.c.h.b16 %v1296
      %v1365 = vunpack.c.l.b16 %v1297
      %v1366 = vunpack.c.l.b16 %v1298
      %v1367 = vunpack.c.h.b16 %v1297
      %v1368 = vunpack.c.h.b16 %v1298
      %v1369 = vunpack.c.l.b16 %v1299
      %v1370 = vunpack.c.l.b16 %v1300
      %v1371 = vunpack.c.h.b16 %v1299
      %v1372 = vunpack.c.h.b16 %v1300
      %v1373 = vunpack.c.l.b16 %v1301
      %v1374 = vunpack.c.l.b16 %v1302
      %v1375 = vunpack.c.h.b16 %v1301
      %v1376 = vunpack.c.h.b16 %v1302
      %v1377 = vunpack.c.l.b16 %v1303
      %v1378 = vunpack.c.l.b16 %v1304
      %v1379 = vunpack.c.h.b16 %v1303
      %v1380 = vunpack.c.h.b16 %v1304
      %v1381 = vunpack.c.l.b16 %v1305
      %v1382 = vunpack.c.l.b16 %v1306
      %v1383 = vunpack.c.h.b16 %v1305
      %v1384 = vunpack.c.h.b16 %v1306
      %v1385 = vunpack.c.l.b16 %v1307
      %v1386 = vunpack.c.l.b16 %v1308
      %v1387 = vunpack.c.h.b16 %v1307
      %v1388 = vunpack.c.h.b16 %v1308
      %v1389 = vunpack.c.l.b16 %v1309
      %v1390 = vunpack.c.l.b16 %v1310
      %v1391 = vunpack.c.h.b16 %v1309
      %v1392 = vunpack.c.h.b16 %v1310
      %v1393 = vunpack.c.l.b16 %v1311
      %v1394 = vunpack.c.l.b16 %v1312
      %v1395 = vunpack.c.h.b16 %v1311
      %v1396 = vunpack.c.h.b16 %v1312
      %v1397 = vunpack.c.l.b16 %v1313
      %v1398 = vunpack.c.l.b16 %v1314
      %v1399 = vunpack.c.h.b16 %v1313
      %v1400 = vunpack.c.h.b16 %v1314
      %v1401 = vunpack.c.l.b16 %v1315
      %v1402 = vunpack.c.l.b16 %v1316
      %v1403 = vunpack.c.h.b16 %v1315
      %v1404 = vunpack.c.h.b16 %v1316
      %v1405 = vunpack.c.l.b16 %v1317
      %v1406 = vunpack.c.l.b16 %v1318
      %v1407 = vunpack.c.h.b16 %v1317
      %v1408 = vunpack.c.h.b16 %v1318
      %v1409 = vunpack.c.l.b16 %v1319
      %v1410 = vunpack.c.l.b16 %v1320
      %v1411 = vunpack.c.h.b16 %v1319
      %v1412 = vunpack.c.h.b16 %v1320
      %v1413 = vunpack.c.l.b16 %v1321
      %v1414 = vunpack.c.l.b16 %v1322
      %v1415 = vunpack.c.h.b16 %v1321
      %v1416 = vunpack.c.h.b16 %v1322
      %v1417 = vunpack.c.l.b16 %v1323
      %v1418 = vunpack.c.l.b16 %v1324
      %v1419 = vunpack.c.h.b16 %v1323
      %v1420 = vunpack.c.h.b16 %v1324
      %v1421 = vpack.c.b16 %v1358, %v1357
      %v1422 = vpack.c.b16 %v1360, %v1359
      %v1423 = vpack.c.b16 %v1362, %v1361
      %v1424 = vpack.c.b16 %v1364, %v1363
      %v1425 = vpack.c.b16 %v1366, %v1365
      %v1426 = vpack.c.b16 %v1368, %v1367
      %v1427 = vpack.c.b16 %v1370, %v1369
      %v1428 = vpack.c.b16 %v1372, %v1371
      %v1429 = vpack.c.b16 %v1374, %v1373
      %v1430 = vpack.c.b16 %v1376, %v1375
      %v1431 = vpack.c.b16 %v1378, %v1377
      %v1432 = vpack.c.b16 %v1380, %v1379
      %v1433 = vpack.c.b16 %v1382, %v1381
      %v1434 = vpack.c.b16 %v1384, %v1383
      %v1435 = vpack.c.b16 %v1386, %v1385
      %v1436 = vpack.c.b16 %v1388, %v1387
      %v1437 = vpack.c.b16 %v1390, %v1389
      %v1438 = vpack.c.b16 %v1392, %v1391
      %v1439 = vpack.c.b16 %v1394, %v1393
      %v1440 = vpack.c.b16 %v1396, %v1395
      %v1441 = vpack.c.b16 %v1398, %v1397
      %v1442 = vpack.c.b16 %v1400, %v1399
      %v1443 = vpack.c.b16 %v1402, %v1401
      %v1444 = vpack.c.b16 %v1404, %v1403
      %v1445 = vpack.c.b16 %v1406, %v1405
      %v1446 = vpack.c.b16 %v1408, %v1407
      %v1447 = vpack.c.b16 %v1410, %v1409
      %v1448 = vpack.c.b16 %v1412, %v1411
      %v1449 = vpack.c.b16 %v1414, %v1413
      %v1450 = vpack.c.b16 %v1416, %v1415
      %v1451 = vpack.c.b16 %v1418, %v1417
      %v1452 = vpack.c.b16 %v1420, %v1419
      %1485 = vst.msk [vmem:[#allocation2 + $0x10] sm:$0xff] %vm709, %v1421
      %1486 = vst.msk [vmem:[#allocation2 + $0x18] sm:$0xff] %vm709, %v1422
      %1487 = vst.msk [vmem:[#allocation2 + $0x20] sm:$0xff] %vm709, %v1423
      %1488 = vst.msk [vmem:[#allocation2 + $0x28] sm:$0xff] %vm709, %v1424
      %1489 = vst.msk [vmem:[#allocation2 + $0x30] sm:$0xff] %vm709, %v1425
      %1490 = vst.msk [vmem:[#allocation2 + $0x38] sm:$0xff] %vm709, %v1426
      %1491 = vst.msk [vmem:[#allocation2 + $0x40] sm:$0xff] %vm709, %v1427
      %1492 = vst.msk [vmem:[#allocation2 + $0x48] sm:$0xff] %vm709, %v1428
      %1493 = vst.msk [vmem:[#allocation2 + $0x50] sm:$0xff] %vm709, %v1429
      %1494 = vst.msk [vmem:[#allocation2 + $0x58] sm:$0xff] %vm709, %v1430
      %1495 = vst.msk [vmem:[#allocation2 + $0x60] sm:$0xff] %vm709, %v1431
      %1496 = vst.msk [vmem:[#allocation2 + $0x68] sm:$0xff] %vm709, %v1432
      %1497 = vst.msk [vmem:[#allocation2 + $0x70] sm:$0xff] %vm709, %v1433
      %1498 = vst.msk [vmem:[#allocation2 + $0x78] sm:$0xff] %vm709, %v1434
      %1499 = vst.msk [vmem:[#allocation2 + $0x80] sm:$0xff] %vm709, %v1435
      %1500 = vst.msk [vmem:[#allocation2 + $0x88] sm:$0xff] %vm709, %v1436
      %1501 = vst.msk [vmem:[#allocation2 + $0x90] sm:$0xff] %vm709, %v1437
      %1502 = vst.msk [vmem:[#allocation2 + $0x98] sm:$0xff] %vm709, %v1438
      %1503 = vst.msk [vmem:[#allocation2 + $0xa0] sm:$0xff] %vm709, %v1439
      %1504 = vst.msk [vmem:[#allocation2 + $0xa8] sm:$0xff] %vm709, %v1440
      %1505 = vst.msk [vmem:[#allocation2 + $0xb0] sm:$0xff] %vm709, %v1441
      %1506 = vst.msk [vmem:[#allocation2 + $0xb8] sm:$0xff] %vm709, %v1442
      %1507 = vst.msk [vmem:[#allocation2 + $0xc0] sm:$0xff] %vm709, %v1443
      %1508 = vst.msk [vmem:[#allocation2 + $0xc8] sm:$0xff] %vm709, %v1444
      %1509 = vst.msk [vmem:[#allocation2 + $0xd0] sm:$0xff] %vm709, %v1445
      %1510 = vst.msk [vmem:[#allocation2 + $0xd8] sm:$0xff] %vm709, %v1446
      %1511 = vst.msk [vmem:[#allocation2 + $0xe0] sm:$0xff] %vm709, %v1447
      %1512 = vst.msk [vmem:[#allocation2 + $0xe8] sm:$0xff] %vm709, %v1448
      %1513 = vst.msk [vmem:[#allocation2 + $0xf0] sm:$0xff] %vm709, %v1449
      %1514 = vst.msk [vmem:[#allocation2 + $0xf8] sm:$0xff] %vm709, %v1450
      %1515 = vst.msk [vmem:[#allocation2 + $0x100] sm:$0xff] %vm709, %v1451
      %1516 = vst.msk [vmem:[#allocation2 + $0x108] sm:$0xff] %vm709, %v1452
      %v1517 = vld [vmem:[#allocation2] sm:$0xff]
      %v1518 = vld [vmem:[#allocation2 + $0x8] sm:$0xff]
      %v1519 = vld [vmem:[#allocation2 + $0x10] sm:$0xff]
      %v1520 = vld [vmem:[#allocation2 + $0x18] sm:$0xff]
      %v1521 = vld [vmem:[#allocation2 + $0x20] sm:$0xff]
      %v1522 = vld [vmem:[#allocation2 + $0x28] sm:$0xff]
      %v1523 = vld [vmem:[#allocation2 + $0x30] sm:$0xff]
      %v1524 = vld [vmem:[#allocation2 + $0x38] sm:$0xff]
      %v1525 = vld [vmem:[#allocation2 + $0x40] sm:$0xff]
      %v1526 = vld [vmem:[#allocation2 + $0x48] sm:$0xff]
      %v1527 = vld [vmem:[#allocation2 + $0x50] sm:$0xff]
      %v1528 = vld [vmem:[#allocation2 + $0x58] sm:$0xff]
      %v1529 = vld [vmem:[#allocation2 + $0x60] sm:$0xff]
      %v1530 = vld [vmem:[#allocation2 + $0x68] sm:$0xff]
      %v1531 = vld [vmem:[#allocation2 + $0x70] sm:$0xff]
      %v1532 = vld [vmem:[#allocation2 + $0x78] sm:$0xff]
      %v1533 = vld [vmem:[#allocation2 + $0x80] sm:$0xff]
      %v1534 = vld [vmem:[#allocation2 + $0x88] sm:$0xff]
      %v1535 = vld [vmem:[#allocation2 + $0x90] sm:$0xff]
      %v1536 = vld [vmem:[#allocation2 + $0x98] sm:$0xff]
      %v1537 = vld [vmem:[#allocation2 + $0xa0] sm:$0xff]
      %v1538 = vld [vmem:[#allocation2 + $0xa8] sm:$0xff]
      %v1539 = vld [vmem:[#allocation2 + $0xb0] sm:$0xff]
      %v1540 = vld [vmem:[#allocation2 + $0xb8] sm:$0xff]
      %v1541 = vld [vmem:[#allocation2 + $0xc0] sm:$0xff]
      %v1542 = vld [vmem:[#allocation2 + $0xc8] sm:$0xff]
      %v1543 = vld [vmem:[#allocation2 + $0xd0] sm:$0xff]
      %v1544 = vld [vmem:[#allocation2 + $0xd8] sm:$0xff]
      %v1545 = vld [vmem:[#allocation2 + $0xe0] sm:$0xff]
      %v1546 = vld [vmem:[#allocation2 + $0xe8] sm:$0xff]
      %v1547 = vld [vmem:[#allocation2 + $0xf0] sm:$0xff]
      %v1548 = vld [vmem:[#allocation2 + $0xf8] sm:$0xff]
      %v1549 = vld [vmem:[%s1] sm:$0xf]
      %v1550 = vld [vmem:[%s1 + $0x4] sm:$0xf]
      %v1551 = vld [vmem:[%s1 + $0x8] sm:$0xf]
      %v1552 = vld [vmem:[%s1 + $0xc] sm:$0xf]
      %v1553 = vld [vmem:[%s1 + $0x10] sm:$0xf]
      %v1554 = vld [vmem:[%s1 + $0x14] sm:$0xf]
      %v1555 = vld [vmem:[%s1 + $0x18] sm:$0xf]
      %v1556 = vld [vmem:[%s1 + $0x1c] sm:$0xf]
      %v1557 = vld [vmem:[%s1 + $0x20] sm:$0xf]
      %v1558 = vld [vmem:[%s1 + $0x24] sm:$0xf]
      %v1559 = vld [vmem:[%s1 + $0x28] sm:$0xf]
      %v1560 = vld [vmem:[%s1 + $0x2c] sm:$0xf]
      %v1561 = vld [vmem:[%s1 + $0x30] sm:$0xf]
      %v1562 = vld [vmem:[%s1 + $0x34] sm:$0xf]
      %v1563 = vld [vmem:[%s1 + $0x38] sm:$0xf]
      %v1564 = vld [vmem:[%s1 + $0x3c] sm:$0xf]
      %v1565 = vld [vmem:[%s1 + $0x40] sm:$0xf]
      %v1566 = vld [vmem:[%s1 + $0x44] sm:$0xf]
      %v1567 = vld [vmem:[%s1 + $0x48] sm:$0xf]
      %v1568 = vld [vmem:[%s1 + $0x4c] sm:$0xf]
      %v1569 = vld [vmem:[%s1 + $0x50] sm:$0xf]
      %v1570 = vld [vmem:[%s1 + $0x54] sm:$0xf]
      %v1571 = vld [vmem:[%s1 + $0x58] sm:$0xf]
      %v1572 = vld [vmem:[%s1 + $0x5c] sm:$0xf]
      %v1573 = vld [vmem:[#allocation2 + $0x100] sm:$0xff]
      %v1574 = vld [vmem:[#allocation2 + $0x108] sm:$0xff]
      %s1575 = scalar_lea.vmem %s1, 96
      %v1576 = vld [vmem:[%s1575] sm:$0xf]
      %v1577 = vld [vmem:[%s1575 + $0x4] sm:$0xf]
      %v1578 = vld [vmem:[%s1575 + $0x8] sm:$0xf]
      %v1579 = vld [vmem:[%s1575 + $0xc] sm:$0xf]
      %v1580 = vld [vmem:[%s1575 + $0x10] sm:$0xf]
      %v1581 = vld [vmem:[%s1575 + $0x14] sm:$0xf]
      %v1582 = vld [vmem:[%s1575 + $0x18] sm:$0xf]
      %v1583 = vld [vmem:[%s1575 + $0x1c] sm:$0xf]
      %v1584 = vld [vmem:[%s1575 + $0x20] sm:$0xf]
      %v1585 = vld [vmem:[%s1575 + $0x24] sm:$0xf]
      %v1586 = vld [vmem:[%s1575 + $0x28] sm:$0xf]
      %v1587 = vld [vmem:[%s1575 + $0x2c] sm:$0xf]
      %v1588 = vld [vmem:[%s1575 + $0x30] sm:$0xf]
      %v1589 = vld [vmem:[%s1575 + $0x34] sm:$0xf]
      %v1590 = vld [vmem:[%s1575 + $0x38] sm:$0xf]
      %v1591 = vld [vmem:[%s1575 + $0x3c] sm:$0xf]
      %v1592 = vld [vmem:[%s1575 + $0x40] sm:$0xf]
      %v1593 = vld [vmem:[%s1575 + $0x44] sm:$0xf]
      %v1594 = vld [vmem:[%s1575 + $0x48] sm:$0xf]
      %v1595 = vld [vmem:[%s1575 + $0x4c] sm:$0xf]
      %v1596 = vld [vmem:[%s1575 + $0x50] sm:$0xf]
      %v1597 = vld [vmem:[%s1575 + $0x54] sm:$0xf]
      %v1598 = vld [vmem:[%s1575 + $0x58] sm:$0xf]
      %v1599 = vld [vmem:[%s1575 + $0x5c] sm:$0xf]
      %v1632 = vunpack.c.l.b16 %v1519
      %v1633 = vunpack.c.h.b16 %v1519
      %v1634 = vunpack.c.l.b16 %v1520
      %v1635 = vunpack.c.h.b16 %v1520
      %v1636 = vunpack.c.l.b16 %v1521
      %v1637 = vunpack.c.h.b16 %v1521
      %v1638 = vunpack.c.l.b16 %v1522
      %v1639 = vunpack.c.h.b16 %v1522
      %v1640 = vunpack.c.l.b16 %v1523
      %v1641 = vunpack.c.h.b16 %v1523
      %v1642 = vunpack.c.l.b16 %v1524
      %v1643 = vunpack.c.h.b16 %v1524
      %v1644 = vunpack.c.l.b16 %v1525
      %v1645 = vunpack.c.h.b16 %v1525
      %v1646 = vunpack.c.l.b16 %v1526
      %v1647 = vunpack.c.h.b16 %v1526
      %v1648 = vunpack.c.l.b16 %v1527
      %v1649 = vunpack.c.h.b16 %v1527
      %v1650 = vunpack.c.l.b16 %v1528
      %v1651 = vunpack.c.h.b16 %v1528
      %v1652 = vunpack.c.l.b16 %v1529
      %v1653 = vunpack.c.h.b16 %v1529
      %v1654 = vunpack.c.l.b16 %v1530
      %v1655 = vunpack.c.h.b16 %v1530
      %v1656 = vunpack.c.l.b16 %v1531
      %v1657 = vunpack.c.h.b16 %v1531
      %v1658 = vunpack.c.l.b16 %v1532
      %v1659 = vunpack.c.h.b16 %v1532
      %v1660 = vunpack.c.l.b16 %v1533
      %v1661 = vunpack.c.h.b16 %v1533
      %v1662 = vunpack.c.l.b16 %v1534
      %v1663 = vunpack.c.h.b16 %v1534
      %v1664 = vunpack.c.l.b16 %v1535
      %v1665 = vunpack.c.h.b16 %v1535
      %v1666 = vunpack.c.l.b16 %v1536
      %v1667 = vunpack.c.h.b16 %v1536
      %v1668 = vunpack.c.l.b16 %v1537
      %v1669 = vunpack.c.h.b16 %v1537
      %v1670 = vunpack.c.l.b16 %v1538
      %v1671 = vunpack.c.h.b16 %v1538
      %v1672 = vunpack.c.l.b16 %v1539
      %v1673 = vunpack.c.h.b16 %v1539
      %v1674 = vunpack.c.l.b16 %v1540
      %v1675 = vunpack.c.h.b16 %v1540
      %v1676 = vunpack.c.l.b16 %v1541
      %v1677 = vunpack.c.h.b16 %v1541
      %v1678 = vunpack.c.l.b16 %v1542
      %v1679 = vunpack.c.h.b16 %v1542
      %v1680 = vunpack.c.l.b16 %v1543
      %v1681 = vunpack.c.h.b16 %v1543
      %v1682 = vunpack.c.l.b16 %v1544
      %v1683 = vunpack.c.h.b16 %v1544
      %v1684 = vunpack.c.l.b16 %v1545
      %v1685 = vunpack.c.h.b16 %v1545
      %v1686 = vunpack.c.l.b16 %v1546
      %v1687 = vunpack.c.h.b16 %v1546
      %v1688 = vunpack.c.l.b16 %v1547
      %v1689 = vunpack.c.h.b16 %v1547
      %v1690 = vunpack.c.l.b16 %v1548
      %v1691 = vunpack.c.h.b16 %v1548
      %v1692 = vunpack.c.l.b16 %v1573
      %v1693 = vunpack.c.h.b16 %v1573
      %v1694 = vunpack.c.l.b16 %v1574
      %v1695 = vunpack.c.h.b16 %v1574
      %v1696 = vpack.c.b16 %v1634, %v1632
      %v1697 = vpack.c.b16 %v1635, %v1633
      %v1698 = vpack.c.b16 %v1638, %v1636
      %v1699 = vpack.c.b16 %v1639, %v1637
      %v1700 = vpack.c.b16 %v1642, %v1640
      %v1701 = vpack.c.b16 %v1643, %v1641
      %v1702 = vpack.c.b16 %v1646, %v1644
      %v1703 = vpack.c.b16 %v1647, %v1645
      %v1704 = vpack.c.b16 %v1650, %v1648
      %v1705 = vpack.c.b16 %v1651, %v1649
      %v1706 = vpack.c.b16 %v1654, %v1652
      %v1707 = vpack.c.b16 %v1655, %v1653
      %v1708 = vpack.c.b16 %v1658, %v1656
      %v1709 = vpack.c.b16 %v1659, %v1657
      %v1710 = vpack.c.b16 %v1662, %v1660
      %v1711 = vpack.c.b16 %v1663, %v1661
      %v1712 = vpack.c.b16 %v1666, %v1664
      %v1713 = vpack.c.b16 %v1667, %v1665
      %v1714 = vpack.c.b16 %v1670, %v1668
      %v1715 = vpack.c.b16 %v1671, %v1669
      %v1716 = vpack.c.b16 %v1674, %v1672
      %v1717 = vpack.c.b16 %v1675, %v1673
      %v1718 = vpack.c.b16 %v1678, %v1676
      %v1719 = vpack.c.b16 %v1679, %v1677
      %v1720 = vpack.c.b16 %v1682, %v1680
      %v1721 = vpack.c.b16 %v1683, %v1681
      %v1722 = vpack.c.b16 %v1686, %v1684
      %v1723 = vpack.c.b16 %v1687, %v1685
      %v1724 = vpack.c.b16 %v1690, %v1688
      %v1725 = vpack.c.b16 %v1691, %v1689
      %v1726 = vpack.c.b16 %v1694, %v1692
      %v1727 = vpack.c.b16 %v1695, %v1693
      %v1768 = vunpack.c.l.b16 %v1576
      %v1769 = vunpack.c.l.b16 %v1577
      %v1770 = vunpack.c.l.b16 %v1578
      %v1771 = vunpack.c.l.b16 %v1579
      %v1772 = vunpack.c.l.b16 %v1580
      %v1773 = vunpack.c.l.b16 %v1581
      %v1774 = vunpack.c.l.b16 %v1582
      %v1775 = vunpack.c.l.b16 %v1583
      %v1776 = vunpack.c.l.b16 %v1584
      %v1777 = vunpack.c.l.b16 %v1585
      %v1778 = vunpack.c.l.b16 %v1586
      %v1779 = vunpack.c.l.b16 %v1587
      %v1780 = vunpack.c.l.b16 %v1588
      %v1781 = vunpack.c.l.b16 %v1589
      %v1782 = vunpack.c.l.b16 %v1590
      %v1783 = vunpack.c.l.b16 %v1591
      %v1784 = vunpack.c.l.b16 %v1592
      %v1785 = vunpack.c.l.b16 %v1593
      %v1786 = vunpack.c.l.b16 %v1594
      %v1787 = vunpack.c.l.b16 %v1595
      %v1788 = vunpack.c.l.b16 %v1596
      %v1789 = vunpack.c.l.b16 %v1597
      %v1790 = vunpack.c.l.b16 %v1598
      %v1791 = vunpack.c.l.b16 %v1599
      %v1792 = vpack.c.b16 %v1769, %v1768
      %v1793 = vpack.c.b16 %v1771, %v1770
      %v1794 = vpack.c.b16 %v1773, %v1772
      %v1795 = vpack.c.b16 %v1775, %v1774
      %v1796 = vpack.c.b16 %v1777, %v1776
      %v1797 = vpack.c.b16 %v1779, %v1778
      %v1798 = vpack.c.b16 %v1781, %v1780
      %v1799 = vpack.c.b16 %v1783, %v1782
      %v1800 = vpack.c.b16 %v1785, %v1784
      %v1801 = vpack.c.b16 %v1787, %v1786
      %v1802 = vpack.c.b16 %v1789, %v1788
      %v1803 = vpack.c.b16 %v1791, %v1790
      %v1817 = vsel %vm1260, %v1697, 0
      %v1820 = vsel %vm1260, %v1699, 0
      %v1823 = vsel %vm1260, %v1701, 0
      %v1826 = vsel %vm1260, %v1703, 0
      %v1829 = vsel %vm1260, %v1705, 0
      %v1832 = vsel %vm1260, %v1707, 0
      %v1835 = vsel %vm1260, %v1709, 0
      %v1838 = vsel %vm1260, %v1711, 0
      %v1841 = vsel %vm1260, %v1713, 0
      %v1844 = vsel %vm1260, %v1715, 0
      %v1847 = vsel %vm1260, %v1717, 0
      %v1850 = vsel %vm1260, %v1719, 0
      %v1853 = vsel %vm1260, %v1721, 0
      %v1856 = vsel %vm1260, %v1723, 0
      %v1859 = vsel %vm1260, %v1725, 0
      %v1862 = vsel %vm1260, %v1727, 0
      %1864 = vmatprep.subr.bf16.mxu0 0
      %1865 = vmatpush1.bf16.msra.mxu0 %v1799
      %1866 = vmatprep.subr.bf16.mxu0 0
      %1867 = vmatpush1.bf16.msra.mxu0 %v1798
      %1868 = vmatprep.subr.bf16.mxu0 0
      %1869 = vmatpush1.bf16.msra.mxu0 %v1797
      %1870 = vmatprep.subr.bf16.mxu0 0
      %1871 = vmatpush1.bf16.msra.mxu0 %v1796
      %1872 = vmatprep.subr.bf16.mxu0 0
      %1873 = vmatpush1.bf16.msra.mxu0 %v1795
      %1874 = vmatprep.subr.bf16.mxu0 0
      %1875 = vmatpush1.bf16.msra.mxu0 %v1794
      %1876 = vmatprep.subr.bf16.mxu0 0
      %1877 = vmatpush1.bf16.msra.mxu0 %v1793
      %1878 = vmatprep.subr.bf16.mxu0 0
      %1879 = vmatpush1.bf16.msra.mxu0 %v1792
      %1880 = vmatprep.subr.bf16.mxu0 0
      %1881 = vmatpush2.bf16.msra.mxu0 0
      %1882 = vmatprep.subr.bf16.mxu0 0
      %1883 = vmatpush2.bf16.msra.mxu0 0
      %1884 = vmatprep.subr.bf16.mxu0 0
      %1885 = vmatpush2.bf16.msra.mxu0 0
      %1886 = vmatprep.subr.bf16.mxu0 0
      %1887 = vmatpush2.bf16.msra.mxu0 0
      %1888 = vmatprep.subr.bf16.mxu0 0
      %1889 = vmatpush2.bf16.msra.mxu0 %v1803
      %1890 = vmatprep.subr.bf16.mxu0 0
      %1891 = vmatpush2.bf16.msra.mxu0 %v1802
      %1892 = vmatprep.subr.bf16.mxu0 0
      %1893 = vmatpush2.bf16.msra.mxu0 %v1801
      %1894 = vmatprep.subr.bf16.mxu0 0
      %1895 = vmatpush2.bf16.msra.mxu0 %v1800
      %1896 = vmatprep.mubr.bf16.mxu0 %v1817
      %1897 = vmatmul.mubr.bf16.gmra.mxu0 %v1696
      %v1898 = vpop.f32.mrf.mxu0
      %v1899 = vadd.f32 0.0, %v1898
      %v1900 = vpop.f32.mrf.mxu0
      %v1901 = vpop.f32.mrf.mxu0
      %v1902 = vadd.f32 0.0, %v1901
      %v1903 = vpop.f32.mrf.mxu0
      %1904 = vmatprep.mubr.bf16.mxu0 %v1820
      %1905 = vmatmul.mubr.bf16.gmra.mxu0 %v1698
      %v1906 = vpop.f32.mrf.mxu0
      %v1907 = vadd.f32 0.0, %v1906
      %v1908 = vpop.f32.mrf.mxu0
      %v1909 = vpop.f32.mrf.mxu0
      %v1910 = vadd.f32 0.0, %v1909
      %v1911 = vpop.f32.mrf.mxu0
      %1912 = vmatprep.mubr.bf16.mxu0 %v1823
      %1913 = vmatmul.mubr.bf16.gmra.mxu0 %v1700
      %v1914 = vpop.f32.mrf.mxu0
      %v1915 = vadd.f32 0.0, %v1914
      %v1916 = vpop.f32.mrf.mxu0
      %v1917 = vpop.f32.mrf.mxu0
      %v1918 = vadd.f32 0.0, %v1917
      %v1919 = vpop.f32.mrf.mxu0
      %1920 = vmatprep.mubr.bf16.mxu0 %v1826
      %1921 = vmatmul.mubr.bf16.gmra.mxu0 %v1702
      %v1922 = vpop.f32.mrf.mxu0
      %v1923 = vadd.f32 0.0, %v1922
      %v1924 = vpop.f32.mrf.mxu0
      %v1925 = vpop.f32.mrf.mxu0
      %v1926 = vadd.f32 0.0, %v1925
      %v1927 = vpop.f32.mrf.mxu0
      %1928 = vmatprep.mubr.bf16.mxu0 %v1829
      %1929 = vmatmul.mubr.bf16.gmra.mxu0 %v1704
      %v1930 = vpop.f32.mrf.mxu0
      %v1931 = vadd.f32 0.0, %v1930
      %v1932 = vpop.f32.mrf.mxu0
      %v1933 = vpop.f32.mrf.mxu0
      %v1934 = vadd.f32 0.0, %v1933
      %v1935 = vpop.f32.mrf.mxu0
      %1936 = vmatprep.mubr.bf16.mxu0 %v1832
      %1937 = vmatmul.mubr.bf16.gmra.mxu0 %v1706
      %v1938 = vpop.f32.mrf.mxu0
      %v1939 = vadd.f32 0.0, %v1938
      %v1940 = vpop.f32.mrf.mxu0
      %v1941 = vpop.f32.mrf.mxu0
      %v1942 = vadd.f32 0.0, %v1941
      %v1943 = vpop.f32.mrf.mxu0
      %1944 = vmatprep.mubr.bf16.mxu0 %v1835
      %1945 = vmatmul.mubr.bf16.gmra.mxu0 %v1708
      %v1946 = vpop.f32.mrf.mxu0
      %v1947 = vadd.f32 0.0, %v1946
      %v1948 = vpop.f32.mrf.mxu0
      %v1949 = vpop.f32.mrf.mxu0
      %v1950 = vadd.f32 0.0, %v1949
      %v1951 = vpop.f32.mrf.mxu0
      %1952 = vmatprep.mubr.bf16.mxu0 %v1838
      %1953 = vmatmul.mubr.bf16.gmra.mxu0 %v1710
      %v1954 = vpop.f32.mrf.mxu0
      %v1955 = vadd.f32 0.0, %v1954
      %v1956 = vpop.f32.mrf.mxu0
      %v1957 = vpop.f32.mrf.mxu0
      %v1958 = vadd.f32 0.0, %v1957
      %v1959 = vpop.f32.mrf.mxu0
      %1960 = vmatprep.mubr.bf16.mxu0 %v1841
      %1961 = vmatmul.mubr.bf16.gmra.mxu0 %v1712
      %v1962 = vpop.f32.mrf.mxu0
      %v1963 = vadd.f32 0.0, %v1962
      %v1964 = vpop.f32.mrf.mxu0
      %v1965 = vpop.f32.mrf.mxu0
      %v1966 = vadd.f32 0.0, %v1965
      %v1967 = vpop.f32.mrf.mxu0
      %1968 = vmatprep.mubr.bf16.mxu0 %v1844
      %1969 = vmatmul.mubr.bf16.gmra.mxu0 %v1714
      %v1970 = vpop.f32.mrf.mxu0
      %v1971 = vadd.f32 0.0, %v1970
      %v1972 = vpop.f32.mrf.mxu0
      %v1973 = vpop.f32.mrf.mxu0
      %v1974 = vadd.f32 0.0, %v1973
      %v1975 = vpop.f32.mrf.mxu0
      %1976 = vmatprep.mubr.bf16.mxu0 %v1847
      %1977 = vmatmul.mubr.bf16.gmra.mxu0 %v1716
      %v1978 = vpop.f32.mrf.mxu0
      %v1979 = vadd.f32 0.0, %v1978
      %v1980 = vpop.f32.mrf.mxu0
      %v1981 = vpop.f32.mrf.mxu0
      %v1982 = vadd.f32 0.0, %v1981
      %v1983 = vpop.f32.mrf.mxu0
      %1984 = vmatprep.mubr.bf16.mxu0 %v1850
      %1985 = vmatmul.mubr.bf16.gmra.mxu0 %v1718
      %v1986 = vpop.f32.mrf.mxu0
      %v1987 = vadd.f32 0.0, %v1986
      %v1988 = vpop.f32.mrf.mxu0
      %v1989 = vpop.f32.mrf.mxu0
      %v1990 = vadd.f32 0.0, %v1989
      %v1991 = vpop.f32.mrf.mxu0
      %1992 = vmatprep.mubr.bf16.mxu0 %v1853
      %1993 = vmatmul.mubr.bf16.gmra.mxu0 %v1720
      %v1994 = vpop.f32.mrf.mxu0
      %v1995 = vadd.f32 0.0, %v1994
      %v1996 = vpop.f32.mrf.mxu0
      %v1997 = vpop.f32.mrf.mxu0
      %v1998 = vadd.f32 0.0, %v1997
      %v1999 = vpop.f32.mrf.mxu0
      %2000 = vmatprep.mubr.bf16.mxu0 %v1856
      %2001 = vmatmul.mubr.bf16.gmra.mxu0 %v1722
      %v2002 = vpop.f32.mrf.mxu0
      %v2003 = vadd.f32 0.0, %v2002
      %v2004 = vpop.f32.mrf.mxu0
      %v2005 = vpop.f32.mrf.mxu0
      %v2006 = vadd.f32 0.0, %v2005
      %v2007 = vpop.f32.mrf.mxu0
      %2008 = vmatprep.mubr.bf16.mxu0 %v1859
      %2009 = vmatmul.mubr.bf16.gmra.mxu0 %v1724
      %v2010 = vpop.f32.mrf.mxu0
      %v2011 = vadd.f32 0.0, %v2010
      %v2012 = vpop.f32.mrf.mxu0
      %v2013 = vpop.f32.mrf.mxu0
      %v2014 = vadd.f32 0.0, %v2013
      %v2015 = vpop.f32.mrf.mxu0
      %2016 = vmatprep.mubr.bf16.mxu0 %v1862
      %2017 = vmatmul.mubr.bf16.gmra.mxu0 %v1726
      %v2018 = vpop.f32.mrf.mxu0
      %v2019 = vadd.f32 0.0, %v2018
      %v2020 = vpop.f32.mrf.mxu0
      %v2021 = vpop.f32.mrf.mxu0
      %v2022 = vadd.f32 0.0, %v2021
      %v2023 = vpop.f32.mrf.mxu0
      %2024 = vdwg.mxu0
      %v2027 = vunpack.c.l.b16 %v1517
      %v2028 = vunpack.c.h.b16 %v1517
      %v2029 = vunpack.c.l.b16 %v1518
      %v2030 = vunpack.c.h.b16 %v1518
      %v2031 = vpack.c.b16 %v2029, %v2027
      %v2032 = vpack.c.b16 %v2030, %v2028
      %v2058 = vunpack.c.l.b16 %v1549
      %v2059 = vunpack.c.l.b16 %v1550
      %v2060 = vunpack.c.l.b16 %v1551
      %v2061 = vunpack.c.l.b16 %v1552
      %v2062 = vunpack.c.l.b16 %v1553
      %v2063 = vunpack.c.l.b16 %v1554
      %v2064 = vunpack.c.l.b16 %v1555
      %v2065 = vunpack.c.l.b16 %v1556
      %v2066 = vunpack.c.l.b16 %v1557
      %v2067 = vunpack.c.l.b16 %v1558
      %v2068 = vunpack.c.l.b16 %v1559
      %v2069 = vunpack.c.l.b16 %v1560
      %v2070 = vunpack.c.l.b16 %v1561
      %v2071 = vunpack.c.l.b16 %v1562
      %v2072 = vunpack.c.l.b16 %v1563
      %v2073 = vunpack.c.l.b16 %v1564
      %v2074 = vunpack.c.l.b16 %v1565
      %v2075 = vunpack.c.l.b16 %v1566
      %v2076 = vunpack.c.l.b16 %v1567
      %v2077 = vunpack.c.l.b16 %v1568
      %v2078 = vunpack.c.l.b16 %v1569
      %v2079 = vunpack.c.l.b16 %v1570
      %v2080 = vunpack.c.l.b16 %v1571
      %v2081 = vunpack.c.l.b16 %v1572
      %v2082 = vpack.c.b16 %v2059, %v2058
      %v2083 = vpack.c.b16 %v2061, %v2060
      %v2084 = vpack.c.b16 %v2063, %v2062
      %v2085 = vpack.c.b16 %v2065, %v2064
      %v2086 = vpack.c.b16 %v2067, %v2066
      %v2087 = vpack.c.b16 %v2069, %v2068
      %v2088 = vpack.c.b16 %v2071, %v2070
      %v2089 = vpack.c.b16 %v2073, %v2072
      %v2090 = vpack.c.b16 %v2075, %v2074
      %v2091 = vpack.c.b16 %v2077, %v2076
      %v2092 = vpack.c.b16 %v2079, %v2078
      %v2093 = vpack.c.b16 %v2081, %v2080
      %v2107 = vsel %vm1260, %v2032, 0
      %2109 = vmatprep.subr.bf16.mxu0 0
      %2110 = vmatpush1.bf16.msra.mxu0 %v2089
      %2111 = vmatprep.subr.bf16.mxu0 0
      %2112 = vmatpush1.bf16.msra.mxu0 %v2088
      %2113 = vmatprep.subr.bf16.mxu0 0
      %2114 = vmatpush1.bf16.msra.mxu0 %v2087
      %2115 = vmatprep.subr.bf16.mxu0 0
      %2116 = vmatpush1.bf16.msra.mxu0 %v2086
      %2117 = vmatprep.subr.bf16.mxu0 0
      %2118 = vmatpush1.bf16.msra.mxu0 %v2085
      %2119 = vmatprep.subr.bf16.mxu0 0
      %2120 = vmatpush1.bf16.msra.mxu0 %v2084
      %2121 = vmatprep.subr.bf16.mxu0 0
      %2122 = vmatpush1.bf16.msra.mxu0 %v2083
      %2123 = vmatprep.subr.bf16.mxu0 0
      %2124 = vmatpush1.bf16.msra.mxu0 %v2082
      %2125 = vmatprep.subr.bf16.mxu0 0
      %2126 = vmatpush2.bf16.msra.mxu0 0
      %2127 = vmatprep.subr.bf16.mxu0 0
      %2128 = vmatpush2.bf16.msra.mxu0 0
      %2129 = vmatprep.subr.bf16.mxu0 0
      %2130 = vmatpush2.bf16.msra.mxu0 0
      %2131 = vmatprep.subr.bf16.mxu0 0
      %2132 = vmatpush2.bf16.msra.mxu0 0
      %2133 = vmatprep.subr.bf16.mxu0 0
      %2134 = vmatpush2.bf16.msra.mxu0 %v2093
      %2135 = vmatprep.subr.bf16.mxu0 0
      %2136 = vmatpush2.bf16.msra.mxu0 %v2092
      %2137 = vmatprep.subr.bf16.mxu0 0
      %2138 = vmatpush2.bf16.msra.mxu0 %v2091
      %2139 = vmatprep.subr.bf16.mxu0 0
      %2140 = vmatpush2.bf16.msra.mxu0 %v2090
      %2141 = vmatprep.mubr.bf16.mxu0 %v2107
      %2142 = vmatmul.mubr.bf16.gmra.mxu0 %v2031
      %v2143 = vpop.f32.mrf.mxu0
      %v2144 = vadd.f32 %v1899, %v2143
      %v2145 = vpop.f32.mrf.mxu0
      %v2146 = vpop.f32.mrf.mxu0
      %v2147 = vadd.f32 %v1902, %v2146
      %v2148 = vpop.f32.mrf.mxu0
      %2149 = vmatprep.mubr.bf16.mxu0 %v1817
      %2150 = vmatmul.mubr.bf16.gmra.mxu0 %v1696
      %v2151 = vpop.f32.mrf.mxu0
      %v2152 = vadd.f32 %v1907, %v2151
      %v2153 = vpop.f32.mrf.mxu0
      %v2154 = vpop.f32.mrf.mxu0
      %v2155 = vadd.f32 %v1910, %v2154
      %v2156 = vpop.f32.mrf.mxu0
      %2157 = vmatprep.mubr.bf16.mxu0 %v1820
      %2158 = vmatmul.mubr.bf16.gmra.mxu0 %v1698
      %v2159 = vpop.f32.mrf.mxu0
      %v2160 = vadd.f32 %v1915, %v2159
      %v2161 = vpop.f32.mrf.mxu0
      %v2162 = vpop.f32.mrf.mxu0
      %v2163 = vadd.f32 %v1918, %v2162
      %v2164 = vpop.f32.mrf.mxu0
      %2165 = vmatprep.mubr.bf16.mxu0 %v1823
      %2166 = vmatmul.mubr.bf16.gmra.mxu0 %v1700
      %v2167 = vpop.f32.mrf.mxu0
      %v2168 = vadd.f32 %v1923, %v2167
      %v2169 = vpop.f32.mrf.mxu0
      %v2170 = vpop.f32.mrf.mxu0
      %v2171 = vadd.f32 %v1926, %v2170
      %v2172 = vpop.f32.mrf.mxu0
      %2173 = vmatprep.mubr.bf16.mxu0 %v1826
      %2174 = vmatmul.mubr.bf16.gmra.mxu0 %v1702
      %v2175 = vpop.f32.mrf.mxu0
      %v2176 = vadd.f32 %v1931, %v2175
      %v2177 = vpop.f32.mrf.mxu0
      %v2178 = vpop.f32.mrf.mxu0
      %v2179 = vadd.f32 %v1934, %v2178
      %v2180 = vpop.f32.mrf.mxu0
      %2181 = vmatprep.mubr.bf16.mxu0 %v1829
      %2182 = vmatmul.mubr.bf16.gmra.mxu0 %v1704
      %v2183 = vpop.f32.mrf.mxu0
      %v2184 = vadd.f32 %v1939, %v2183
      %v2185 = vpop.f32.mrf.mxu0
      %v2186 = vpop.f32.mrf.mxu0
      %v2187 = vadd.f32 %v1942, %v2186
      %v2188 = vpop.f32.mrf.mxu0
      %2189 = vmatprep.mubr.bf16.mxu0 %v1832
      %2190 = vmatmul.mubr.bf16.gmra.mxu0 %v1706
      %v2191 = vpop.f32.mrf.mxu0
      %v2192 = vadd.f32 %v1947, %v2191
      %v2193 = vpop.f32.mrf.mxu0
      %v2194 = vpop.f32.mrf.mxu0
      %v2195 = vadd.f32 %v1950, %v2194
      %v2196 = vpop.f32.mrf.mxu0
      %2197 = vmatprep.mubr.bf16.mxu0 %v1835
      %2198 = vmatmul.mubr.bf16.gmra.mxu0 %v1708
      %v2199 = vpop.f32.mrf.mxu0
      %v2200 = vadd.f32 %v1955, %v2199
      %v2201 = vpop.f32.mrf.mxu0
      %v2202 = vpop.f32.mrf.mxu0
      %v2203 = vadd.f32 %v1958, %v2202
      %v2204 = vpop.f32.mrf.mxu0
      %2205 = vmatprep.mubr.bf16.mxu0 %v1838
      %2206 = vmatmul.mubr.bf16.gmra.mxu0 %v1710
      %v2207 = vpop.f32.mrf.mxu0
      %v2208 = vadd.f32 %v1963, %v2207
      %v2209 = vpop.f32.mrf.mxu0
      %v2210 = vpop.f32.mrf.mxu0
      %v2211 = vadd.f32 %v1966, %v2210
      %v2212 = vpop.f32.mrf.mxu0
      %2213 = vmatprep.mubr.bf16.mxu0 %v1841
      %2214 = vmatmul.mubr.bf16.gmra.mxu0 %v1712
      %v2215 = vpop.f32.mrf.mxu0
      %v2216 = vadd.f32 %v1971, %v2215
      %v2217 = vpop.f32.mrf.mxu0
      %v2218 = vpop.f32.mrf.mxu0
      %v2219 = vadd.f32 %v1974, %v2218
      %v2220 = vpop.f32.mrf.mxu0
      %2221 = vmatprep.mubr.bf16.mxu0 %v1844
      %2222 = vmatmul.mubr.bf16.gmra.mxu0 %v1714
      %v2223 = vpop.f32.mrf.mxu0
      %v2224 = vadd.f32 %v1979, %v2223
      %v2225 = vpop.f32.mrf.mxu0
      %v2226 = vpop.f32.mrf.mxu0
      %v2227 = vadd.f32 %v1982, %v2226
      %v2228 = vpop.f32.mrf.mxu0
      %2229 = vmatprep.mubr.bf16.mxu0 %v1847
      %2230 = vmatmul.mubr.bf16.gmra.mxu0 %v1716
      %v2231 = vpop.f32.mrf.mxu0
      %v2232 = vadd.f32 %v1987, %v2231
      %v2233 = vpop.f32.mrf.mxu0
      %v2234 = vpop.f32.mrf.mxu0
      %v2235 = vadd.f32 %v1990, %v2234
      %v2236 = vpop.f32.mrf.mxu0
      %2237 = vmatprep.mubr.bf16.mxu0 %v1850
      %2238 = vmatmul.mubr.bf16.gmra.mxu0 %v1718
      %v2239 = vpop.f32.mrf.mxu0
      %v2240 = vadd.f32 %v1995, %v2239
      %v2241 = vpop.f32.mrf.mxu0
      %v2242 = vpop.f32.mrf.mxu0
      %v2243 = vadd.f32 %v1998, %v2242
      %v2244 = vpop.f32.mrf.mxu0
      %2245 = vmatprep.mubr.bf16.mxu0 %v1853
      %2246 = vmatmul.mubr.bf16.gmra.mxu0 %v1720
      %v2247 = vpop.f32.mrf.mxu0
      %v2248 = vadd.f32 %v2003, %v2247
      %v2249 = vpop.f32.mrf.mxu0
      %v2250 = vpop.f32.mrf.mxu0
      %v2251 = vadd.f32 %v2006, %v2250
      %v2252 = vpop.f32.mrf.mxu0
      %2253 = vmatprep.mubr.bf16.mxu0 %v1856
      %2254 = vmatmul.mubr.bf16.gmra.mxu0 %v1722
      %v2255 = vpop.f32.mrf.mxu0
      %v2256 = vadd.f32 %v2011, %v2255
      %v2257 = vpop.f32.mrf.mxu0
      %v2258 = vpop.f32.mrf.mxu0
      %v2259 = vadd.f32 %v2014, %v2258
      %v2260 = vpop.f32.mrf.mxu0
      %2261 = vmatprep.mubr.bf16.mxu0 %v1859
      %2262 = vmatmul.mubr.bf16.gmra.mxu0 %v1724
      %v2263 = vpop.f32.mrf.mxu0
      %v2264 = vadd.f32 %v2019, %v2263
      %v2265 = vpop.f32.mrf.mxu0
      %v2266 = vpop.f32.mrf.mxu0
      %v2267 = vadd.f32 %v2022, %v2266
      %v2268 = vpop.f32.mrf.mxu0
      %2269 = vdwg.mxu0
      %v2270 = vld [vmem:[#allocation2 + $0x20] sm:$0xff]
      %v2271 = vld [vmem:[#allocation2 + $0x28] sm:$0xff]
      %v2272 = vld [vmem:[#allocation2 + $0x30] sm:$0xff]
      %v2273 = vld [vmem:[#allocation2 + $0x38] sm:$0xff]
      %v2274 = vld [vmem:[#allocation2 + $0x40] sm:$0xff]
      %v2275 = vld [vmem:[#allocation2 + $0x48] sm:$0xff]
      %v2276 = vld [vmem:[#allocation2 + $0x50] sm:$0xff]
      %v2277 = vld [vmem:[#allocation2 + $0x58] sm:$0xff]
      %v2278 = vld [vmem:[#allocation2 + $0x60] sm:$0xff]
      %v2279 = vld [vmem:[#allocation2 + $0x68] sm:$0xff]
      %v2280 = vld [vmem:[#allocation2 + $0x70] sm:$0xff]
      %v2281 = vld [vmem:[#allocation2 + $0x78] sm:$0xff]
      %v2282 = vld [vmem:[#allocation2 + $0x80] sm:$0xff]
      %v2283 = vld [vmem:[#allocation2 + $0x88] sm:$0xff]
      %v2284 = vld [vmem:[#allocation2 + $0x90] sm:$0xff]
      %v2285 = vld [vmem:[#allocation2 + $0x98] sm:$0xff]
      %v2286 = vld [vmem:[#allocation2 + $0xa0] sm:$0xff]
      %v2287 = vld [vmem:[#allocation2 + $0xa8] sm:$0xff]
      %v2288 = vld [vmem:[#allocation2 + $0xb0] sm:$0xff]
      %v2289 = vld [vmem:[#allocation2 + $0xb8] sm:$0xff]
      %v2290 = vld [vmem:[#allocation2 + $0xc0] sm:$0xff]
      %v2291 = vld [vmem:[#allocation2 + $0xc8] sm:$0xff]
      %v2292 = vld [vmem:[#allocation2 + $0xd0] sm:$0xff]
      %v2293 = vld [vmem:[#allocation2 + $0xd8] sm:$0xff]
      %v2294 = vld [vmem:[#allocation2 + $0xe0] sm:$0xff]
      %v2295 = vld [vmem:[#allocation2 + $0xe8] sm:$0xff]
      %v2296 = vld [vmem:[#allocation2 + $0xf0] sm:$0xff]
      %v2297 = vld [vmem:[#allocation2 + $0xf8] sm:$0xff]
      %v2298 = vld [vmem:[#allocation2 + $0x100] sm:$0xff]
      %v2299 = vld [vmem:[#allocation2 + $0x108] sm:$0xff]
      %v2300 = vld [vmem:[#allocation2 + $0x110] sm:$0xff]
      %v2301 = vld [vmem:[#allocation2 + $0x118] sm:$0xff]
      %s2302 = scalar_lea.vmem %s1, 192
      %v2303 = vld [vmem:[%s2302] sm:$0xf]
      %v2304 = vld [vmem:[%s2302 + $0x4] sm:$0xf]
      %v2305 = vld [vmem:[%s2302 + $0x8] sm:$0xf]
      %v2306 = vld [vmem:[%s2302 + $0xc] sm:$0xf]
      %v2307 = vld [vmem:[%s2302 + $0x10] sm:$0xf]
      %v2308 = vld [vmem:[%s2302 + $0x14] sm:$0xf]
      %v2309 = vld [vmem:[%s2302 + $0x18] sm:$0xf]
      %v2310 = vld [vmem:[%s2302 + $0x1c] sm:$0xf]
      %v2311 = vld [vmem:[%s2302 + $0x20] sm:$0xf]
      %v2312 = vld [vmem:[%s2302 + $0x24] sm:$0xf]
      %v2313 = vld [vmem:[%s2302 + $0x28] sm:$0xf]
      %v2314 = vld [vmem:[%s2302 + $0x2c] sm:$0xf]
      %v2315 = vld [vmem:[%s2302 + $0x30] sm:$0xf]
      %v2316 = vld [vmem:[%s2302 + $0x34] sm:$0xf]
      %v2317 = vld [vmem:[%s2302 + $0x38] sm:$0xf]
      %v2318 = vld [vmem:[%s2302 + $0x3c] sm:$0xf]
      %v2319 = vld [vmem:[%s2302 + $0x40] sm:$0xf]
      %v2320 = vld [vmem:[%s2302 + $0x44] sm:$0xf]
      %v2321 = vld [vmem:[%s2302 + $0x48] sm:$0xf]
      %v2322 = vld [vmem:[%s2302 + $0x4c] sm:$0xf]
      %v2323 = vld [vmem:[%s2302 + $0x50] sm:$0xf]
      %v2324 = vld [vmem:[%s2302 + $0x54] sm:$0xf]
      %v2325 = vld [vmem:[%s2302 + $0x58] sm:$0xf]
      %v2326 = vld [vmem:[%s2302 + $0x5c] sm:$0xf]
      %v2359 = vunpack.c.l.b16 %v2270
      %v2360 = vunpack.c.h.b16 %v2270
      %v2361 = vunpack.c.l.b16 %v2271
      %v2362 = vunpack.c.h.b16 %v2271
      %v2363 = vunpack.c.l.b16 %v2272
      %v2364 = vunpack.c.h.b16 %v2272
      %v2365 = vunpack.c.l.b16 %v2273
      %v2366 = vunpack.c.h.b16 %v2273
      %v2367 = vunpack.c.l.b16 %v2274
      %v2368 = vunpack.c.h.b16 %v2274
      %v2369 = vunpack.c.l.b16 %v2275
      %v2370 = vunpack.c.h.b16 %v2275
      %v2371 = vunpack.c.l.b16 %v2276
      %v2372 = vunpack.c.h.b16 %v2276
      %v2373 = vunpack.c.l.b16 %v2277
      %v2374 = vunpack.c.h.b16 %v2277
      %v2375 = vunpack.c.l.b16 %v2278
      %v2376 = vunpack.c.h.b16 %v2278
      %v2377 = vunpack.c.l.b16 %v2279
      %v2378 = vunpack.c.h.b16 %v2279
      %v2379 = vunpack.c.l.b16 %v2280
      %v2380 = vunpack.c.h.b16 %v2280
      %v2381 = vunpack.c.l.b16 %v2281
      %v2382 = vunpack.c.h.b16 %v2281
      %v2383 = vunpack.c.l.b16 %v2282
      %v2384 = vunpack.c.h.b16 %v2282
      %v2385 = vunpack.c.l.b16 %v2283
      %v2386 = vunpack.c.h.b16 %v2283
      %v2387 = vunpack.c.l.b16 %v2284
      %v2388 = vunpack.c.h.b16 %v2284
      %v2389 = vunpack.c.l.b16 %v2285
      %v2390 = vunpack.c.h.b16 %v2285
      %v2391 = vunpack.c.l.b16 %v2286
      %v2392 = vunpack.c.h.b16 %v2286
      %v2393 = vunpack.c.l.b16 %v2287
      %v2394 = vunpack.c.h.b16 %v2287
      %v2395 = vunpack.c.l.b16 %v2288
      %v2396 = vunpack.c.h.b16 %v2288
      %v2397 = vunpack.c.l.b16 %v2289
      %v2398 = vunpack.c.h.b16 %v2289
      %v2399 = vunpack.c.l.b16 %v2290
      %v2400 = vunpack.c.h.b16 %v2290
      %v2401 = vunpack.c.l.b16 %v2291
      %v2402 = vunpack.c.h.b16 %v2291
      %v2403 = vunpack.c.l.b16 %v2292
      %v2404 = vunpack.c.h.b16 %v2292
      %v2405 = vunpack.c.l.b16 %v2293
      %v2406 = vunpack.c.h.b16 %v2293
      %v2407 = vunpack.c.l.b16 %v2294
      %v2408 = vunpack.c.h.b16 %v2294
      %v2409 = vunpack.c.l.b16 %v2295
      %v2410 = vunpack.c.h.b16 %v2295
      %v2411 = vunpack.c.l.b16 %v2296
      %v2412 = vunpack.c.h.b16 %v2296
      %v2413 = vunpack.c.l.b16 %v2297
      %v2414 = vunpack.c.h.b16 %v2297
      %v2415 = vunpack.c.l.b16 %v2298
      %v2416 = vunpack.c.h.b16 %v2298
      %v2417 = vunpack.c.l.b16 %v2299
      %v2418 = vunpack.c.h.b16 %v2299
      %v2419 = vunpack.c.l.b16 %v2300
      %v2420 = vunpack.c.h.b16 %v2300
      %v2421 = vunpack.c.l.b16 %v2301
      %v2422 = vunpack.c.h.b16 %v2301
      %v2423 = vpack.c.b16 %v2361, %v2359
      %v2424 = vpack.c.b16 %v2362, %v2360
      %v2425 = vpack.c.b16 %v2365, %v2363
      %v2426 = vpack.c.b16 %v2366, %v2364
      %v2427 = vpack.c.b16 %v2369, %v2367
      %v2428 = vpack.c.b16 %v2370, %v2368
      %v2429 = vpack.c.b16 %v2373, %v2371
      %v2430 = vpack.c.b16 %v2374, %v2372
      %v2431 = vpack.c.b16 %v2377, %v2375
      %v2432 = vpack.c.b16 %v2378, %v2376
      %v2433 = vpack.c.b16 %v2381, %v2379
      %v2434 = vpack.c.b16 %v2382, %v2380
      %v2435 = vpack.c.b16 %v2385, %v2383
      %v2436 = vpack.c.b16 %v2386, %v2384
      %v2437 = vpack.c.b16 %v2389, %v2387
      %v2438 = vpack.c.b16 %v2390, %v2388
      %v2439 = vpack.c.b16 %v2393, %v2391
      %v2440 = vpack.c.b16 %v2394, %v2392
      %v2441 = vpack.c.b16 %v2397, %v2395
      %v2442 = vpack.c.b16 %v2398, %v2396
      %v2443 = vpack.c.b16 %v2401, %v2399
      %v2444 = vpack.c.b16 %v2402, %v2400
      %v2445 = vpack.c.b16 %v2405, %v2403
      %v2446 = vpack.c.b16 %v2406, %v2404
      %v2447 = vpack.c.b16 %v2409, %v2407
      %v2448 = vpack.c.b16 %v2410, %v2408
      %v2449 = vpack.c.b16 %v2413, %v2411
      %v2450 = vpack.c.b16 %v2414, %v2412
      %v2451 = vpack.c.b16 %v2417, %v2415
      %v2452 = vpack.c.b16 %v2418, %v2416
      %v2453 = vpack.c.b16 %v2421, %v2419
      %v2454 = vpack.c.b16 %v2422, %v2420
      %v2495 = vunpack.c.l.b16 %v2303
      %v2496 = vunpack.c.l.b16 %v2304
      %v2497 = vunpack.c.l.b16 %v2305
      %v2498 = vunpack.c.l.b16 %v2306
      %v2499 = vunpack.c.l.b16 %v2307
      %v2500 = vunpack.c.l.b16 %v2308
      %v2501 = vunpack.c.l.b16 %v2309
      %v2502 = vunpack.c.l.b16 %v2310
      %v2503 = vunpack.c.l.b16 %v2311
      %v2504 = vunpack.c.l.b16 %v2312
      %v2505 = vunpack.c.l.b16 %v2313
      %v2506 = vunpack.c.l.b16 %v2314
      %v2507 = vunpack.c.l.b16 %v2315
      %v2508 = vunpack.c.l.b16 %v2316
      %v2509 = vunpack.c.l.b16 %v2317
      %v2510 = vunpack.c.l.b16 %v2318
      %v2511 = vunpack.c.l.b16 %v2319
      %v2512 = vunpack.c.l.b16 %v2320
      %v2513 = vunpack.c.l.b16 %v2321
      %v2514 = vunpack.c.l.b16 %v2322
      %v2515 = vunpack.c.l.b16 %v2323
      %v2516 = vunpack.c.l.b16 %v2324
      %v2517 = vunpack.c.l.b16 %v2325
      %v2518 = vunpack.c.l.b16 %v2326
      %v2519 = vpack.c.b16 %v2496, %v2495
      %v2520 = vpack.c.b16 %v2498, %v2497
      %v2521 = vpack.c.b16 %v2500, %v2499
      %v2522 = vpack.c.b16 %v2502, %v2501
      %v2523 = vpack.c.b16 %v2504, %v2503
      %v2524 = vpack.c.b16 %v2506, %v2505
      %v2525 = vpack.c.b16 %v2508, %v2507
      %v2526 = vpack.c.b16 %v2510, %v2509
      %v2527 = vpack.c.b16 %v2512, %v2511
      %v2528 = vpack.c.b16 %v2514, %v2513
      %v2529 = vpack.c.b16 %v2516, %v2515
      %v2530 = vpack.c.b16 %v2518, %v2517
      %v2544 = vsel %vm1260, %v2424, 0
      %v2547 = vsel %vm1260, %v2426, 0
      %v2550 = vsel %vm1260, %v2428, 0
      %v2553 = vsel %vm1260, %v2430, 0
      %v2556 = vsel %vm1260, %v2432, 0
      %v2559 = vsel %vm1260, %v2434, 0
      %v2562 = vsel %vm1260, %v2436, 0
      %v2565 = vsel %vm1260, %v2438, 0
      %v2568 = vsel %vm1260, %v2440, 0
      %v2571 = vsel %vm1260, %v2442, 0
      %v2574 = vsel %vm1260, %v2444, 0
      %v2577 = vsel %vm1260, %v2446, 0
      %v2580 = vsel %vm1260, %v2448, 0
      %v2583 = vsel %vm1260, %v2450, 0
      %v2586 = vsel %vm1260, %v2452, 0
      %v2589 = vsel %vm1260, %v2454, 0
      %2591 = vmatprep.subr.bf16.mxu0 0
      %2592 = vmatpush1.bf16.msra.mxu0 %v2526
      %2593 = vmatprep.subr.bf16.mxu0 0
      %2594 = vmatpush1.bf16.msra.mxu0 %v2525
      %2595 = vmatprep.subr.bf16.mxu0 0
      %2596 = vmatpush1.bf16.msra.mxu0 %v2524
      %2597 = vmatprep.subr.bf16.mxu0 0
      %2598 = vmatpush1.bf16.msra.mxu0 %v2523
      %2599 = vmatprep.subr.bf16.mxu0 0
      %2600 = vmatpush1.bf16.msra.mxu0 %v2522
      %2601 = vmatprep.subr.bf16.mxu0 0
      %2602 = vmatpush1.bf16.msra.mxu0 %v2521
      %2603 = vmatprep.subr.bf16.mxu0 0
      %2604 = vmatpush1.bf16.msra.mxu0 %v2520
      %2605 = vmatprep.subr.bf16.mxu0 0
      %2606 = vmatpush1.bf16.msra.mxu0 %v2519
      %2607 = vmatprep.subr.bf16.mxu0 0
      %2608 = vmatpush2.bf16.msra.mxu0 0
      %2609 = vmatprep.subr.bf16.mxu0 0
      %2610 = vmatpush2.bf16.msra.mxu0 0
      %2611 = vmatprep.subr.bf16.mxu0 0
      %2612 = vmatpush2.bf16.msra.mxu0 0
      %2613 = vmatprep.subr.bf16.mxu0 0
      %2614 = vmatpush2.bf16.msra.mxu0 0
      %2615 = vmatprep.subr.bf16.mxu0 0
      %2616 = vmatpush2.bf16.msra.mxu0 %v2530
      %2617 = vmatprep.subr.bf16.mxu0 0
      %2618 = vmatpush2.bf16.msra.mxu0 %v2529
      %2619 = vmatprep.subr.bf16.mxu0 0
      %2620 = vmatpush2.bf16.msra.mxu0 %v2528
      %2621 = vmatprep.subr.bf16.mxu0 0
      %2622 = vmatpush2.bf16.msra.mxu0 %v2527
      %2623 = vmatprep.mubr.bf16.mxu0 %v2544
      %2624 = vmatmul.mubr.bf16.gmra.mxu0 %v2423
      %v2625 = vpop.f32.mrf.mxu0
      %v2626 = vadd.f32 0.0, %v2625
      %v2627 = vpop.f32.mrf.mxu0
      %v2628 = vpop.f32.mrf.mxu0
      %v2629 = vadd.f32 0.0, %v2628
      %v2630 = vpop.f32.mrf.mxu0
      %2631 = vmatprep.mubr.bf16.mxu0 %v2547
      %2632 = vmatmul.mubr.bf16.gmra.mxu0 %v2425
      %v2633 = vpop.f32.mrf.mxu0
      %v2634 = vadd.f32 0.0, %v2633
      %v2635 = vpop.f32.mrf.mxu0
      %v2636 = vpop.f32.mrf.mxu0
      %v2637 = vadd.f32 0.0, %v2636
      %v2638 = vpop.f32.mrf.mxu0
      %2639 = vmatprep.mubr.bf16.mxu0 %v2550
      %2640 = vmatmul.mubr.bf16.gmra.mxu0 %v2427
      %v2641 = vpop.f32.mrf.mxu0
      %v2642 = vadd.f32 0.0, %v2641
      %v2643 = vpop.f32.mrf.mxu0
      %v2644 = vpop.f32.mrf.mxu0
      %v2645 = vadd.f32 0.0, %v2644
      %v2646 = vpop.f32.mrf.mxu0
      %2647 = vmatprep.mubr.bf16.mxu0 %v2553
      %2648 = vmatmul.mubr.bf16.gmra.mxu0 %v2429
      %v2649 = vpop.f32.mrf.mxu0
      %v2650 = vadd.f32 0.0, %v2649
      %v2651 = vpop.f32.mrf.mxu0
      %v2652 = vpop.f32.mrf.mxu0
      %v2653 = vadd.f32 0.0, %v2652
      %v2654 = vpop.f32.mrf.mxu0
      %2655 = vmatprep.mubr.bf16.mxu0 %v2556
      %2656 = vmatmul.mubr.bf16.gmra.mxu0 %v2431
      %v2657 = vpop.f32.mrf.mxu0
      %v2658 = vadd.f32 0.0, %v2657
      %v2659 = vpop.f32.mrf.mxu0
      %v2660 = vpop.f32.mrf.mxu0
      %v2661 = vadd.f32 0.0, %v2660
      %v2662 = vpop.f32.mrf.mxu0
      %2663 = vmatprep.mubr.bf16.mxu0 %v2559
      %2664 = vmatmul.mubr.bf16.gmra.mxu0 %v2433
      %v2665 = vpop.f32.mrf.mxu0
      %v2666 = vadd.f32 0.0, %v2665
      %v2667 = vpop.f32.mrf.mxu0
      %v2668 = vpop.f32.mrf.mxu0
      %v2669 = vadd.f32 0.0, %v2668
      %v2670 = vpop.f32.mrf.mxu0
      %2671 = vmatprep.mubr.bf16.mxu0 %v2562
      %2672 = vmatmul.mubr.bf16.gmra.mxu0 %v2435
      %v2673 = vpop.f32.mrf.mxu0
      %v2674 = vadd.f32 0.0, %v2673
      %v2675 = vpop.f32.mrf.mxu0
      %v2676 = vpop.f32.mrf.mxu0
      %v2677 = vadd.f32 0.0, %v2676
      %v2678 = vpop.f32.mrf.mxu0
      %2679 = vmatprep.mubr.bf16.mxu0 %v2565
      %2680 = vmatmul.mubr.bf16.gmra.mxu0 %v2437
      %v2681 = vpop.f32.mrf.mxu0
      %v2682 = vadd.f32 0.0, %v2681
      %v2683 = vpop.f32.mrf.mxu0
      %v2684 = vpop.f32.mrf.mxu0
      %v2685 = vadd.f32 0.0, %v2684
      %v2686 = vpop.f32.mrf.mxu0
      %2687 = vmatprep.mubr.bf16.mxu0 %v2568
      %2688 = vmatmul.mubr.bf16.gmra.mxu0 %v2439
      %v2689 = vpop.f32.mrf.mxu0
      %v2690 = vadd.f32 0.0, %v2689
      %v2691 = vpop.f32.mrf.mxu0
      %v2692 = vpop.f32.mrf.mxu0
      %v2693 = vadd.f32 0.0, %v2692
      %v2694 = vpop.f32.mrf.mxu0
      %2695 = vmatprep.mubr.bf16.mxu0 %v2571
      %2696 = vmatmul.mubr.bf16.gmra.mxu0 %v2441
      %v2697 = vpop.f32.mrf.mxu0
      %v2698 = vadd.f32 0.0, %v2697
      %v2699 = vpop.f32.mrf.mxu0
      %v2700 = vpop.f32.mrf.mxu0
      %v2701 = vadd.f32 0.0, %v2700
      %v2702 = vpop.f32.mrf.mxu0
      %2703 = vmatprep.mubr.bf16.mxu0 %v2574
      %2704 = vmatmul.mubr.bf16.gmra.mxu0 %v2443
      %v2705 = vpop.f32.mrf.mxu0
      %v2706 = vadd.f32 0.0, %v2705
      %v2707 = vpop.f32.mrf.mxu0
      %v2708 = vpop.f32.mrf.mxu0
      %v2709 = vadd.f32 0.0, %v2708
      %v2710 = vpop.f32.mrf.mxu0
      %2711 = vmatprep.mubr.bf16.mxu0 %v2577
      %2712 = vmatmul.mubr.bf16.gmra.mxu0 %v2445
      %v2713 = vpop.f32.mrf.mxu0
      %v2714 = vadd.f32 0.0, %v2713
      %v2715 = vpop.f32.mrf.mxu0
      %v2716 = vpop.f32.mrf.mxu0
      %v2717 = vadd.f32 0.0, %v2716
      %v2718 = vpop.f32.mrf.mxu0
      %2719 = vmatprep.mubr.bf16.mxu0 %v2580
      %2720 = vmatmul.mubr.bf16.gmra.mxu0 %v2447
      %v2721 = vpop.f32.mrf.mxu0
      %v2722 = vadd.f32 0.0, %v2721
      %v2723 = vpop.f32.mrf.mxu0
      %v2724 = vpop.f32.mrf.mxu0
      %v2725 = vadd.f32 0.0, %v2724
      %v2726 = vpop.f32.mrf.mxu0
      %2727 = vmatprep.mubr.bf16.mxu0 %v2583
      %2728 = vmatmul.mubr.bf16.gmra.mxu0 %v2449
      %v2729 = vpop.f32.mrf.mxu0
      %v2730 = vadd.f32 0.0, %v2729
      %v2731 = vpop.f32.mrf.mxu0
      %v2732 = vpop.f32.mrf.mxu0
      %v2733 = vadd.f32 0.0, %v2732
      %v2734 = vpop.f32.mrf.mxu0
      %2735 = vmatprep.mubr.bf16.mxu0 %v2586
      %2736 = vmatmul.mubr.bf16.gmra.mxu0 %v2451
      %v2737 = vpop.f32.mrf.mxu0
      %v2738 = vadd.f32 0.0, %v2737
      %v2739 = vpop.f32.mrf.mxu0
      %v2740 = vpop.f32.mrf.mxu0
      %v2741 = vadd.f32 0.0, %v2740
      %v2742 = vpop.f32.mrf.mxu0
      %2743 = vmatprep.mubr.bf16.mxu0 %v2589
      %2744 = vmatmul.mubr.bf16.gmra.mxu0 %v2453
      %v2745 = vpop.f32.mrf.mxu0
      %v2746 = vadd.f32 0.0, %v2745
      %v2747 = vpop.f32.mrf.mxu0
      %v2748 = vpop.f32.mrf.mxu0
      %v2749 = vadd.f32 0.0, %v2748
      %v2750 = vpop.f32.mrf.mxu0
      %2751 = vdwg.mxu0
      %v2752 = vadd.f32 %v2144, %v2626
      %v2753 = vadd.f32 %v2147, %v2629
      %v2754 = vadd.f32 %v2152, %v2634
      %v2755 = vadd.f32 %v2155, %v2637
      %v2756 = vadd.f32 %v2160, %v2642
      %v2757 = vadd.f32 %v2163, %v2645
      %v2758 = vadd.f32 %v2168, %v2650
      %v2759 = vadd.f32 %v2171, %v2653
      %v2760 = vadd.f32 %v2176, %v2658
      %v2761 = vadd.f32 %v2179, %v2661
      %v2762 = vadd.f32 %v2184, %v2666
      %v2763 = vadd.f32 %v2187, %v2669
      %v2764 = vadd.f32 %v2192, %v2674
      %v2765 = vadd.f32 %v2195, %v2677
      %v2766 = vadd.f32 %v2200, %v2682
      %v2767 = vadd.f32 %v2203, %v2685
      %v2768 = vadd.f32 %v2208, %v2690
      %v2769 = vadd.f32 %v2211, %v2693
      %v2770 = vadd.f32 %v2216, %v2698
      %v2771 = vadd.f32 %v2219, %v2701
      %v2772 = vadd.f32 %v2224, %v2706
      %v2773 = vadd.f32 %v2227, %v2709
      %v2774 = vadd.f32 %v2232, %v2714
      %v2775 = vadd.f32 %v2235, %v2717
      %v2776 = vadd.f32 %v2240, %v2722
      %v2777 = vadd.f32 %v2243, %v2725
      %v2778 = vadd.f32 %v2248, %v2730
      %v2779 = vadd.f32 %v2251, %v2733
      %v2780 = vadd.f32 %v2256, %v2738
      %v2781 = vadd.f32 %v2259, %v2741
      %v2782 = vadd.f32 %v2264, %v2746
      %v2783 = vadd.f32 %v2267, %v2749
      %v2784 = vld [vmem:[%s2] sm:$0x1]
      %v2786 = vlaneseq
      %v2787 = vshrl.u32 %v2786, 7
      %v2788 = vsub.s32 0, %v2787
      %v2789 = vrot.slane %v2784, %v2788
      %v2791 = vadd.f32 %v2752, %v2789
      %v2792 = vadd.f32 %v2753, %v2789
      %v2793 = vadd.f32 %v2754, %v2789
      %v2794 = vadd.f32 %v2755, %v2789
      %v2795 = vadd.f32 %v2756, %v2789
      %v2796 = vadd.f32 %v2757, %v2789
      %v2797 = vadd.f32 %v2758, %v2789
      %v2798 = vadd.f32 %v2759, %v2789
      %v2799 = vadd.f32 %v2760, %v2789
      %v2800 = vadd.f32 %v2761, %v2789
      %v2801 = vadd.f32 %v2762, %v2789
      %v2802 = vadd.f32 %v2763, %v2789
      %v2803 = vadd.f32 %v2764, %v2789
      %v2804 = vadd.f32 %v2765, %v2789
      %v2805 = vadd.f32 %v2766, %v2789
      %v2806 = vadd.f32 %v2767, %v2789
      %v2807 = vadd.f32 %v2768, %v2789
      %v2808 = vadd.f32 %v2769, %v2789
      %v2809 = vadd.f32 %v2770, %v2789
      %v2810 = vadd.f32 %v2771, %v2789
      %v2811 = vadd.f32 %v2772, %v2789
      %v2812 = vadd.f32 %v2773, %v2789
      %v2813 = vadd.f32 %v2774, %v2789
      %v2814 = vadd.f32 %v2775, %v2789
      %v2815 = vadd.f32 %v2776, %v2789
      %v2816 = vadd.f32 %v2777, %v2789
      %v2817 = vadd.f32 %v2778, %v2789
      %v2818 = vadd.f32 %v2779, %v2789
      %v2819 = vadd.f32 %v2780, %v2789
      %v2820 = vadd.f32 %v2781, %v2789
      %v2821 = vadd.f32 %v2782, %v2789
      %v2822 = vadd.f32 %v2783, %v2789
      %v2823 = vmul.f32 %v2791, 0.1
      %v2824 = vmul.f32 %v2792, 0.1
      %v2825 = vmul.f32 %v2793, 0.1
      %v2826 = vmul.f32 %v2794, 0.1
      %v2827 = vmul.f32 %v2795, 0.1
      %v2828 = vmul.f32 %v2796, 0.1
      %v2829 = vmul.f32 %v2797, 0.1
      %v2830 = vmul.f32 %v2798, 0.1
      %v2831 = vmul.f32 %v2799, 0.1
      %v2832 = vmul.f32 %v2800, 0.1
      %v2833 = vmul.f32 %v2801, 0.1
      %v2834 = vmul.f32 %v2802, 0.1
      %v2835 = vmul.f32 %v2803, 0.1
      %v2836 = vmul.f32 %v2804, 0.1
      %v2837 = vmul.f32 %v2805, 0.1
      %v2838 = vmul.f32 %v2806, 0.1
      %v2839 = vmul.f32 %v2807, 0.1
      %v2840 = vmul.f32 %v2808, 0.1
      %v2841 = vmul.f32 %v2809, 0.1
      %v2842 = vmul.f32 %v2810, 0.1
      %v2843 = vmul.f32 %v2811, 0.1
      %v2844 = vmul.f32 %v2812, 0.1
      %v2845 = vmul.f32 %v2813, 0.1
      %v2846 = vmul.f32 %v2814, 0.1
      %v2847 = vmul.f32 %v2815, 0.1
      %v2848 = vmul.f32 %v2816, 0.1
      %v2849 = vmul.f32 %v2817, 0.1
      %v2850 = vmul.f32 %v2818, 0.1
      %v2851 = vmul.f32 %v2819, 0.1
      %v2852 = vmul.f32 %v2820, 0.1
      %v2853 = vmul.f32 %v2821, 0.1
      %v2854 = vmul.f32 %v2822, 0.1
      %v2855 = vmax.f32 %v2791, %v2823
      %v2856 = vmax.f32 %v2792, %v2824
      %v2857 = vmax.f32 %v2793, %v2825
      %v2858 = vmax.f32 %v2794, %v2826
      %v2859 = vmax.f32 %v2795, %v2827
      %v2860 = vmax.f32 %v2796, %v2828
      %v2861 = vmax.f32 %v2797, %v2829
      %v2862 = vmax.f32 %v2798, %v2830
      %v2863 = vmax.f32 %v2799, %v2831
      %v2864 = vmax.f32 %v2800, %v2832
      %v2865 = vmax.f32 %v2801, %v2833
      %v2866 = vmax.f32 %v2802, %v2834
      %v2867 = vmax.f32 %v2803, %v2835
      %v2868 = vmax.f32 %v2804, %v2836
      %v2869 = vmax.f32 %v2805, %v2837
      %v2870 = vmax.f32 %v2806, %v2838
      %v2871 = vmax.f32 %v2807, %v2839
      %v2872 = vmax.f32 %v2808, %v2840
      %v2873 = vmax.f32 %v2809, %v2841
      %v2874 = vmax.f32 %v2810, %v2842
      %v2875 = vmax.f32 %v2811, %v2843
      %v2876 = vmax.f32 %v2812, %v2844
      %v2877 = vmax.f32 %v2813, %v2845
      %v2878 = vmax.f32 %v2814, %v2846
      %v2879 = vmax.f32 %v2815, %v2847
      %v2880 = vmax.f32 %v2816, %v2848
      %v2881 = vmax.f32 %v2817, %v2849
      %v2882 = vmax.f32 %v2818, %v2850
      %v2883 = vmax.f32 %v2819, %v2851
      %v2884 = vmax.f32 %v2820, %v2852
      %v2885 = vmax.f32 %v2821, %v2853
      %v2886 = vmax.f32 %v2822, %v2854
      %v2919 = vrot.slane %v2855, 7
      %v2920 = vrot.slane %v2856, 7
      %v2921 = vsel %vm778, %v2919, %v2920
      %v2922 = vrot.slane %v2857, 7
      %v2923 = vsel %vm778, %v2920, %v2922
      %v2924 = vrot.slane %v2858, 7
      %v2925 = vsel %vm778, %v2922, %v2924
      %v2926 = vrot.slane %v2859, 7
      %v2927 = vsel %vm778, %v2924, %v2926
      %v2928 = vrot.slane %v2860, 7
      %v2929 = vsel %vm778, %v2926, %v2928
      %v2930 = vrot.slane %v2861, 7
      %v2931 = vsel %vm778, %v2928, %v2930
      %v2932 = vrot.slane %v2862, 7
      %v2933 = vsel %vm778, %v2930, %v2932
      %v2934 = vrot.slane %v2863, 7
      %v2935 = vsel %vm778, %v2932, %v2934
      %v2936 = vrot.slane %v2864, 7
      %v2937 = vsel %vm778, %v2934, %v2936
      %v2938 = vrot.slane %v2865, 7
      %v2939 = vsel %vm778, %v2936, %v2938
      %v2940 = vrot.slane %v2866, 7
      %v2941 = vsel %vm778, %v2938, %v2940
      %v2942 = vrot.slane %v2867, 7
      %v2943 = vsel %vm778, %v2940, %v2942
      %v2944 = vrot.slane %v2868, 7
      %v2945 = vsel %vm778, %v2942, %v2944
      %v2946 = vrot.slane %v2869, 7
      %v2947 = vsel %vm778, %v2944, %v2946
      %v2948 = vrot.slane %v2870, 7
      %v2949 = vsel %vm778, %v2946, %v2948
      %v2950 = vrot.slane %v2871, 7
      %v2951 = vsel %vm778, %v2948, %v2950
      %v2952 = vrot.slane %v2872, 7
      %v2953 = vsel %vm778, %v2950, %v2952
      %v2954 = vrot.slane %v2873, 7
      %v2955 = vsel %vm778, %v2952, %v2954
      %v2956 = vrot.slane %v2874, 7
      %v2957 = vsel %vm778, %v2954, %v2956
      %v2958 = vrot.slane %v2875, 7
      %v2959 = vsel %vm778, %v2956, %v2958
      %v2960 = vrot.slane %v2876, 7
      %v2961 = vsel %vm778, %v2958, %v2960
      %v2962 = vrot.slane %v2877, 7
      %v2963 = vsel %vm778, %v2960, %v2962
      %v2964 = vrot.slane %v2878, 7
      %v2965 = vsel %vm778, %v2962, %v2964
      %v2966 = vrot.slane %v2879, 7
      %v2967 = vsel %vm778, %v2964, %v2966
      %v2968 = vrot.slane %v2880, 7
      %v2969 = vsel %vm778, %v2966, %v2968
      %v2970 = vrot.slane %v2881, 7
      %v2971 = vsel %vm778, %v2968, %v2970
      %v2972 = vrot.slane %v2882, 7
      %v2973 = vsel %vm778, %v2970, %v2972
      %v2974 = vrot.slane %v2883, 7
      %v2975 = vsel %vm778, %v2972, %v2974
      %v2976 = vrot.slane %v2884, 7
      %v2977 = vsel %vm778, %v2974, %v2976
      %v2978 = vrot.slane %v2885, 7
      %v2979 = vsel %vm778, %v2976, %v2978
      %v2980 = vrot.slane %v2886, 7
      %v2981 = vsel %vm778, %v2978, %v2980
      %v3014 = vsel %vm778, 0.0, %v2919
      %v3015 = vsel %vm907, 0.0, %v3014
      %v3016 = vsel %vm908, 0.0, %v2921
      %v3017 = vsel %vm909, 0.0, %v2923
      %v3018 = vsel %vm910, 0.0, %v2925
      %v3019 = vsel %vm911, 0.0, %v2927
      %v3020 = vsel %vm912, 0.0, %v2929
      %v3021 = vsel %vm913, 0.0, %v2931
      %v3022 = vsel %vm914, 0.0, %v2933
      %v3023 = vsel %vm915, 0.0, %v2935
      %v3024 = vsel %vm916, 0.0, %v2937
      %v3025 = vsel %vm917, 0.0, %v2939
      %v3026 = vsel %vm918, 0.0, %v2941
      %v3027 = vsel %vm919, 0.0, %v2943
      %v3028 = vsel %vm920, 0.0, %v2945
      %v3029 = vsel %vm921, 0.0, %v2947
      %v3030 = vsel %vm922, 0.0, %v2949
      %v3031 = vsel %vm923, 0.0, %v2951
      %v3032 = vsel %vm924, 0.0, %v2953
      %v3033 = vsel %vm925, 0.0, %v2955
      %v3034 = vsel %vm926, 0.0, %v2957
      %v3035 = vsel %vm927, 0.0, %v2959
      %v3036 = vsel %vm928, 0.0, %v2961
      %v3037 = vsel %vm929, 0.0, %v2963
      %v3038 = vsel %vm930, 0.0, %v2965
      %v3039 = vsel %vm931, 0.0, %v2967
      %v3040 = vsel %vm932, 0.0, %v2969
      %v3041 = vsel %vm933, 0.0, %v2971
      %v3042 = vsel %vm934, 0.0, %v2973
      %v3043 = vsel %vm935, 0.0, %v2975
      %v3044 = vsel %vm936, 0.0, %v2977
      %v3045 = vsel %vm937, 0.0, %v2979
      %v3046 = vsel %vm938, 0.0, %v2981
      %v3047 = vrot.slane %v2855, 1
      %v3048 = vrot.slane %v2856, 1
      %v3049 = vsel %vm971, %v3047, %v3048
      %v3050 = vrot.slane %v2857, 1
      %v3051 = vsel %vm971, %v3048, %v3050
      %v3052 = vrot.slane %v2858, 1
      %v3053 = vsel %vm971, %v3050, %v3052
      %v3054 = vrot.slane %v2859, 1
      %v3055 = vsel %vm971, %v3052, %v3054
      %v3056 = vrot.slane %v2860, 1
      %v3057 = vsel %vm971, %v3054, %v3056
      %v3058 = vrot.slane %v2861, 1
      %v3059 = vsel %vm971, %v3056, %v3058
      %v3060 = vrot.slane %v2862, 1
      %v3061 = vsel %vm971, %v3058, %v3060
      %v3062 = vrot.slane %v2863, 1
      %v3063 = vsel %vm971, %v3060, %v3062
      %v3064 = vrot.slane %v2864, 1
      %v3065 = vsel %vm971, %v3062, %v3064
      %v3066 = vrot.slane %v2865, 1
      %v3067 = vsel %vm971, %v3064, %v3066
      %v3068 = vrot.slane %v2866, 1
      %v3069 = vsel %vm971, %v3066, %v3068
      %v3070 = vrot.slane %v2867, 1
      %v3071 = vsel %vm971, %v3068, %v3070
      %v3072 = vrot.slane %v2868, 1
      %v3073 = vsel %vm971, %v3070, %v3072
      %v3074 = vrot.slane %v2869, 1
      %v3075 = vsel %vm971, %v3072, %v3074
      %v3076 = vrot.slane %v2870, 1
      %v3077 = vsel %vm971, %v3074, %v3076
      %v3078 = vrot.slane %v2871, 1
      %v3079 = vsel %vm971, %v3076, %v3078
      %v3080 = vrot.slane %v2872, 1
      %v3081 = vsel %vm971, %v3078, %v3080
      %v3082 = vrot.slane %v2873, 1
      %v3083 = vsel %vm971, %v3080, %v3082
      %v3084 = vrot.slane %v2874, 1
      %v3085 = vsel %vm971, %v3082, %v3084
      %v3086 = vrot.slane %v2875, 1
      %v3087 = vsel %vm971, %v3084, %v3086
      %v3088 = vrot.slane %v2876, 1
      %v3089 = vsel %vm971, %v3086, %v3088
      %v3090 = vrot.slane %v2877, 1
      %v3091 = vsel %vm971, %v3088, %v3090
      %v3092 = vrot.slane %v2878, 1
      %v3093 = vsel %vm971, %v3090, %v3092
      %v3094 = vrot.slane %v2879, 1
      %v3095 = vsel %vm971, %v3092, %v3094
      %v3096 = vrot.slane %v2880, 1
      %v3097 = vsel %vm971, %v3094, %v3096
      %v3098 = vrot.slane %v2881, 1
      %v3099 = vsel %vm971, %v3096, %v3098
      %v3100 = vrot.slane %v2882, 1
      %v3101 = vsel %vm971, %v3098, %v3100
      %v3102 = vrot.slane %v2883, 1
      %v3103 = vsel %vm971, %v3100, %v3102
      %v3104 = vrot.slane %v2884, 1
      %v3105 = vsel %vm971, %v3102, %v3104
      %v3106 = vrot.slane %v2885, 1
      %v3107 = vsel %vm971, %v3104, %v3106
      %v3108 = vrot.slane %v2886, 1
      %v3109 = vsel %vm971, %v3106, %v3108
      %v3142 = vsel %vm971, %v3108, 0.0
      %v3143 = vsel %vm1100, 0.0, %v3049
      %v3144 = vsel %vm1101, 0.0, %v3051
      %v3145 = vsel %vm1102, 0.0, %v3053
      %v3146 = vsel %vm1103, 0.0, %v3055
      %v3147 = vsel %vm1104, 0.0, %v3057
      %v3148 = vsel %vm1105, 0.0, %v3059
      %v3149 = vsel %vm1106, 0.0, %v3061
      %v3150 = vsel %vm1107, 0.0, %v3063
      %v3151 = vsel %vm1108, 0.0, %v3065
      %v3152 = vsel %vm1109, 0.0, %v3067
      %v3153 = vsel %vm1110, 0.0, %v3069
      %v3154 = vsel %vm1111, 0.0, %v3071
      %v3155 = vsel %vm1112, 0.0, %v3073
      %v3156 = vsel %vm1113, 0.0, %v3075
      %v3157 = vsel %vm1114, 0.0, %v3077
      %v3158 = vsel %vm1115, 0.0, %v3079
      %v3159 = vsel %vm1116, 0.0, %v3081
      %v3160 = vsel %vm1117, 0.0, %v3083
      %v3161 = vsel %vm1118, 0.0, %v3085
      %v3162 = vsel %vm1119, 0.0, %v3087
      %v3163 = vsel %vm1120, 0.0, %v3089
      %v3164 = vsel %vm1121, 0.0, %v3091
      %v3165 = vsel %vm1122, 0.0, %v3093
      %v3166 = vsel %vm1123, 0.0, %v3095
      %v3167 = vsel %vm1124, 0.0, %v3097
      %v3168 = vsel %vm1125, 0.0, %v3099
      %v3169 = vsel %vm1126, 0.0, %v3101
      %v3170 = vsel %vm1127, 0.0, %v3103
      %v3171 = vsel %vm1128, 0.0, %v3105
      %v3172 = vsel %vm1129, 0.0, %v3107
      %v3173 = vsel %vm1130, 0.0, %v3109
      %v3174 = vsel %vm1131, 0.0, %v3142
      %3175 = vrot.lane.b32.xlu0 %v2855, 64
      %v3176 = vpop.permute.xlu0 %3175
      %3177 = vrot.lane.b32.xlu0 %v2856, 64
      %v3178 = vpop.permute.xlu0 %3177
      %3179 = vrot.lane.b32.xlu0 %v2857, 64
      %v3180 = vpop.permute.xlu0 %3179
      %3181 = vrot.lane.b32.xlu0 %v2858, 64
      %v3182 = vpop.permute.xlu0 %3181
      %3183 = vrot.lane.b32.xlu0 %v2859, 64
      %v3184 = vpop.permute.xlu0 %3183
      %3185 = vrot.lane.b32.xlu0 %v2860, 64
      %v3186 = vpop.permute.xlu0 %3185
      %3187 = vrot.lane.b32.xlu0 %v2861, 64
      %v3188 = vpop.permute.xlu0 %3187
      %3189 = vrot.lane.b32.xlu0 %v2862, 64
      %v3190 = vpop.permute.xlu0 %3189
      %3191 = vrot.lane.b32.xlu0 %v2863, 64
      %v3192 = vpop.permute.xlu0 %3191
      %3193 = vrot.lane.b32.xlu0 %v2864, 64
      %v3194 = vpop.permute.xlu0 %3193
      %3195 = vrot.lane.b32.xlu0 %v2865, 64
      %v3196 = vpop.permute.xlu0 %3195
      %3197 = vrot.lane.b32.xlu0 %v2866, 64
      %v3198 = vpop.permute.xlu0 %3197
      %3199 = vrot.lane.b32.xlu0 %v2867, 64
      %v3200 = vpop.permute.xlu0 %3199
      %3201 = vrot.lane.b32.xlu0 %v2868, 64
      %v3202 = vpop.permute.xlu0 %3201
      %3203 = vrot.lane.b32.xlu0 %v2869, 64
      %v3204 = vpop.permute.xlu0 %3203
      %3205 = vrot.lane.b32.xlu0 %v2870, 64
      %v3206 = vpop.permute.xlu0 %3205
      %3207 = vrot.lane.b32.xlu0 %v2871, 64
      %v3208 = vpop.permute.xlu0 %3207
      %3209 = vrot.lane.b32.xlu0 %v2872, 64
      %v3210 = vpop.permute.xlu0 %3209
      %3211 = vrot.lane.b32.xlu0 %v2873, 64
      %v3212 = vpop.permute.xlu0 %3211
      %3213 = vrot.lane.b32.xlu0 %v2874, 64
      %v3214 = vpop.permute.xlu0 %3213
      %3215 = vrot.lane.b32.xlu0 %v2875, 64
      %v3216 = vpop.permute.xlu0 %3215
      %3217 = vrot.lane.b32.xlu0 %v2876, 64
      %v3218 = vpop.permute.xlu0 %3217
      %3219 = vrot.lane.b32.xlu0 %v2877, 64
      %v3220 = vpop.permute.xlu0 %3219
      %3221 = vrot.lane.b32.xlu0 %v2878, 64
      %v3222 = vpop.permute.xlu0 %3221
      %3223 = vrot.lane.b32.xlu0 %v2879, 64
      %v3224 = vpop.permute.xlu0 %3223
      %3225 = vrot.lane.b32.xlu0 %v2880, 64
      %v3226 = vpop.permute.xlu0 %3225
      %3227 = vrot.lane.b32.xlu0 %v2881, 64
      %v3228 = vpop.permute.xlu0 %3227
      %3229 = vrot.lane.b32.xlu0 %v2882, 64
      %v3230 = vpop.permute.xlu0 %3229
      %3231 = vrot.lane.b32.xlu0 %v2883, 64
      %v3232 = vpop.permute.xlu0 %3231
      %3233 = vrot.lane.b32.xlu0 %v2884, 64
      %v3234 = vpop.permute.xlu0 %3233
      %3235 = vrot.lane.b32.xlu0 %v2885, 64
      %v3236 = vpop.permute.xlu0 %3235
      %3237 = vrot.lane.b32.xlu0 %v2886, 64
      %v3238 = vpop.permute.xlu0 %3237
      %v3271 = vsel %vm1260, %v3015, %v3176
      %v3272 = vsel %vm1260, %v3016, %v3178
      %v3273 = vsel %vm1260, %v3017, %v3180
      %v3274 = vsel %vm1260, %v3018, %v3182
      %v3275 = vsel %vm1260, %v3019, %v3184
      %v3276 = vsel %vm1260, %v3020, %v3186
      %v3277 = vsel %vm1260, %v3021, %v3188
      %v3278 = vsel %vm1260, %v3022, %v3190
      %v3279 = vsel %vm1260, %v3023, %v3192
      %v3280 = vsel %vm1260, %v3024, %v3194
      %v3281 = vsel %vm1260, %v3025, %v3196
      %v3282 = vsel %vm1260, %v3026, %v3198
      %v3283 = vsel %vm1260, %v3027, %v3200
      %v3284 = vsel %vm1260, %v3028, %v3202
      %v3285 = vsel %vm1260, %v3029, %v3204
      %v3286 = vsel %vm1260, %v3030, %v3206
      %v3287 = vsel %vm1260, %v3031, %v3208
      %v3288 = vsel %vm1260, %v3032, %v3210
      %v3289 = vsel %vm1260, %v3033, %v3212
      %v3290 = vsel %vm1260, %v3034, %v3214
      %v3291 = vsel %vm1260, %v3035, %v3216
      %v3292 = vsel %vm1260, %v3036, %v3218
      %v3293 = vsel %vm1260, %v3037, %v3220
      %v3294 = vsel %vm1260, %v3038, %v3222
      %v3295 = vsel %vm1260, %v3039, %v3224
      %v3296 = vsel %vm1260, %v3040, %v3226
      %v3297 = vsel %vm1260, %v3041, %v3228
      %v3298 = vsel %vm1260, %v3042, %v3230
      %v3299 = vsel %vm1260, %v3043, %v3232
      %v3300 = vsel %vm1260, %v3044, %v3234
      %v3301 = vsel %vm1260, %v3045, %v3236
      %v3302 = vsel %vm1260, %v3046, %v3238
      %v3303 = vpack.c.bf16 %v3272, %v3271
      %v3304 = vpack.c.bf16 %v3144, %v3143
      %v3305 = vpack.c.bf16 %v3274, %v3273
      %v3306 = vpack.c.bf16 %v3146, %v3145
      %v3307 = vpack.c.bf16 %v3276, %v3275
      %v3308 = vpack.c.bf16 %v3148, %v3147
      %v3309 = vpack.c.bf16 %v3278, %v3277
      %v3310 = vpack.c.bf16 %v3150, %v3149
      %v3311 = vpack.c.bf16 %v3280, %v3279
      %v3312 = vpack.c.bf16 %v3152, %v3151
      %v3313 = vpack.c.bf16 %v3282, %v3281
      %v3314 = vpack.c.bf16 %v3154, %v3153
      %v3315 = vpack.c.bf16 %v3284, %v3283
      %v3316 = vpack.c.bf16 %v3156, %v3155
      %v3317 = vpack.c.bf16 %v3286, %v3285
      %v3318 = vpack.c.bf16 %v3158, %v3157
      %v3319 = vpack.c.bf16 %v3288, %v3287
      %v3320 = vpack.c.bf16 %v3160, %v3159
      %v3321 = vpack.c.bf16 %v3290, %v3289
      %v3322 = vpack.c.bf16 %v3162, %v3161
      %v3323 = vpack.c.bf16 %v3292, %v3291
      %v3324 = vpack.c.bf16 %v3164, %v3163
      %v3325 = vpack.c.bf16 %v3294, %v3293
      %v3326 = vpack.c.bf16 %v3166, %v3165
      %v3327 = vpack.c.bf16 %v3296, %v3295
      %v3328 = vpack.c.bf16 %v3168, %v3167
      %v3329 = vpack.c.bf16 %v3298, %v3297
      %v3330 = vpack.c.bf16 %v3170, %v3169
      %v3331 = vpack.c.bf16 %v3300, %v3299
      %v3332 = vpack.c.bf16 %v3172, %v3171
      %v3333 = vpack.c.bf16 %v3302, %v3301
      %v3334 = vpack.c.bf16 %v3174, %v3173
      %v3367 = vunpack.c.l.b16 %v3303
      %v3368 = vunpack.c.l.b16 %v3304
      %v3369 = vunpack.c.h.b16 %v3303
      %v3370 = vunpack.c.h.b16 %v3304
      %v3371 = vunpack.c.l.b16 %v3305
      %v3372 = vunpack.c.l.b16 %v3306
      %v3373 = vunpack.c.h.b16 %v3305
      %v3374 = vunpack.c.h.b16 %v3306
      %v3375 = vunpack.c.l.b16 %v3307
      %v3376 = vunpack.c.l.b16 %v3308
      %v3377 = vunpack.c.h.b16 %v3307
      %v3378 = vunpack.c.h.b16 %v3308
      %v3379 = vunpack.c.l.b16 %v3309
      %v3380 = vunpack.c.l.b16 %v3310
      %v3381 = vunpack.c.h.b16 %v3309
      %v3382 = vunpack.c.h.b16 %v3310
      %v3383 = vunpack.c.l.b16 %v3311
      %v3384 = vunpack.c.l.b16 %v3312
      %v3385 = vunpack.c.h.b16 %v3311
      %v3386 = vunpack.c.h.b16 %v3312
      %v3387 = vunpack.c.l.b16 %v3313
      %v3388 = vunpack.c.l.b16 %v3314
      %v3389 = vunpack.c.h.b16 %v3313
      %v3390 = vunpack.c.h.b16 %v3314
      %v3391 = vunpack.c.l.b16 %v3315
      %v3392 = vunpack.c.l.b16 %v3316
      %v3393 = vunpack.c.h.b16 %v3315
      %v3394 = vunpack.c.h.b16 %v3316
      %v3395 = vunpack.c.l.b16 %v3317
      %v3396 = vunpack.c.l.b16 %v3318
      %v3397 = vunpack.c.h.b16 %v3317
      %v3398 = vunpack.c.h.b16 %v3318
      %v3399 = vunpack.c.l.b16 %v3319
      %v3400 = vunpack.c.l.b16 %v3320
      %v3401 = vunpack.c.h.b16 %v3319
      %v3402 = vunpack.c.h.b16 %v3320
      %v3403 = vunpack.c.l.b16 %v3321
      %v3404 = vunpack.c.l.b16 %v3322
      %v3405 = vunpack.c.h.b16 %v3321
      %v3406 = vunpack.c.h.b16 %v3322
      %v3407 = vunpack.c.l.b16 %v3323
      %v3408 = vunpack.c.l.b16 %v3324
      %v3409 = vunpack.c.h.b16 %v3323
      %v3410 = vunpack.c.h.b16 %v3324
      %v3411 = vunpack.c.l.b16 %v3325
      %v3412 = vunpack.c.l.b16 %v3326
      %v3413 = vunpack.c.h.b16 %v3325
      %v3414 = vunpack.c.h.b16 %v3326
      %v3415 = vunpack.c.l.b16 %v3327
      %v3416 = vunpack.c.l.b16 %v3328
      %v3417 = vunpack.c.h.b16 %v3327
      %v3418 = vunpack.c.h.b16 %v3328
      %v3419 = vunpack.c.l.b16 %v3329
      %v3420 = vunpack.c.l.b16 %v3330
      %v3421 = vunpack.c.h.b16 %v3329
      %v3422 = vunpack.c.h.b16 %v3330
      %v3423 = vunpack.c.l.b16 %v3331
      %v3424 = vunpack.c.l.b16 %v3332
      %v3425 = vunpack.c.h.b16 %v3331
      %v3426 = vunpack.c.h.b16 %v3332
      %v3427 = vunpack.c.l.b16 %v3333
      %v3428 = vunpack.c.l.b16 %v3334
      %v3429 = vunpack.c.h.b16 %v3333
      %v3430 = vunpack.c.h.b16 %v3334
      %v3431 = vpack.c.b16 %v3368, %v3367
      %v3432 = vpack.c.b16 %v3370, %v3369
      %v3433 = vpack.c.b16 %v3372, %v3371
      %v3434 = vpack.c.b16 %v3374, %v3373
      %v3435 = vpack.c.b16 %v3376, %v3375
      %v3436 = vpack.c.b16 %v3378, %v3377
      %v3437 = vpack.c.b16 %v3380, %v3379
      %v3438 = vpack.c.b16 %v3382, %v3381
      %v3439 = vpack.c.b16 %v3384, %v3383
      %v3440 = vpack.c.b16 %v3386, %v3385
      %v3441 = vpack.c.b16 %v3388, %v3387
      %v3442 = vpack.c.b16 %v3390, %v3389
      %v3443 = vpack.c.b16 %v3392, %v3391
      %v3444 = vpack.c.b16 %v3394, %v3393
      %v3445 = vpack.c.b16 %v3396, %v3395
      %v3446 = vpack.c.b16 %v3398, %v3397
      %v3447 = vpack.c.b16 %v3400, %v3399
      %v3448 = vpack.c.b16 %v3402, %v3401
      %v3449 = vpack.c.b16 %v3404, %v3403
      %v3450 = vpack.c.b16 %v3406, %v3405
      %v3451 = vpack.c.b16 %v3408, %v3407
      %v3452 = vpack.c.b16 %v3410, %v3409
      %v3453 = vpack.c.b16 %v3412, %v3411
      %v3454 = vpack.c.b16 %v3414, %v3413
      %v3455 = vpack.c.b16 %v3416, %v3415
      %v3456 = vpack.c.b16 %v3418, %v3417
      %v3457 = vpack.c.b16 %v3420, %v3419
      %v3458 = vpack.c.b16 %v3422, %v3421
      %v3459 = vpack.c.b16 %v3424, %v3423
      %v3460 = vpack.c.b16 %v3426, %v3425
      %v3461 = vpack.c.b16 %v3428, %v3427
      %v3462 = vpack.c.b16 %v3430, %v3429
      %3495 = vst.msk [vmem:[#allocation2 + $0x10] sm:$0xff] %vm709, %v3431
      %3496 = vst.msk [vmem:[#allocation2 + $0x18] sm:$0xff] %vm709, %v3432
      %3497 = vst.msk [vmem:[#allocation2 + $0x20] sm:$0xff] %vm709, %v3433
      %3498 = vst.msk [vmem:[#allocation2 + $0x28] sm:$0xff] %vm709, %v3434
      %3499 = vst.msk [vmem:[#allocation2 + $0x30] sm:$0xff] %vm709, %v3435
      %3500 = vst.msk [vmem:[#allocation2 + $0x38] sm:$0xff] %vm709, %v3436
      %3501 = vst.msk [vmem:[#allocation2 + $0x40] sm:$0xff] %vm709, %v3437
      %3502 = vst.msk [vmem:[#allocation2 + $0x48] sm:$0xff] %vm709, %v3438
      %3503 = vst.msk [vmem:[#allocation2 + $0x50] sm:$0xff] %vm709, %v3439
      %3504 = vst.msk [vmem:[#allocation2 + $0x58] sm:$0xff] %vm709, %v3440
      %3505 = vst.msk [vmem:[#allocation2 + $0x60] sm:$0xff] %vm709, %v3441
      %3506 = vst.msk [vmem:[#allocation2 + $0x68] sm:$0xff] %vm709, %v3442
      %3507 = vst.msk [vmem:[#allocation2 + $0x70] sm:$0xff] %vm709, %v3443
      %3508 = vst.msk [vmem:[#allocation2 + $0x78] sm:$0xff] %vm709, %v3444
      %3509 = vst.msk [vmem:[#allocation2 + $0x80] sm:$0xff] %vm709, %v3445
      %3510 = vst.msk [vmem:[#allocation2 + $0x88] sm:$0xff] %vm709, %v3446
      %3511 = vst.msk [vmem:[#allocation2 + $0x90] sm:$0xff] %vm709, %v3447
      %3512 = vst.msk [vmem:[#allocation2 + $0x98] sm:$0xff] %vm709, %v3448
      %3513 = vst.msk [vmem:[#allocation2 + $0xa0] sm:$0xff] %vm709, %v3449
      %3514 = vst.msk [vmem:[#allocation2 + $0xa8] sm:$0xff] %vm709, %v3450
      %3515 = vst.msk [vmem:[#allocation2 + $0xb0] sm:$0xff] %vm709, %v3451
      %3516 = vst.msk [vmem:[#allocation2 + $0xb8] sm:$0xff] %vm709, %v3452
      %3517 = vst.msk [vmem:[#allocation2 + $0xc0] sm:$0xff] %vm709, %v3453
      %3518 = vst.msk [vmem:[#allocation2 + $0xc8] sm:$0xff] %vm709, %v3454
      %3519 = vst.msk [vmem:[#allocation2 + $0xd0] sm:$0xff] %vm709, %v3455
      %3520 = vst.msk [vmem:[#allocation2 + $0xd8] sm:$0xff] %vm709, %v3456
      %3521 = vst.msk [vmem:[#allocation2 + $0xe0] sm:$0xff] %vm709, %v3457
      %3522 = vst.msk [vmem:[#allocation2 + $0xe8] sm:$0xff] %vm709, %v3458
      %3523 = vst.msk [vmem:[#allocation2 + $0xf0] sm:$0xff] %vm709, %v3459
      %3524 = vst.msk [vmem:[#allocation2 + $0xf8] sm:$0xff] %vm709, %v3460
      %3525 = vst.msk [vmem:[#allocation2 + $0x100] sm:$0xff] %vm709, %v3461
      %3526 = vst.msk [vmem:[#allocation2 + $0x108] sm:$0xff] %vm709, %v3462
      %v3527 = vld [vmem:[#allocation2] sm:$0xff]
      %v3528 = vld [vmem:[#allocation2 + $0x8] sm:$0xff]
      %v3529 = vld [vmem:[#allocation2 + $0x10] sm:$0xff]
      %v3530 = vld [vmem:[#allocation2 + $0x18] sm:$0xff]
      %v3531 = vld [vmem:[#allocation2 + $0x20] sm:$0xff]
      %v3532 = vld [vmem:[#allocation2 + $0x28] sm:$0xff]
      %v3533 = vld [vmem:[#allocation2 + $0x30] sm:$0xff]
      %v3534 = vld [vmem:[#allocation2 + $0x38] sm:$0xff]
      %v3535 = vld [vmem:[#allocation2 + $0x40] sm:$0xff]
      %v3536 = vld [vmem:[#allocation2 + $0x48] sm:$0xff]
      %v3537 = vld [vmem:[#allocation2 + $0x50] sm:$0xff]
      %v3538 = vld [vmem:[#allocation2 + $0x58] sm:$0xff]
      %v3539 = vld [vmem:[#allocation2 + $0x60] sm:$0xff]
      %v3540 = vld [vmem:[#allocation2 + $0x68] sm:$0xff]
      %v3541 = vld [vmem:[#allocation2 + $0x70] sm:$0xff]
      %v3542 = vld [vmem:[#allocation2 + $0x78] sm:$0xff]
      %v3543 = vld [vmem:[#allocation2 + $0x80] sm:$0xff]
      %v3544 = vld [vmem:[#allocation2 + $0x88] sm:$0xff]
      %v3545 = vld [vmem:[#allocation2 + $0x90] sm:$0xff]
      %v3546 = vld [vmem:[#allocation2 + $0x98] sm:$0xff]
      %v3547 = vld [vmem:[#allocation2 + $0xa0] sm:$0xff]
      %v3548 = vld [vmem:[#allocation2 + $0xa8] sm:$0xff]
      %v3549 = vld [vmem:[#allocation2 + $0xb0] sm:$0xff]
      %v3550 = vld [vmem:[#allocation2 + $0xb8] sm:$0xff]
      %v3551 = vld [vmem:[#allocation2 + $0xc0] sm:$0xff]
      %v3552 = vld [vmem:[#allocation2 + $0xc8] sm:$0xff]
      %v3553 = vld [vmem:[#allocation2 + $0xd0] sm:$0xff]
      %v3554 = vld [vmem:[#allocation2 + $0xd8] sm:$0xff]
      %v3555 = vld [vmem:[#allocation2 + $0xe0] sm:$0xff]
      %v3556 = vld [vmem:[#allocation2 + $0xe8] sm:$0xff]
      %v3557 = vld [vmem:[#allocation2 + $0xf0] sm:$0xff]
      %v3558 = vld [vmem:[#allocation2 + $0xf8] sm:$0xff]
      %v3559 = vld [vmem:[%s3] sm:$0xf]
      %v3560 = vld [vmem:[%s3 + $0x4] sm:$0xf]
      %v3561 = vld [vmem:[%s3 + $0x8] sm:$0xf]
      %v3562 = vld [vmem:[%s3 + $0xc] sm:$0xf]
      %v3563 = vld [vmem:[%s3 + $0x10] sm:$0xf]
      %v3564 = vld [vmem:[%s3 + $0x14] sm:$0xf]
      %v3565 = vld [vmem:[%s3 + $0x18] sm:$0xf]
      %v3566 = vld [vmem:[%s3 + $0x1c] sm:$0xf]
      %v3567 = vld [vmem:[%s3 + $0x20] sm:$0xf]
      %v3568 = vld [vmem:[%s3 + $0x24] sm:$0xf]
      %v3569 = vld [vmem:[%s3 + $0x28] sm:$0xf]
      %v3570 = vld [vmem:[%s3 + $0x2c] sm:$0xf]
      %v3571 = vld [vmem:[%s3 + $0x30] sm:$0xf]
      %v3572 = vld [vmem:[%s3 + $0x34] sm:$0xf]
      %v3573 = vld [vmem:[%s3 + $0x38] sm:$0xf]
      %v3574 = vld [vmem:[%s3 + $0x3c] sm:$0xf]
      %v3575 = vld [vmem:[%s3 + $0x40] sm:$0xf]
      %v3576 = vld [vmem:[%s3 + $0x44] sm:$0xf]
      %v3577 = vld [vmem:[%s3 + $0x48] sm:$0xf]
      %v3578 = vld [vmem:[%s3 + $0x4c] sm:$0xf]
      %v3579 = vld [vmem:[%s3 + $0x50] sm:$0xf]
      %v3580 = vld [vmem:[%s3 + $0x54] sm:$0xf]
      %v3581 = vld [vmem:[%s3 + $0x58] sm:$0xf]
      %v3582 = vld [vmem:[%s3 + $0x5c] sm:$0xf]
      %v3583 = vld [vmem:[#allocation2 + $0x100] sm:$0xff]
      %v3584 = vld [vmem:[#allocation2 + $0x108] sm:$0xff]
      %s3585 = scalar_lea.vmem %s3, 96
      %v3586 = vld [vmem:[%s3585] sm:$0xf]
      %v3587 = vld [vmem:[%s3585 + $0x4] sm:$0xf]
      %v3588 = vld [vmem:[%s3585 + $0x8] sm:$0xf]
      %v3589 = vld [vmem:[%s3585 + $0xc] sm:$0xf]
      %v3590 = vld [vmem:[%s3585 + $0x10] sm:$0xf]
      %v3591 = vld [vmem:[%s3585 + $0x14] sm:$0xf]
      %v3592 = vld [vmem:[%s3585 + $0x18] sm:$0xf]
      %v3593 = vld [vmem:[%s3585 + $0x1c] sm:$0xf]
      %v3594 = vld [vmem:[%s3585 + $0x20] sm:$0xf]
      %v3595 = vld [vmem:[%s3585 + $0x24] sm:$0xf]
      %v3596 = vld [vmem:[%s3585 + $0x28] sm:$0xf]
      %v3597 = vld [vmem:[%s3585 + $0x2c] sm:$0xf]
      %v3598 = vld [vmem:[%s3585 + $0x30] sm:$0xf]
      %v3599 = vld [vmem:[%s3585 + $0x34] sm:$0xf]
      %v3600 = vld [vmem:[%s3585 + $0x38] sm:$0xf]
      %v3601 = vld [vmem:[%s3585 + $0x3c] sm:$0xf]
      %v3602 = vld [vmem:[%s3585 + $0x40] sm:$0xf]
      %v3603 = vld [vmem:[%s3585 + $0x44] sm:$0xf]
      %v3604 = vld [vmem:[%s3585 + $0x48] sm:$0xf]
      %v3605 = vld [vmem:[%s3585 + $0x4c] sm:$0xf]
      %v3606 = vld [vmem:[%s3585 + $0x50] sm:$0xf]
      %v3607 = vld [vmem:[%s3585 + $0x54] sm:$0xf]
      %v3608 = vld [vmem:[%s3585 + $0x58] sm:$0xf]
      %v3609 = vld [vmem:[%s3585 + $0x5c] sm:$0xf]
      %v3642 = vunpack.c.l.b16 %v3529
      %v3643 = vunpack.c.h.b16 %v3529
      %v3644 = vunpack.c.l.b16 %v3530
      %v3645 = vunpack.c.h.b16 %v3530
      %v3646 = vunpack.c.l.b16 %v3531
      %v3647 = vunpack.c.h.b16 %v3531
      %v3648 = vunpack.c.l.b16 %v3532
      %v3649 = vunpack.c.h.b16 %v3532
      %v3650 = vunpack.c.l.b16 %v3533
      %v3651 = vunpack.c.h.b16 %v3533
      %v3652 = vunpack.c.l.b16 %v3534
      %v3653 = vunpack.c.h.b16 %v3534
      %v3654 = vunpack.c.l.b16 %v3535
      %v3655 = vunpack.c.h.b16 %v3535
      %v3656 = vunpack.c.l.b16 %v3536
      %v3657 = vunpack.c.h.b16 %v3536
      %v3658 = vunpack.c.l.b16 %v3537
      %v3659 = vunpack.c.h.b16 %v3537
      %v3660 = vunpack.c.l.b16 %v3538
      %v3661 = vunpack.c.h.b16 %v3538
      %v3662 = vunpack.c.l.b16 %v3539
      %v3663 = vunpack.c.h.b16 %v3539
      %v3664 = vunpack.c.l.b16 %v3540
      %v3665 = vunpack.c.h.b16 %v3540
      %v3666 = vunpack.c.l.b16 %v3541
      %v3667 = vunpack.c.h.b16 %v3541
      %v3668 = vunpack.c.l.b16 %v3542
      %v3669 = vunpack.c.h.b16 %v3542
      %v3670 = vunpack.c.l.b16 %v3543
      %v3671 = vunpack.c.h.b16 %v3543
      %v3672 = vunpack.c.l.b16 %v3544
      %v3673 = vunpack.c.h.b16 %v3544
      %v3674 = vunpack.c.l.b16 %v3545
      %v3675 = vunpack.c.h.b16 %v3545
      %v3676 = vunpack.c.l.b16 %v3546
      %v3677 = vunpack.c.h.b16 %v3546
      %v3678 = vunpack.c.l.b16 %v3547
      %v3679 = vunpack.c.h.b16 %v3547
      %v3680 = vunpack.c.l.b16 %v3548
      %v3681 = vunpack.c.h.b16 %v3548
      %v3682 = vunpack.c.l.b16 %v3549
      %v3683 = vunpack.c.h.b16 %v3549
      %v3684 = vunpack.c.l.b16 %v3550
      %v3685 = vunpack.c.h.b16 %v3550
      %v3686 = vunpack.c.l.b16 %v3551
      %v3687 = vunpack.c.h.b16 %v3551
      %v3688 = vunpack.c.l.b16 %v3552
      %v3689 = vunpack.c.h.b16 %v3552
      %v3690 = vunpack.c.l.b16 %v3553
      %v3691 = vunpack.c.h.b16 %v3553
      %v3692 = vunpack.c.l.b16 %v3554
      %v3693 = vunpack.c.h.b16 %v3554
      %v3694 = vunpack.c.l.b16 %v3555
      %v3695 = vunpack.c.h.b16 %v3555
      %v3696 = vunpack.c.l.b16 %v3556
      %v3697 = vunpack.c.h.b16 %v3556
      %v3698 = vunpack.c.l.b16 %v3557
      %v3699 = vunpack.c.h.b16 %v3557
      %v3700 = vunpack.c.l.b16 %v3558
      %v3701 = vunpack.c.h.b16 %v3558
      %v3702 = vunpack.c.l.b16 %v3583
      %v3703 = vunpack.c.h.b16 %v3583
      %v3704 = vunpack.c.l.b16 %v3584
      %v3705 = vunpack.c.h.b16 %v3584
      %v3706 = vpack.c.b16 %v3644, %v3642
      %v3707 = vpack.c.b16 %v3645, %v3643
      %v3708 = vpack.c.b16 %v3648, %v3646
      %v3709 = vpack.c.b16 %v3649, %v3647
      %v3710 = vpack.c.b16 %v3652, %v3650
      %v3711 = vpack.c.b16 %v3653, %v3651
      %v3712 = vpack.c.b16 %v3656, %v3654
      %v3713 = vpack.c.b16 %v3657, %v3655
      %v3714 = vpack.c.b16 %v3660, %v3658
      %v3715 = vpack.c.b16 %v3661, %v3659
      %v3716 = vpack.c.b16 %v3664, %v3662
      %v3717 = vpack.c.b16 %v3665, %v3663
      %v3718 = vpack.c.b16 %v3668, %v3666
      %v3719 = vpack.c.b16 %v3669, %v3667
      %v3720 = vpack.c.b16 %v3672, %v3670
      %v3721 = vpack.c.b16 %v3673, %v3671
      %v3722 = vpack.c.b16 %v3676, %v3674
      %v3723 = vpack.c.b16 %v3677, %v3675
      %v3724 = vpack.c.b16 %v3680, %v3678
      %v3725 = vpack.c.b16 %v3681, %v3679
      %v3726 = vpack.c.b16 %v3684, %v3682
      %v3727 = vpack.c.b16 %v3685, %v3683
      %v3728 = vpack.c.b16 %v3688, %v3686
      %v3729 = vpack.c.b16 %v3689, %v3687
      %v3730 = vpack.c.b16 %v3692, %v3690
      %v3731 = vpack.c.b16 %v3693, %v3691
      %v3732 = vpack.c.b16 %v3696, %v3694
      %v3733 = vpack.c.b16 %v3697, %v3695
      %v3734 = vpack.c.b16 %v3700, %v3698
      %v3735 = vpack.c.b16 %v3701, %v3699
      %v3736 = vpack.c.b16 %v3704, %v3702
      %v3737 = vpack.c.b16 %v3705, %v3703
      %v3778 = vunpack.c.l.b16 %v3586
      %v3779 = vunpack.c.l.b16 %v3587
      %v3780 = vunpack.c.l.b16 %v3588
      %v3781 = vunpack.c.l.b16 %v3589
      %v3782 = vunpack.c.l.b16 %v3590
      %v3783 = vunpack.c.l.b16 %v3591
      %v3784 = vunpack.c.l.b16 %v3592
      %v3785 = vunpack.c.l.b16 %v3593
      %v3786 = vunpack.c.l.b16 %v3594
      %v3787 = vunpack.c.l.b16 %v3595
      %v3788 = vunpack.c.l.b16 %v3596
      %v3789 = vunpack.c.l.b16 %v3597
      %v3790 = vunpack.c.l.b16 %v3598
      %v3791 = vunpack.c.l.b16 %v3599
      %v3792 = vunpack.c.l.b16 %v3600
      %v3793 = vunpack.c.l.b16 %v3601
      %v3794 = vunpack.c.l.b16 %v3602
      %v3795 = vunpack.c.l.b16 %v3603
      %v3796 = vunpack.c.l.b16 %v3604
      %v3797 = vunpack.c.l.b16 %v3605
      %v3798 = vunpack.c.l.b16 %v3606
      %v3799 = vunpack.c.l.b16 %v3607
      %v3800 = vunpack.c.l.b16 %v3608
      %v3801 = vunpack.c.l.b16 %v3609
      %v3802 = vpack.c.b16 %v3779, %v3778
      %v3803 = vpack.c.b16 %v3781, %v3780
      %v3804 = vpack.c.b16 %v3783, %v3782
      %v3805 = vpack.c.b16 %v3785, %v3784
      %v3806 = vpack.c.b16 %v3787, %v3786
      %v3807 = vpack.c.b16 %v3789, %v3788
      %v3808 = vpack.c.b16 %v3791, %v3790
      %v3809 = vpack.c.b16 %v3793, %v3792
      %v3810 = vpack.c.b16 %v3795, %v3794
      %v3811 = vpack.c.b16 %v3797, %v3796
      %v3812 = vpack.c.b16 %v3799, %v3798
      %v3813 = vpack.c.b16 %v3801, %v3800
      %v3827 = vsel %vm1260, %v3707, 0
      %v3830 = vsel %vm1260, %v3709, 0
      %v3833 = vsel %vm1260, %v3711, 0
      %v3836 = vsel %vm1260, %v3713, 0
      %v3839 = vsel %vm1260, %v3715, 0
      %v3842 = vsel %vm1260, %v3717, 0
      %v3845 = vsel %vm1260, %v3719, 0
      %v3848 = vsel %vm1260, %v3721, 0
      %v3851 = vsel %vm1260, %v3723, 0
      %v3854 = vsel %vm1260, %v3725, 0
      %v3857 = vsel %vm1260, %v3727, 0
      %v3860 = vsel %vm1260, %v3729, 0
      %v3863 = vsel %vm1260, %v3731, 0
      %v3866 = vsel %vm1260, %v3733, 0
      %v3869 = vsel %vm1260, %v3735, 0
      %v3872 = vsel %vm1260, %v3737, 0
      %3874 = vmatprep.subr.bf16.mxu0 0
      %3875 = vmatpush1.bf16.msra.mxu0 %v3809
      %3876 = vmatprep.subr.bf16.mxu0 0
      %3877 = vmatpush1.bf16.msra.mxu0 %v3808
      %3878 = vmatprep.subr.bf16.mxu0 0
      %3879 = vmatpush1.bf16.msra.mxu0 %v3807
      %3880 = vmatprep.subr.bf16.mxu0 0
      %3881 = vmatpush1.bf16.msra.mxu0 %v3806
      %3882 = vmatprep.subr.bf16.mxu0 0
      %3883 = vmatpush1.bf16.msra.mxu0 %v3805
      %3884 = vmatprep.subr.bf16.mxu0 0
      %3885 = vmatpush1.bf16.msra.mxu0 %v3804
      %3886 = vmatprep.subr.bf16.mxu0 0
      %3887 = vmatpush1.bf16.msra.mxu0 %v3803
      %3888 = vmatprep.subr.bf16.mxu0 0
      %3889 = vmatpush1.bf16.msra.mxu0 %v3802
      %3890 = vmatprep.subr.bf16.mxu0 0
      %3891 = vmatpush2.bf16.msra.mxu0 0
      %3892 = vmatprep.subr.bf16.mxu0 0
      %3893 = vmatpush2.bf16.msra.mxu0 0
      %3894 = vmatprep.subr.bf16.mxu0 0
      %3895 = vmatpush2.bf16.msra.mxu0 0
      %3896 = vmatprep.subr.bf16.mxu0 0
      %3897 = vmatpush2.bf16.msra.mxu0 0
      %3898 = vmatprep.subr.bf16.mxu0 0
      %3899 = vmatpush2.bf16.msra.mxu0 %v3813
      %3900 = vmatprep.subr.bf16.mxu0 0
      %3901 = vmatpush2.bf16.msra.mxu0 %v3812
      %3902 = vmatprep.subr.bf16.mxu0 0
      %3903 = vmatpush2.bf16.msra.mxu0 %v3811
      %3904 = vmatprep.subr.bf16.mxu0 0
      %3905 = vmatpush2.bf16.msra.mxu0 %v3810
      %3906 = vmatprep.mubr.bf16.mxu0 %v3827
      %3907 = vmatmul.mubr.bf16.gmra.mxu0 %v3706
      %v3908 = vpop.f32.mrf.mxu0
      %v3909 = vadd.f32 0.0, %v3908
      %v3910 = vpop.f32.mrf.mxu0
      %v3911 = vpop.f32.mrf.mxu0
      %v3912 = vadd.f32 0.0, %v3911
      %v3913 = vpop.f32.mrf.mxu0
      %3914 = vmatprep.mubr.bf16.mxu0 %v3830
      %3915 = vmatmul.mubr.bf16.gmra.mxu0 %v3708
      %v3916 = vpop.f32.mrf.mxu0
      %v3917 = vadd.f32 0.0, %v3916
      %v3918 = vpop.f32.mrf.mxu0
      %v3919 = vpop.f32.mrf.mxu0
      %v3920 = vadd.f32 0.0, %v3919
      %v3921 = vpop.f32.mrf.mxu0
      %3922 = vmatprep.mubr.bf16.mxu0 %v3833
      %3923 = vmatmul.mubr.bf16.gmra.mxu0 %v3710
      %v3924 = vpop.f32.mrf.mxu0
      %v3925 = vadd.f32 0.0, %v3924
      %v3926 = vpop.f32.mrf.mxu0
      %v3927 = vpop.f32.mrf.mxu0
      %v3928 = vadd.f32 0.0, %v3927
      %v3929 = vpop.f32.mrf.mxu0
      %3930 = vmatprep.mubr.bf16.mxu0 %v3836
      %3931 = vmatmul.mubr.bf16.gmra.mxu0 %v3712
      %v3932 = vpop.f32.mrf.mxu0
      %v3933 = vadd.f32 0.0, %v3932
      %v3934 = vpop.f32.mrf.mxu0
      %v3935 = vpop.f32.mrf.mxu0
      %v3936 = vadd.f32 0.0, %v3935
      %v3937 = vpop.f32.mrf.mxu0
      %3938 = vmatprep.mubr.bf16.mxu0 %v3839
      %3939 = vmatmul.mubr.bf16.gmra.mxu0 %v3714
      %v3940 = vpop.f32.mrf.mxu0
      %v3941 = vadd.f32 0.0, %v3940
      %v3942 = vpop.f32.mrf.mxu0
      %v3943 = vpop.f32.mrf.mxu0
      %v3944 = vadd.f32 0.0, %v3943
      %v3945 = vpop.f32.mrf.mxu0
      %3946 = vmatprep.mubr.bf16.mxu0 %v3842
      %3947 = vmatmul.mubr.bf16.gmra.mxu0 %v3716
      %v3948 = vpop.f32.mrf.mxu0
      %v3949 = vadd.f32 0.0, %v3948
      %v3950 = vpop.f32.mrf.mxu0
      %v3951 = vpop.f32.mrf.mxu0
      %v3952 = vadd.f32 0.0, %v3951
      %v3953 = vpop.f32.mrf.mxu0
      %3954 = vmatprep.mubr.bf16.mxu0 %v3845
      %3955 = vmatmul.mubr.bf16.gmra.mxu0 %v3718
      %v3956 = vpop.f32.mrf.mxu0
      %v3957 = vadd.f32 0.0, %v3956
      %v3958 = vpop.f32.mrf.mxu0
      %v3959 = vpop.f32.mrf.mxu0
      %v3960 = vadd.f32 0.0, %v3959
      %v3961 = vpop.f32.mrf.mxu0
      %3962 = vmatprep.mubr.bf16.mxu0 %v3848
      %3963 = vmatmul.mubr.bf16.gmra.mxu0 %v3720
      %v3964 = vpop.f32.mrf.mxu0
      %v3965 = vadd.f32 0.0, %v3964
      %v3966 = vpop.f32.mrf.mxu0
      %v3967 = vpop.f32.mrf.mxu0
      %v3968 = vadd.f32 0.0, %v3967
      %v3969 = vpop.f32.mrf.mxu0
      %3970 = vmatprep.mubr.bf16.mxu0 %v3851
      %3971 = vmatmul.mubr.bf16.gmra.mxu0 %v3722
      %v3972 = vpop.f32.mrf.mxu0
      %v3973 = vadd.f32 0.0, %v3972
      %v3974 = vpop.f32.mrf.mxu0
      %v3975 = vpop.f32.mrf.mxu0
      %v3976 = vadd.f32 0.0, %v3975
      %v3977 = vpop.f32.mrf.mxu0
      %3978 = vmatprep.mubr.bf16.mxu0 %v3854
      %3979 = vmatmul.mubr.bf16.gmra.mxu0 %v3724
      %v3980 = vpop.f32.mrf.mxu0
      %v3981 = vadd.f32 0.0, %v3980
      %v3982 = vpop.f32.mrf.mxu0
      %v3983 = vpop.f32.mrf.mxu0
      %v3984 = vadd.f32 0.0, %v3983
      %v3985 = vpop.f32.mrf.mxu0
      %3986 = vmatprep.mubr.bf16.mxu0 %v3857
      %3987 = vmatmul.mubr.bf16.gmra.mxu0 %v3726
      %v3988 = vpop.f32.mrf.mxu0
      %v3989 = vadd.f32 0.0, %v3988
      %v3990 = vpop.f32.mrf.mxu0
      %v3991 = vpop.f32.mrf.mxu0
      %v3992 = vadd.f32 0.0, %v3991
      %v3993 = vpop.f32.mrf.mxu0
      %3994 = vmatprep.mubr.bf16.mxu0 %v3860
      %3995 = vmatmul.mubr.bf16.gmra.mxu0 %v3728
      %v3996 = vpop.f32.mrf.mxu0
      %v3997 = vadd.f32 0.0, %v3996
      %v3998 = vpop.f32.mrf.mxu0
      %v3999 = vpop.f32.mrf.mxu0
      %v4000 = vadd.f32 0.0, %v3999
      %v4001 = vpop.f32.mrf.mxu0
      %4002 = vmatprep.mubr.bf16.mxu0 %v3863
      %4003 = vmatmul.mubr.bf16.gmra.mxu0 %v3730
      %v4004 = vpop.f32.mrf.mxu0
      %v4005 = vadd.f32 0.0, %v4004
      %v4006 = vpop.f32.mrf.mxu0
      %v4007 = vpop.f32.mrf.mxu0
      %v4008 = vadd.f32 0.0, %v4007
      %v4009 = vpop.f32.mrf.mxu0
      %4010 = vmatprep.mubr.bf16.mxu0 %v3866
      %4011 = vmatmul.mubr.bf16.gmra.mxu0 %v3732
      %v4012 = vpop.f32.mrf.mxu0
      %v4013 = vadd.f32 0.0, %v4012
      %v4014 = vpop.f32.mrf.mxu0
      %v4015 = vpop.f32.mrf.mxu0
      %v4016 = vadd.f32 0.0, %v4015
      %v4017 = vpop.f32.mrf.mxu0
      %4018 = vmatprep.mubr.bf16.mxu0 %v3869
      %4019 = vmatmul.mubr.bf16.gmra.mxu0 %v3734
      %v4020 = vpop.f32.mrf.mxu0
      %v4021 = vadd.f32 0.0, %v4020
      %v4022 = vpop.f32.mrf.mxu0
      %v4023 = vpop.f32.mrf.mxu0
      %v4024 = vadd.f32 0.0, %v4023
      %v4025 = vpop.f32.mrf.mxu0
      %4026 = vmatprep.mubr.bf16.mxu0 %v3872
      %4027 = vmatmul.mubr.bf16.gmra.mxu0 %v3736
      %v4028 = vpop.f32.mrf.mxu0
      %v4029 = vadd.f32 0.0, %v4028
      %v4030 = vpop.f32.mrf.mxu0
      %v4031 = vpop.f32.mrf.mxu0
      %v4032 = vadd.f32 0.0, %v4031
      %v4033 = vpop.f32.mrf.mxu0
      %4034 = vdwg.mxu0
      %v4037 = vunpack.c.l.b16 %v3527
      %v4038 = vunpack.c.h.b16 %v3527
      %v4039 = vunpack.c.l.b16 %v3528
      %v4040 = vunpack.c.h.b16 %v3528
      %v4041 = vpack.c.b16 %v4039, %v4037
      %v4042 = vpack.c.b16 %v4040, %v4038
      %v4068 = vunpack.c.l.b16 %v3559
      %v4069 = vunpack.c.l.b16 %v3560
      %v4070 = vunpack.c.l.b16 %v3561
      %v4071 = vunpack.c.l.b16 %v3562
      %v4072 = vunpack.c.l.b16 %v3563
      %v4073 = vunpack.c.l.b16 %v3564
      %v4074 = vunpack.c.l.b16 %v3565
      %v4075 = vunpack.c.l.b16 %v3566
      %v4076 = vunpack.c.l.b16 %v3567
      %v4077 = vunpack.c.l.b16 %v3568
      %v4078 = vunpack.c.l.b16 %v3569
      %v4079 = vunpack.c.l.b16 %v3570
      %v4080 = vunpack.c.l.b16 %v3571
      %v4081 = vunpack.c.l.b16 %v3572
      %v4082 = vunpack.c.l.b16 %v3573
      %v4083 = vunpack.c.l.b16 %v3574
      %v4084 = vunpack.c.l.b16 %v3575
      %v4085 = vunpack.c.l.b16 %v3576
      %v4086 = vunpack.c.l.b16 %v3577
      %v4087 = vunpack.c.l.b16 %v3578
      %v4088 = vunpack.c.l.b16 %v3579
      %v4089 = vunpack.c.l.b16 %v3580
      %v4090 = vunpack.c.l.b16 %v3581
      %v4091 = vunpack.c.l.b16 %v3582
      %v4092 = vpack.c.b16 %v4069, %v4068
      %v4093 = vpack.c.b16 %v4071, %v4070
      %v4094 = vpack.c.b16 %v4073, %v4072
      %v4095 = vpack.c.b16 %v4075, %v4074
      %v4096 = vpack.c.b16 %v4077, %v4076
      %v4097 = vpack.c.b16 %v4079, %v4078
      %v4098 = vpack.c.b16 %v4081, %v4080
      %v4099 = vpack.c.b16 %v4083, %v4082
      %v4100 = vpack.c.b16 %v4085, %v4084
      %v4101 = vpack.c.b16 %v4087, %v4086
      %v4102 = vpack.c.b16 %v4089, %v4088
      %v4103 = vpack.c.b16 %v4091, %v4090
      %v4117 = vsel %vm1260, %v4042, 0
      %4119 = vmatprep.subr.bf16.mxu0 0
      %4120 = vmatpush1.bf16.msra.mxu0 %v4099
      %4121 = vmatprep.subr.bf16.mxu0 0
      %4122 = vmatpush1.bf16.msra.mxu0 %v4098
      %4123 = vmatprep.subr.bf16.mxu0 0
      %4124 = vmatpush1.bf16.msra.mxu0 %v4097
      %4125 = vmatprep.subr.bf16.mxu0 0
      %4126 = vmatpush1.bf16.msra.mxu0 %v4096
      %4127 = vmatprep.subr.bf16.mxu0 0
      %4128 = vmatpush1.bf16.msra.mxu0 %v4095
      %4129 = vmatprep.subr.bf16.mxu0 0
      %4130 = vmatpush1.bf16.msra.mxu0 %v4094
      %4131 = vmatprep.subr.bf16.mxu0 0
      %4132 = vmatpush1.bf16.msra.mxu0 %v4093
      %4133 = vmatprep.subr.bf16.mxu0 0
      %4134 = vmatpush1.bf16.msra.mxu0 %v4092
      %4135 = vmatprep.subr.bf16.mxu0 0
      %4136 = vmatpush2.bf16.msra.mxu0 0
      %4137 = vmatprep.subr.bf16.mxu0 0
      %4138 = vmatpush2.bf16.msra.mxu0 0
      %4139 = vmatprep.subr.bf16.mxu0 0
      %4140 = vmatpush2.bf16.msra.mxu0 0
      %4141 = vmatprep.subr.bf16.mxu0 0
      %4142 = vmatpush2.bf16.msra.mxu0 0
      %4143 = vmatprep.subr.bf16.mxu0 0
      %4144 = vmatpush2.bf16.msra.mxu0 %v4103
      %4145 = vmatprep.subr.bf16.mxu0 0
      %4146 = vmatpush2.bf16.msra.mxu0 %v4102
      %4147 = vmatprep.subr.bf16.mxu0 0
      %4148 = vmatpush2.bf16.msra.mxu0 %v4101
      %4149 = vmatprep.subr.bf16.mxu0 0
      %4150 = vmatpush2.bf16.msra.mxu0 %v4100
      %4151 = vmatprep.mubr.bf16.mxu0 %v4117
      %4152 = vmatmul.mubr.bf16.gmra.mxu0 %v4041
      %v4153 = vpop.f32.mrf.mxu0
      %v4154 = vadd.f32 %v3909, %v4153
      %v4155 = vpop.f32.mrf.mxu0
      %v4156 = vpop.f32.mrf.mxu0
      %v4157 = vadd.f32 %v3912, %v4156
      %v4158 = vpop.f32.mrf.mxu0
      %4159 = vmatprep.mubr.bf16.mxu0 %v3827
      %4160 = vmatmul.mubr.bf16.gmra.mxu0 %v3706
      %v4161 = vpop.f32.mrf.mxu0
      %v4162 = vadd.f32 %v3917, %v4161
      %v4163 = vpop.f32.mrf.mxu0
      %v4164 = vpop.f32.mrf.mxu0
      %v4165 = vadd.f32 %v3920, %v4164
      %v4166 = vpop.f32.mrf.mxu0
      %4167 = vmatprep.mubr.bf16.mxu0 %v3830
      %4168 = vmatmul.mubr.bf16.gmra.mxu0 %v3708
      %v4169 = vpop.f32.mrf.mxu0
      %v4170 = vadd.f32 %v3925, %v4169
      %v4171 = vpop.f32.mrf.mxu0
      %v4172 = vpop.f32.mrf.mxu0
      %v4173 = vadd.f32 %v3928, %v4172
      %v4174 = vpop.f32.mrf.mxu0
      %4175 = vmatprep.mubr.bf16.mxu0 %v3833
      %4176 = vmatmul.mubr.bf16.gmra.mxu0 %v3710
      %v4177 = vpop.f32.mrf.mxu0
      %v4178 = vadd.f32 %v3933, %v4177
      %v4179 = vpop.f32.mrf.mxu0
      %v4180 = vpop.f32.mrf.mxu0
      %v4181 = vadd.f32 %v3936, %v4180
      %v4182 = vpop.f32.mrf.mxu0
      %4183 = vmatprep.mubr.bf16.mxu0 %v3836
      %4184 = vmatmul.mubr.bf16.gmra.mxu0 %v3712
      %v4185 = vpop.f32.mrf.mxu0
      %v4186 = vadd.f32 %v3941, %v4185
      %v4187 = vpop.f32.mrf.mxu0
      %v4188 = vpop.f32.mrf.mxu0
      %v4189 = vadd.f32 %v3944, %v4188
      %v4190 = vpop.f32.mrf.mxu0
      %4191 = vmatprep.mubr.bf16.mxu0 %v3839
      %4192 = vmatmul.mubr.bf16.gmra.mxu0 %v3714
      %v4193 = vpop.f32.mrf.mxu0
      %v4194 = vadd.f32 %v3949, %v4193
      %v4195 = vpop.f32.mrf.mxu0
      %v4196 = vpop.f32.mrf.mxu0
      %v4197 = vadd.f32 %v3952, %v4196
      %v4198 = vpop.f32.mrf.mxu0
      %4199 = vmatprep.mubr.bf16.mxu0 %v3842
      %4200 = vmatmul.mubr.bf16.gmra.mxu0 %v3716
      %v4201 = vpop.f32.mrf.mxu0
      %v4202 = vadd.f32 %v3957, %v4201
      %v4203 = vpop.f32.mrf.mxu0
      %v4204 = vpop.f32.mrf.mxu0
      %v4205 = vadd.f32 %v3960, %v4204
      %v4206 = vpop.f32.mrf.mxu0
      %4207 = vmatprep.mubr.bf16.mxu0 %v3845
      %4208 = vmatmul.mubr.bf16.gmra.mxu0 %v3718
      %v4209 = vpop.f32.mrf.mxu0
      %v4210 = vadd.f32 %v3965, %v4209
      %v4211 = vpop.f32.mrf.mxu0
      %v4212 = vpop.f32.mrf.mxu0
      %v4213 = vadd.f32 %v3968, %v4212
      %v4214 = vpop.f32.mrf.mxu0
      %4215 = vmatprep.mubr.bf16.mxu0 %v3848
      %4216 = vmatmul.mubr.bf16.gmra.mxu0 %v3720
      %v4217 = vpop.f32.mrf.mxu0
      %v4218 = vadd.f32 %v3973, %v4217
      %v4219 = vpop.f32.mrf.mxu0
      %v4220 = vpop.f32.mrf.mxu0
      %v4221 = vadd.f32 %v3976, %v4220
      %v4222 = vpop.f32.mrf.mxu0
      %4223 = vmatprep.mubr.bf16.mxu0 %v3851
      %4224 = vmatmul.mubr.bf16.gmra.mxu0 %v3722
      %v4225 = vpop.f32.mrf.mxu0
      %v4226 = vadd.f32 %v3981, %v4225
      %v4227 = vpop.f32.mrf.mxu0
      %v4228 = vpop.f32.mrf.mxu0
      %v4229 = vadd.f32 %v3984, %v4228
      %v4230 = vpop.f32.mrf.mxu0
      %4231 = vmatprep.mubr.bf16.mxu0 %v3854
      %4232 = vmatmul.mubr.bf16.gmra.mxu0 %v3724
      %v4233 = vpop.f32.mrf.mxu0
      %v4234 = vadd.f32 %v3989, %v4233
      %v4235 = vpop.f32.mrf.mxu0
      %v4236 = vpop.f32.mrf.mxu0
      %v4237 = vadd.f32 %v3992, %v4236
      %v4238 = vpop.f32.mrf.mxu0
      %4239 = vmatprep.mubr.bf16.mxu0 %v3857
      %4240 = vmatmul.mubr.bf16.gmra.mxu0 %v3726
      %v4241 = vpop.f32.mrf.mxu0
      %v4242 = vadd.f32 %v3997, %v4241
      %v4243 = vpop.f32.mrf.mxu0
      %v4244 = vpop.f32.mrf.mxu0
      %v4245 = vadd.f32 %v4000, %v4244
      %v4246 = vpop.f32.mrf.mxu0
      %4247 = vmatprep.mubr.bf16.mxu0 %v3860
      %4248 = vmatmul.mubr.bf16.gmra.mxu0 %v3728
      %v4249 = vpop.f32.mrf.mxu0
      %v4250 = vadd.f32 %v4005, %v4249
      %v4251 = vpop.f32.mrf.mxu0
      %v4252 = vpop.f32.mrf.mxu0
      %v4253 = vadd.f32 %v4008, %v4252
      %v4254 = vpop.f32.mrf.mxu0
      %4255 = vmatprep.mubr.bf16.mxu0 %v3863
      %4256 = vmatmul.mubr.bf16.gmra.mxu0 %v3730
      %v4257 = vpop.f32.mrf.mxu0
      %v4258 = vadd.f32 %v4013, %v4257
      %v4259 = vpop.f32.mrf.mxu0
      %v4260 = vpop.f32.mrf.mxu0
      %v4261 = vadd.f32 %v4016, %v4260
      %v4262 = vpop.f32.mrf.mxu0
      %4263 = vmatprep.mubr.bf16.mxu0 %v3866
      %4264 = vmatmul.mubr.bf16.gmra.mxu0 %v3732
      %v4265 = vpop.f32.mrf.mxu0
      %v4266 = vadd.f32 %v4021, %v4265
      %v4267 = vpop.f32.mrf.mxu0
      %v4268 = vpop.f32.mrf.mxu0
      %v4269 = vadd.f32 %v4024, %v4268
      %v4270 = vpop.f32.mrf.mxu0
      %4271 = vmatprep.mubr.bf16.mxu0 %v3869
      %4272 = vmatmul.mubr.bf16.gmra.mxu0 %v3734
      %v4273 = vpop.f32.mrf.mxu0
      %v4274 = vadd.f32 %v4029, %v4273
      %v4275 = vpop.f32.mrf.mxu0
      %v4276 = vpop.f32.mrf.mxu0
      %v4277 = vadd.f32 %v4032, %v4276
      %v4278 = vpop.f32.mrf.mxu0
      %4279 = vdwg.mxu0
      %v4280 = vld [vmem:[#allocation2 + $0x20] sm:$0xff]
      %v4281 = vld [vmem:[#allocation2 + $0x28] sm:$0xff]
      %v4282 = vld [vmem:[#allocation2 + $0x30] sm:$0xff]
      %v4283 = vld [vmem:[#allocation2 + $0x38] sm:$0xff]
      %v4284 = vld [vmem:[#allocation2 + $0x40] sm:$0xff]
      %v4285 = vld [vmem:[#allocation2 + $0x48] sm:$0xff]
      %v4286 = vld [vmem:[#allocation2 + $0x50] sm:$0xff]
      %v4287 = vld [vmem:[#allocation2 + $0x58] sm:$0xff]
      %v4288 = vld [vmem:[#allocation2 + $0x60] sm:$0xff]
      %v4289 = vld [vmem:[#allocation2 + $0x68] sm:$0xff]
      %v4290 = vld [vmem:[#allocation2 + $0x70] sm:$0xff]
      %v4291 = vld [vmem:[#allocation2 + $0x78] sm:$0xff]
      %v4292 = vld [vmem:[#allocation2 + $0x80] sm:$0xff]
      %v4293 = vld [vmem:[#allocation2 + $0x88] sm:$0xff]
      %v4294 = vld [vmem:[#allocation2 + $0x90] sm:$0xff]
      %v4295 = vld [vmem:[#allocation2 + $0x98] sm:$0xff]
      %v4296 = vld [vmem:[#allocation2 + $0xa0] sm:$0xff]
      %v4297 = vld [vmem:[#allocation2 + $0xa8] sm:$0xff]
      %v4298 = vld [vmem:[#allocation2 + $0xb0] sm:$0xff]
      %v4299 = vld [vmem:[#allocation2 + $0xb8] sm:$0xff]
      %v4300 = vld [vmem:[#allocation2 + $0xc0] sm:$0xff]
      %v4301 = vld [vmem:[#allocation2 + $0xc8] sm:$0xff]
      %v4302 = vld [vmem:[#allocation2 + $0xd0] sm:$0xff]
      %v4303 = vld [vmem:[#allocation2 + $0xd8] sm:$0xff]
      %v4304 = vld [vmem:[#allocation2 + $0xe0] sm:$0xff]
      %v4305 = vld [vmem:[#allocation2 + $0xe8] sm:$0xff]
      %v4306 = vld [vmem:[#allocation2 + $0xf0] sm:$0xff]
      %v4307 = vld [vmem:[#allocation2 + $0xf8] sm:$0xff]
      %v4308 = vld [vmem:[#allocation2 + $0x100] sm:$0xff]
      %v4309 = vld [vmem:[#allocation2 + $0x108] sm:$0xff]
      %v4310 = vld [vmem:[#allocation2 + $0x110] sm:$0xff]
      %v4311 = vld [vmem:[#allocation2 + $0x118] sm:$0xff]
      %s4312 = scalar_lea.vmem %s3, 192
      %v4313 = vld [vmem:[%s4312] sm:$0xf]
      %v4314 = vld [vmem:[%s4312 + $0x4] sm:$0xf]
      %v4315 = vld [vmem:[%s4312 + $0x8] sm:$0xf]
      %v4316 = vld [vmem:[%s4312 + $0xc] sm:$0xf]
      %v4317 = vld [vmem:[%s4312 + $0x10] sm:$0xf]
      %v4318 = vld [vmem:[%s4312 + $0x14] sm:$0xf]
      %v4319 = vld [vmem:[%s4312 + $0x18] sm:$0xf]
      %v4320 = vld [vmem:[%s4312 + $0x1c] sm:$0xf]
      %v4321 = vld [vmem:[%s4312 + $0x20] sm:$0xf]
      %v4322 = vld [vmem:[%s4312 + $0x24] sm:$0xf]
      %v4323 = vld [vmem:[%s4312 + $0x28] sm:$0xf]
      %v4324 = vld [vmem:[%s4312 + $0x2c] sm:$0xf]
      %v4325 = vld [vmem:[%s4312 + $0x30] sm:$0xf]
      %v4326 = vld [vmem:[%s4312 + $0x34] sm:$0xf]
      %v4327 = vld [vmem:[%s4312 + $0x38] sm:$0xf]
      %v4328 = vld [vmem:[%s4312 + $0x3c] sm:$0xf]
      %v4329 = vld [vmem:[%s4312 + $0x40] sm:$0xf]
      %v4330 = vld [vmem:[%s4312 + $0x44] sm:$0xf]
      %v4331 = vld [vmem:[%s4312 + $0x48] sm:$0xf]
      %v4332 = vld [vmem:[%s4312 + $0x4c] sm:$0xf]
      %v4333 = vld [vmem:[%s4312 + $0x50] sm:$0xf]
      %v4334 = vld [vmem:[%s4312 + $0x54] sm:$0xf]
      %v4335 = vld [vmem:[%s4312 + $0x58] sm:$0xf]
      %v4336 = vld [vmem:[%s4312 + $0x5c] sm:$0xf]
      %v4369 = vunpack.c.l.b16 %v4280
      %v4370 = vunpack.c.h.b16 %v4280
      %v4371 = vunpack.c.l.b16 %v4281
      %v4372 = vunpack.c.h.b16 %v4281
      %v4373 = vunpack.c.l.b16 %v4282
      %v4374 = vunpack.c.h.b16 %v4282
      %v4375 = vunpack.c.l.b16 %v4283
      %v4376 = vunpack.c.h.b16 %v4283
      %v4377 = vunpack.c.l.b16 %v4284
      %v4378 = vunpack.c.h.b16 %v4284
      %v4379 = vunpack.c.l.b16 %v4285
      %v4380 = vunpack.c.h.b16 %v4285
      %v4381 = vunpack.c.l.b16 %v4286
      %v4382 = vunpack.c.h.b16 %v4286
      %v4383 = vunpack.c.l.b16 %v4287
      %v4384 = vunpack.c.h.b16 %v4287
      %v4385 = vunpack.c.l.b16 %v4288
      %v4386 = vunpack.c.h.b16 %v4288
      %v4387 = vunpack.c.l.b16 %v4289
      %v4388 = vunpack.c.h.b16 %v4289
      %v4389 = vunpack.c.l.b16 %v4290
      %v4390 = vunpack.c.h.b16 %v4290
      %v4391 = vunpack.c.l.b16 %v4291
      %v4392 = vunpack.c.h.b16 %v4291
      %v4393 = vunpack.c.l.b16 %v4292
      %v4394 = vunpack.c.h.b16 %v4292
      %v4395 = vunpack.c.l.b16 %v4293
      %v4396 = vunpack.c.h.b16 %v4293
      %v4397 = vunpack.c.l.b16 %v4294
      %v4398 = vunpack.c.h.b16 %v4294
      %v4399 = vunpack.c.l.b16 %v4295
      %v4400 = vunpack.c.h.b16 %v4295
      %v4401 = vunpack.c.l.b16 %v4296
      %v4402 = vunpack.c.h.b16 %v4296
      %v4403 = vunpack.c.l.b16 %v4297
      %v4404 = vunpack.c.h.b16 %v4297
      %v4405 = vunpack.c.l.b16 %v4298
      %v4406 = vunpack.c.h.b16 %v4298
      %v4407 = vunpack.c.l.b16 %v4299
      %v4408 = vunpack.c.h.b16 %v4299
      %v4409 = vunpack.c.l.b16 %v4300
      %v4410 = vunpack.c.h.b16 %v4300
      %v4411 = vunpack.c.l.b16 %v4301
      %v4412 = vunpack.c.h.b16 %v4301
      %v4413 = vunpack.c.l.b16 %v4302
      %v4414 = vunpack.c.h.b16 %v4302
      %v4415 = vunpack.c.l.b16 %v4303
      %v4416 = vunpack.c.h.b16 %v4303
      %v4417 = vunpack.c.l.b16 %v4304
      %v4418 = vunpack.c.h.b16 %v4304
      %v4419 = vunpack.c.l.b16 %v4305
      %v4420 = vunpack.c.h.b16 %v4305
      %v4421 = vunpack.c.l.b16 %v4306
      %v4422 = vunpack.c.h.b16 %v4306
      %v4423 = vunpack.c.l.b16 %v4307
      %v4424 = vunpack.c.h.b16 %v4307
      %v4425 = vunpack.c.l.b16 %v4308
      %v4426 = vunpack.c.h.b16 %v4308
      %v4427 = vunpack.c.l.b16 %v4309
      %v4428 = vunpack.c.h.b16 %v4309
      %v4429 = vunpack.c.l.b16 %v4310
      %v4430 = vunpack.c.h.b16 %v4310
      %v4431 = vunpack.c.l.b16 %v4311
      %v4432 = vunpack.c.h.b16 %v4311
      %v4433 = vpack.c.b16 %v4371, %v4369
      %v4434 = vpack.c.b16 %v4372, %v4370
      %v4435 = vpack.c.b16 %v4375, %v4373
      %v4436 = vpack.c.b16 %v4376, %v4374
      %v4437 = vpack.c.b16 %v4379, %v4377
      %v4438 = vpack.c.b16 %v4380, %v4378
      %v4439 = vpack.c.b16 %v4383, %v4381
      %v4440 = vpack.c.b16 %v4384, %v4382
      %v4441 = vpack.c.b16 %v4387, %v4385
      %v4442 = vpack.c.b16 %v4388, %v4386
      %v4443 = vpack.c.b16 %v4391, %v4389
      %v4444 = vpack.c.b16 %v4392, %v4390
      %v4445 = vpack.c.b16 %v4395, %v4393
      %v4446 = vpack.c.b16 %v4396, %v4394
      %v4447 = vpack.c.b16 %v4399, %v4397
      %v4448 = vpack.c.b16 %v4400, %v4398
      %v4449 = vpack.c.b16 %v4403, %v4401
      %v4450 = vpack.c.b16 %v4404, %v4402
      %v4451 = vpack.c.b16 %v4407, %v4405
      %v4452 = vpack.c.b16 %v4408, %v4406
      %v4453 = vpack.c.b16 %v4411, %v4409
      %v4454 = vpack.c.b16 %v4412, %v4410
      %v4455 = vpack.c.b16 %v4415, %v4413
      %v4456 = vpack.c.b16 %v4416, %v4414
      %v4457 = vpack.c.b16 %v4419, %v4417
      %v4458 = vpack.c.b16 %v4420, %v4418
      %v4459 = vpack.c.b16 %v4423, %v4421
      %v4460 = vpack.c.b16 %v4424, %v4422
      %v4461 = vpack.c.b16 %v4427, %v4425
      %v4462 = vpack.c.b16 %v4428, %v4426
      %v4463 = vpack.c.b16 %v4431, %v4429
      %v4464 = vpack.c.b16 %v4432, %v4430
      %v4505 = vunpack.c.l.b16 %v4313
      %v4506 = vunpack.c.l.b16 %v4314
      %v4507 = vunpack.c.l.b16 %v4315
      %v4508 = vunpack.c.l.b16 %v4316
      %v4509 = vunpack.c.l.b16 %v4317
      %v4510 = vunpack.c.l.b16 %v4318
      %v4511 = vunpack.c.l.b16 %v4319
      %v4512 = vunpack.c.l.b16 %v4320
      %v4513 = vunpack.c.l.b16 %v4321
      %v4514 = vunpack.c.l.b16 %v4322
      %v4515 = vunpack.c.l.b16 %v4323
      %v4516 = vunpack.c.l.b16 %v4324
      %v4517 = vunpack.c.l.b16 %v4325
      %v4518 = vunpack.c.l.b16 %v4326
      %v4519 = vunpack.c.l.b16 %v4327
      %v4520 = vunpack.c.l.b16 %v4328
      %v4521 = vunpack.c.l.b16 %v4329
      %v4522 = vunpack.c.l.b16 %v4330
      %v4523 = vunpack.c.l.b16 %v4331
      %v4524 = vunpack.c.l.b16 %v4332
      %v4525 = vunpack.c.l.b16 %v4333
      %v4526 = vunpack.c.l.b16 %v4334
      %v4527 = vunpack.c.l.b16 %v4335
      %v4528 = vunpack.c.l.b16 %v4336
      %v4529 = vpack.c.b16 %v4506, %v4505
      %v4530 = vpack.c.b16 %v4508, %v4507
      %v4531 = vpack.c.b16 %v4510, %v4509
      %v4532 = vpack.c.b16 %v4512, %v4511
      %v4533 = vpack.c.b16 %v4514, %v4513
      %v4534 = vpack.c.b16 %v4516, %v4515
      %v4535 = vpack.c.b16 %v4518, %v4517
      %v4536 = vpack.c.b16 %v4520, %v4519
      %v4537 = vpack.c.b16 %v4522, %v4521
      %v4538 = vpack.c.b16 %v4524, %v4523
      %v4539 = vpack.c.b16 %v4526, %v4525
      %v4540 = vpack.c.b16 %v4528, %v4527
      %v4554 = vsel %vm1260, %v4434, 0
      %v4557 = vsel %vm1260, %v4436, 0
      %v4560 = vsel %vm1260, %v4438, 0
      %v4563 = vsel %vm1260, %v4440, 0
      %v4566 = vsel %vm1260, %v4442, 0
      %v4569 = vsel %vm1260, %v4444, 0
      %v4572 = vsel %vm1260, %v4446, 0
      %v4575 = vsel %vm1260, %v4448, 0
      %v4578 = vsel %vm1260, %v4450, 0
      %v4581 = vsel %vm1260, %v4452, 0
      %v4584 = vsel %vm1260, %v4454, 0
      %v4587 = vsel %vm1260, %v4456, 0
      %v4590 = vsel %vm1260, %v4458, 0
      %v4593 = vsel %vm1260, %v4460, 0
      %v4596 = vsel %vm1260, %v4462, 0
      %v4599 = vsel %vm1260, %v4464, 0
      %4601 = vmatprep.subr.bf16.mxu0 0
      %4602 = vmatpush1.bf16.msra.mxu0 %v4536
      %4603 = vmatprep.subr.bf16.mxu0 0
      %4604 = vmatpush1.bf16.msra.mxu0 %v4535
      %4605 = vmatprep.subr.bf16.mxu0 0
      %4606 = vmatpush1.bf16.msra.mxu0 %v4534
      %4607 = vmatprep.subr.bf16.mxu0 0
      %4608 = vmatpush1.bf16.msra.mxu0 %v4533
      %4609 = vmatprep.subr.bf16.mxu0 0
      %4610 = vmatpush1.bf16.msra.mxu0 %v4532
      %4611 = vmatprep.subr.bf16.mxu0 0
      %4612 = vmatpush1.bf16.msra.mxu0 %v4531
      %4613 = vmatprep.subr.bf16.mxu0 0
      %4614 = vmatpush1.bf16.msra.mxu0 %v4530
      %4615 = vmatprep.subr.bf16.mxu0 0
      %4616 = vmatpush1.bf16.msra.mxu0 %v4529
      %4617 = vmatprep.subr.bf16.mxu0 0
      %4618 = vmatpush2.bf16.msra.mxu0 0
      %4619 = vmatprep.subr.bf16.mxu0 0
      %4620 = vmatpush2.bf16.msra.mxu0 0
      %4621 = vmatprep.subr.bf16.mxu0 0
      %4622 = vmatpush2.bf16.msra.mxu0 0
      %4623 = vmatprep.subr.bf16.mxu0 0
      %4624 = vmatpush2.bf16.msra.mxu0 0
      %4625 = vmatprep.subr.bf16.mxu0 0
      %4626 = vmatpush2.bf16.msra.mxu0 %v4540
      %4627 = vmatprep.subr.bf16.mxu0 0
      %4628 = vmatpush2.bf16.msra.mxu0 %v4539
      %4629 = vmatprep.subr.bf16.mxu0 0
      %4630 = vmatpush2.bf16.msra.mxu0 %v4538
      %4631 = vmatprep.subr.bf16.mxu0 0
      %4632 = vmatpush2.bf16.msra.mxu0 %v4537
      %4633 = vmatprep.mubr.bf16.mxu0 %v4554
      %4634 = vmatmul.mubr.bf16.gmra.mxu0 %v4433
      %v4635 = vpop.f32.mrf.mxu0
      %v4636 = vadd.f32 0.0, %v4635
      %v4637 = vpop.f32.mrf.mxu0
      %v4638 = vpop.f32.mrf.mxu0
      %v4639 = vadd.f32 0.0, %v4638
      %v4640 = vpop.f32.mrf.mxu0
      %4641 = vmatprep.mubr.bf16.mxu0 %v4557
      %4642 = vmatmul.mubr.bf16.gmra.mxu0 %v4435
      %v4643 = vpop.f32.mrf.mxu0
      %v4644 = vadd.f32 0.0, %v4643
      %v4645 = vpop.f32.mrf.mxu0
      %v4646 = vpop.f32.mrf.mxu0
      %v4647 = vadd.f32 0.0, %v4646
      %v4648 = vpop.f32.mrf.mxu0
      %4649 = vmatprep.mubr.bf16.mxu0 %v4560
      %4650 = vmatmul.mubr.bf16.gmra.mxu0 %v4437
      %v4651 = vpop.f32.mrf.mxu0
      %v4652 = vadd.f32 0.0, %v4651
      %v4653 = vpop.f32.mrf.mxu0
      %v4654 = vpop.f32.mrf.mxu0
      %v4655 = vadd.f32 0.0, %v4654
      %v4656 = vpop.f32.mrf.mxu0
      %4657 = vmatprep.mubr.bf16.mxu0 %v4563
      %4658 = vmatmul.mubr.bf16.gmra.mxu0 %v4439
      %v4659 = vpop.f32.mrf.mxu0
      %v4660 = vadd.f32 0.0, %v4659
      %v4661 = vpop.f32.mrf.mxu0
      %v4662 = vpop.f32.mrf.mxu0
      %v4663 = vadd.f32 0.0, %v4662
      %v4664 = vpop.f32.mrf.mxu0
      %4665 = vmatprep.mubr.bf16.mxu0 %v4566
      %4666 = vmatmul.mubr.bf16.gmra.mxu0 %v4441
      %v4667 = vpop.f32.mrf.mxu0
      %v4668 = vadd.f32 0.0, %v4667
      %v4669 = vpop.f32.mrf.mxu0
      %v4670 = vpop.f32.mrf.mxu0
      %v4671 = vadd.f32 0.0, %v4670
      %v4672 = vpop.f32.mrf.mxu0
      %4673 = vmatprep.mubr.bf16.mxu0 %v4569
      %4674 = vmatmul.mubr.bf16.gmra.mxu0 %v4443
      %v4675 = vpop.f32.mrf.mxu0
      %v4676 = vadd.f32 0.0, %v4675
      %v4677 = vpop.f32.mrf.mxu0
      %v4678 = vpop.f32.mrf.mxu0
      %v4679 = vadd.f32 0.0, %v4678
      %v4680 = vpop.f32.mrf.mxu0
      %4681 = vmatprep.mubr.bf16.mxu0 %v4572
      %4682 = vmatmul.mubr.bf16.gmra.mxu0 %v4445
      %v4683 = vpop.f32.mrf.mxu0
      %v4684 = vadd.f32 0.0, %v4683
      %v4685 = vpop.f32.mrf.mxu0
      %v4686 = vpop.f32.mrf.mxu0
      %v4687 = vadd.f32 0.0, %v4686
      %v4688 = vpop.f32.mrf.mxu0
      %4689 = vmatprep.mubr.bf16.mxu0 %v4575
      %4690 = vmatmul.mubr.bf16.gmra.mxu0 %v4447
      %v4691 = vpop.f32.mrf.mxu0
      %v4692 = vadd.f32 0.0, %v4691
      %v4693 = vpop.f32.mrf.mxu0
      %v4694 = vpop.f32.mrf.mxu0
      %v4695 = vadd.f32 0.0, %v4694
      %v4696 = vpop.f32.mrf.mxu0
      %4697 = vmatprep.mubr.bf16.mxu0 %v4578
      %4698 = vmatmul.mubr.bf16.gmra.mxu0 %v4449
      %v4699 = vpop.f32.mrf.mxu0
      %v4700 = vadd.f32 0.0, %v4699
      %v4701 = vpop.f32.mrf.mxu0
      %v4702 = vpop.f32.mrf.mxu0
      %v4703 = vadd.f32 0.0, %v4702
      %v4704 = vpop.f32.mrf.mxu0
      %4705 = vmatprep.mubr.bf16.mxu0 %v4581
      %4706 = vmatmul.mubr.bf16.gmra.mxu0 %v4451
      %v4707 = vpop.f32.mrf.mxu0
      %v4708 = vadd.f32 0.0, %v4707
      %v4709 = vpop.f32.mrf.mxu0
      %v4710 = vpop.f32.mrf.mxu0
      %v4711 = vadd.f32 0.0, %v4710
      %v4712 = vpop.f32.mrf.mxu0
      %4713 = vmatprep.mubr.bf16.mxu0 %v4584
      %4714 = vmatmul.mubr.bf16.gmra.mxu0 %v4453
      %v4715 = vpop.f32.mrf.mxu0
      %v4716 = vadd.f32 0.0, %v4715
      %v4717 = vpop.f32.mrf.mxu0
      %v4718 = vpop.f32.mrf.mxu0
      %v4719 = vadd.f32 0.0, %v4718
      %v4720 = vpop.f32.mrf.mxu0
      %4721 = vmatprep.mubr.bf16.mxu0 %v4587
      %4722 = vmatmul.mubr.bf16.gmra.mxu0 %v4455
      %v4723 = vpop.f32.mrf.mxu0
      %v4724 = vadd.f32 0.0, %v4723
      %v4725 = vpop.f32.mrf.mxu0
      %v4726 = vpop.f32.mrf.mxu0
      %v4727 = vadd.f32 0.0, %v4726
      %v4728 = vpop.f32.mrf.mxu0
      %4729 = vmatprep.mubr.bf16.mxu0 %v4590
      %4730 = vmatmul.mubr.bf16.gmra.mxu0 %v4457
      %v4731 = vpop.f32.mrf.mxu0
      %v4732 = vadd.f32 0.0, %v4731
      %v4733 = vpop.f32.mrf.mxu0
      %v4734 = vpop.f32.mrf.mxu0
      %v4735 = vadd.f32 0.0, %v4734
      %v4736 = vpop.f32.mrf.mxu0
      %4737 = vmatprep.mubr.bf16.mxu0 %v4593
      %4738 = vmatmul.mubr.bf16.gmra.mxu0 %v4459
      %v4739 = vpop.f32.mrf.mxu0
      %v4740 = vadd.f32 0.0, %v4739
      %v4741 = vpop.f32.mrf.mxu0
      %v4742 = vpop.f32.mrf.mxu0
      %v4743 = vadd.f32 0.0, %v4742
      %v4744 = vpop.f32.mrf.mxu0
      %4745 = vmatprep.mubr.bf16.mxu0 %v4596
      %4746 = vmatmul.mubr.bf16.gmra.mxu0 %v4461
      %v4747 = vpop.f32.mrf.mxu0
      %v4748 = vadd.f32 0.0, %v4747
      %v4749 = vpop.f32.mrf.mxu0
      %v4750 = vpop.f32.mrf.mxu0
      %v4751 = vadd.f32 0.0, %v4750
      %v4752 = vpop.f32.mrf.mxu0
      %4753 = vmatprep.mubr.bf16.mxu0 %v4599
      %4754 = vmatmul.mubr.bf16.gmra.mxu0 %v4463
      %v4755 = vpop.f32.mrf.mxu0
      %v4756 = vadd.f32 0.0, %v4755
      %v4757 = vpop.f32.mrf.mxu0
      %v4758 = vpop.f32.mrf.mxu0
      %v4759 = vadd.f32 0.0, %v4758
      %v4760 = vpop.f32.mrf.mxu0
      %4761 = vdwg.mxu0
      %v4762 = vadd.f32 %v4154, %v4636
      %v4763 = vadd.f32 %v4157, %v4639
      %v4764 = vadd.f32 %v4162, %v4644
      %v4765 = vadd.f32 %v4165, %v4647
      %v4766 = vadd.f32 %v4170, %v4652
      %v4767 = vadd.f32 %v4173, %v4655
      %v4768 = vadd.f32 %v4178, %v4660
      %v4769 = vadd.f32 %v4181, %v4663
      %v4770 = vadd.f32 %v4186, %v4668
      %v4771 = vadd.f32 %v4189, %v4671
      %v4772 = vadd.f32 %v4194, %v4676
      %v4773 = vadd.f32 %v4197, %v4679
      %v4774 = vadd.f32 %v4202, %v4684
      %v4775 = vadd.f32 %v4205, %v4687
      %v4776 = vadd.f32 %v4210, %v4692
      %v4777 = vadd.f32 %v4213, %v4695
      %v4778 = vadd.f32 %v4218, %v4700
      %v4779 = vadd.f32 %v4221, %v4703
      %v4780 = vadd.f32 %v4226, %v4708
      %v4781 = vadd.f32 %v4229, %v4711
      %v4782 = vadd.f32 %v4234, %v4716
      %v4783 = vadd.f32 %v4237, %v4719
      %v4784 = vadd.f32 %v4242, %v4724
      %v4785 = vadd.f32 %v4245, %v4727
      %v4786 = vadd.f32 %v4250, %v4732
      %v4787 = vadd.f32 %v4253, %v4735
      %v4788 = vadd.f32 %v4258, %v4740
      %v4789 = vadd.f32 %v4261, %v4743
      %v4790 = vadd.f32 %v4266, %v4748
      %v4791 = vadd.f32 %v4269, %v4751
      %v4792 = vadd.f32 %v4274, %v4756
      %v4793 = vadd.f32 %v4277, %v4759
      %v4794 = vld [vmem:[%s4] sm:$0x1]
      %v4796 = vlaneseq
      %v4797 = vshrl.u32 %v4796, 7
      %v4798 = vsub.s32 0, %v4797
      %v4799 = vrot.slane %v4794, %v4798
      %v4801 = vadd.f32 %v4762, %v4799
      %v4802 = vadd.f32 %v4763, %v4799
      %v4803 = vadd.f32 %v4764, %v4799
      %v4804 = vadd.f32 %v4765, %v4799
      %v4805 = vadd.f32 %v4766, %v4799
      %v4806 = vadd.f32 %v4767, %v4799
      %v4807 = vadd.f32 %v4768, %v4799
      %v4808 = vadd.f32 %v4769, %v4799
      %v4809 = vadd.f32 %v4770, %v4799
      %v4810 = vadd.f32 %v4771, %v4799
      %v4811 = vadd.f32 %v4772, %v4799
      %v4812 = vadd.f32 %v4773, %v4799
      %v4813 = vadd.f32 %v4774, %v4799
      %v4814 = vadd.f32 %v4775, %v4799
      %v4815 = vadd.f32 %v4776, %v4799
      %v4816 = vadd.f32 %v4777, %v4799
      %v4817 = vadd.f32 %v4778, %v4799
      %v4818 = vadd.f32 %v4779, %v4799
      %v4819 = vadd.f32 %v4780, %v4799
      %v4820 = vadd.f32 %v4781, %v4799
      %v4821 = vadd.f32 %v4782, %v4799
      %v4822 = vadd.f32 %v4783, %v4799
      %v4823 = vadd.f32 %v4784, %v4799
      %v4824 = vadd.f32 %v4785, %v4799
      %v4825 = vadd.f32 %v4786, %v4799
      %v4826 = vadd.f32 %v4787, %v4799
      %v4827 = vadd.f32 %v4788, %v4799
      %v4828 = vadd.f32 %v4789, %v4799
      %v4829 = vadd.f32 %v4790, %v4799
      %v4830 = vadd.f32 %v4791, %v4799
      %v4831 = vadd.f32 %v4792, %v4799
      %v4832 = vadd.f32 %v4793, %v4799
      %v4833 = vld [vmem:[%s219] sm:$0xff]
      %v4834 = vld [vmem:[%s219 + $0x8] sm:$0xff]
      %v4835 = vld [vmem:[%s219 + $0x10] sm:$0xff]
      %v4836 = vld [vmem:[%s219 + $0x18] sm:$0xff]
      %v4837 = vld [vmem:[%s219 + $0x20] sm:$0xff]
      %v4838 = vld [vmem:[%s219 + $0x28] sm:$0xff]
      %v4839 = vld [vmem:[%s219 + $0x30] sm:$0xff]
      %v4840 = vld [vmem:[%s219 + $0x38] sm:$0xff]
      %v4841 = vld [vmem:[%s219 + $0x40] sm:$0xff]
      %v4842 = vld [vmem:[%s219 + $0x48] sm:$0xff]
      %v4843 = vld [vmem:[%s219 + $0x50] sm:$0xff]
      %v4844 = vld [vmem:[%s219 + $0x58] sm:$0xff]
      %v4845 = vld [vmem:[%s219 + $0x60] sm:$0xff]
      %v4846 = vld [vmem:[%s219 + $0x68] sm:$0xff]
      %v4847 = vld [vmem:[%s219 + $0x70] sm:$0xff]
      %v4848 = vld [vmem:[%s219 + $0x78] sm:$0xff]
      %v4849 = vld [vmem:[%s219 + $0x80] sm:$0xff]
      %v4850 = vld [vmem:[%s219 + $0x88] sm:$0xff]
      %v4851 = vld [vmem:[%s219 + $0x90] sm:$0xff]
      %v4852 = vld [vmem:[%s219 + $0x98] sm:$0xff]
      %v4853 = vld [vmem:[%s219 + $0xa0] sm:$0xff]
      %v4854 = vld [vmem:[%s219 + $0xa8] sm:$0xff]
      %v4855 = vld [vmem:[%s219 + $0xb0] sm:$0xff]
      %v4856 = vld [vmem:[%s219 + $0xb8] sm:$0xff]
      %v4857 = vld [vmem:[%s219 + $0xc0] sm:$0xff]
      %v4858 = vld [vmem:[%s219 + $0xc8] sm:$0xff]
      %v4859 = vld [vmem:[%s219 + $0xd0] sm:$0xff]
      %v4860 = vld [vmem:[%s219 + $0xd8] sm:$0xff]
      %v4861 = vld [vmem:[%s219 + $0xe0] sm:$0xff]
      %v4862 = vld [vmem:[%s219 + $0xe8] sm:$0xff]
      %v4863 = vld [vmem:[%s219 + $0xf0] sm:$0xff]
      %v4864 = vld [vmem:[%s219 + $0xf8] sm:$0xff]
      %v4865 = vadd.f32 %v4833, %v4801
      %v4866 = vadd.f32 %v4834, %v4802
      %v4867 = vadd.f32 %v4835, %v4803
      %v4868 = vadd.f32 %v4836, %v4804
      %v4869 = vadd.f32 %v4837, %v4805
      %v4870 = vadd.f32 %v4838, %v4806
      %v4871 = vadd.f32 %v4839, %v4807
      %v4872 = vadd.f32 %v4840, %v4808
      %v4873 = vadd.f32 %v4841, %v4809
      %v4874 = vadd.f32 %v4842, %v4810
      %v4875 = vadd.f32 %v4843, %v4811
      %v4876 = vadd.f32 %v4844, %v4812
      %v4877 = vadd.f32 %v4845, %v4813
      %v4878 = vadd.f32 %v4846, %v4814
      %v4879 = vadd.f32 %v4847, %v4815
      %v4880 = vadd.f32 %v4848, %v4816
      %v4881 = vadd.f32 %v4849, %v4817
      %v4882 = vadd.f32 %v4850, %v4818
      %v4883 = vadd.f32 %v4851, %v4819
      %v4884 = vadd.f32 %v4852, %v4820
      %v4885 = vadd.f32 %v4853, %v4821
      %v4886 = vadd.f32 %v4854, %v4822
      %v4887 = vadd.f32 %v4855, %v4823
      %v4888 = vadd.f32 %v4856, %v4824
      %v4889 = vadd.f32 %v4857, %v4825
      %v4890 = vadd.f32 %v4858, %v4826
      %v4891 = vadd.f32 %v4859, %v4827
      %v4892 = vadd.f32 %v4860, %v4828
      %v4893 = vadd.f32 %v4861, %v4829
      %v4894 = vadd.f32 %v4862, %v4830
      %v4895 = vadd.f32 %v4863, %v4831
      %v4896 = vadd.f32 %v4864, %v4832
      %4897 = vst.msk [vmem:[%s224] sm:$0xff] %vm1260, %v4865
      %4898 = vst.msk [vmem:[%s224 + $0x8] sm:$0xff] %vm1260, %v4866
      %4899 = vst.msk [vmem:[%s224 + $0x10] sm:$0xff] %vm1260, %v4867
      %4900 = vst.msk [vmem:[%s224 + $0x18] sm:$0xff] %vm1260, %v4868
      %4901 = vst.msk [vmem:[%s224 + $0x20] sm:$0xff] %vm1260, %v4869
      %4902 = vst.msk [vmem:[%s224 + $0x28] sm:$0xff] %vm1260, %v4870
      %4903 = vst.msk [vmem:[%s224 + $0x30] sm:$0xff] %vm1260, %v4871
      %4904 = vst.msk [vmem:[%s224 + $0x38] sm:$0xff] %vm1260, %v4872
      %4905 = vst.msk [vmem:[%s224 + $0x40] sm:$0xff] %vm1260, %v4873
      %4906 = vst.msk [vmem:[%s224 + $0x48] sm:$0xff] %vm1260, %v4874
      %4907 = vst.msk [vmem:[%s224 + $0x50] sm:$0xff] %vm1260, %v4875
      %4908 = vst.msk [vmem:[%s224 + $0x58] sm:$0xff] %vm1260, %v4876
      %4909 = vst.msk [vmem:[%s224 + $0x60] sm:$0xff] %vm1260, %v4877
      %4910 = vst.msk [vmem:[%s224 + $0x68] sm:$0xff] %vm1260, %v4878
      %4911 = vst.msk [vmem:[%s224 + $0x70] sm:$0xff] %vm1260, %v4879
      %4912 = vst.msk [vmem:[%s224 + $0x78] sm:$0xff] %vm1260, %v4880
      %4913 = vst.msk [vmem:[%s224 + $0x80] sm:$0xff] %vm1260, %v4881
      %4914 = vst.msk [vmem:[%s224 + $0x88] sm:$0xff] %vm1260, %v4882
      %4915 = vst.msk [vmem:[%s224 + $0x90] sm:$0xff] %vm1260, %v4883
      %4916 = vst.msk [vmem:[%s224 + $0x98] sm:$0xff] %vm1260, %v4884
      %4917 = vst.msk [vmem:[%s224 + $0xa0] sm:$0xff] %vm1260, %v4885
      %4918 = vst.msk [vmem:[%s224 + $0xa8] sm:$0xff] %vm1260, %v4886
      %4919 = vst.msk [vmem:[%s224 + $0xb0] sm:$0xff] %vm1260, %v4887
      %4920 = vst.msk [vmem:[%s224 + $0xb8] sm:$0xff] %vm1260, %v4888
      %4921 = vst.msk [vmem:[%s224 + $0xc0] sm:$0xff] %vm1260, %v4889
      %4922 = vst.msk [vmem:[%s224 + $0xc8] sm:$0xff] %vm1260, %v4890
      %4923 = vst.msk [vmem:[%s224 + $0xd0] sm:$0xff] %vm1260, %v4891
      %4924 = vst.msk [vmem:[%s224 + $0xd8] sm:$0xff] %vm1260, %v4892
      %4925 = vst.msk [vmem:[%s224 + $0xe0] sm:$0xff] %vm1260, %v4893
      %4926 = vst.msk [vmem:[%s224 + $0xe8] sm:$0xff] %vm1260, %v4894
      %4927 = vst.msk [vmem:[%s224 + $0xf0] sm:$0xff] %vm1260, %v4895
      %4928 = vst.msk [vmem:[%s224 + $0xf8] sm:$0xff] %vm1260, %v4896
      %p4929 = scmp.lt.s32.totalorder %s16, 1
      %s4930 = scalar_select %p4929, %s16, 1
      %s4931 = smul.addr %s4930, 32
      %s4932 = smul.addr %s4931, 8
      %s4933 = scalar_lea.vmem %s5, %s4932
      // Predicated region
      $region41: #{tpu_custom_call.1} parent=39 // pred_check
        %p4934 = pneg %p144
      $region42: #{tpu_custom_call.1} parent=39 // pred_check_branch
        %4936 = sbr.rel (%p4934) target = $region44
      $region43: #{tpu_custom_call.1} parent=39 // pred_region
        _
      $region44: #{tpu_custom_call.1} parent=39 // pred_fallthru
        _
    $region40: #{tpu_custom_call.1} parent=5 // pred_fallthru
      _
    %p4937 = scmp.le.s32.totalorder 2, %s11
    // Predicated region
    $region45: #{tpu_custom_call.1} parent=5 // pred_check
      %p4938 = pneg %p4937
    $region46: #{tpu_custom_call.1} parent=5 // pred_check_branch
      %4940 = sbr.rel (%p4938) target = $region48
    $region47: #{tpu_custom_call.1} parent=5 // pred_region
      %s4941 = ssub.s32 %s11, 2
      // Predicated region
      $region49: #{tpu_custom_call.1} parent=47 // pred_check
        %p4942 = pneg %p150
      $region50: #{tpu_custom_call.1} parent=47 // pred_check_branch
        %4944 = sbr.rel (%p4942) target = $region52
      $region51: #{tpu_custom_call.1} parent=47 // pred_region
        %p4945 = scmp.lt.s32.totalorder %s17, 1
        %s4946 = scalar_select %p4945, %s17, 1
        %s4947 = smul.addr %s4946, 32
        %s4948 = smul.addr %s4947, 8
        %s4949 = scalar_lea.vmem %s5, %s4948
      $region52: #{tpu_custom_call.1} parent=47 // pred_fallthru
        _
    $region48: #{tpu_custom_call.1} parent=5 // pred_fallthru
      _
  $region6: #{tpu_custom_call.1} parent=0 // loop_footer
    %s15 = sadd.s32 1, %s11
  $region7: #{tpu_custom_call.1} parent=0 // loop_footer_branch
    %10 = sbr.rel target = $region3
  $region8: #{tpu_custom_call.1} parent=0 // loop_exit
    _

</llo_original>
